<compile_context>
chip_gen: v7x
topology: tpu7x:2x2x1
jax: 0.10.0
libtpu: 0.0.40
codegen_flags: <defaults>
</compile_context>

<pallas_src>
import functools

import jax
import jax.numpy as jnp
import numpy as np
from jax.experimental import pallas as pl
from jax.experimental.pallas import tpu as pltpu


# ------------------------- small synthetic Granite config -------------------------
VOCAB = 128
EMB = 64
NHEADS = 4
KVHEADS = 4                      # config.kvheads == 0  ->  kvheads = nheads (MHA)
HEAD_DIM = EMB // NHEADS
NLAYERS = 2
NORM_EPS = 1e-5
HIDDEN_GROW = 8.0 / 3.0
MULTIPLE_OF = 32
ROPE_THETA = 10000.0
EMB_MULT = 1.5                   # embedding_multiplier
RESID_MULT = 0.5                 # residual_multiplier
ATTN_MULT = 0.25                 # attention_multiplier  (sdpa `scale`)
PAD_ID = -1                      # nn.Embedding padding_idx=-1 -> row VOCAB-1 is zeroed

_h = int(HIDDEN_GROW * EMB)
HIDDEN = MULTIPLE_OF * ((_h + MULTIPLE_OF - 1) // MULTIPLE_OF)

B, S = 2, 8


# ------------------------------- fused stack kernel --------------------------------
def _rms(x, w, eps):
    """RMSNorm (LayerNormParameterized use_mean=False, scale only), f32."""
    var = jnp.mean(x * x, axis=-1, keepdims=True)
    return x * jax.lax.rsqrt(var + eps) * w


def _granite_stack_kernel(x0_ref, cos_ref, sin_ref,
                          ln_w_ref, ffln_w_ref, wqkv_ref, wdense_ref,
                          wgu_ref, w2_ref, decw_ref,
                          out_ref, x_sc,
                          *, nheads, head_dim, seq, nbatch,
                          eps, attn_mult, resid_mult):
    li = pl.program_id(0)

    @pl.when(li == 0)
    def _():
        x_sc[...] = x0_ref[...]                          # load residual stream once

    x = x_sc[...]                                        # (B*S, E) f32
    emb = nheads * head_dim
    half = head_dim // 2

    # ----------------------------- attention sub-layer -----------------------------
    h = _rms(x, ln_w_ref[0], eps)
    qkv = jnp.dot(h.astype(jnp.bfloat16), wqkv_ref[0],
                  preferred_element_type=jnp.float32)    # (B*S, 3E) f32
    q = qkv[:, :emb]
    k = qkv[:, emb:2 * emb]
    v = qkv[:, 2 * emb:]

    cos = cos_ref[...]                                   # (B*S, D/2) f32
    sin = sin_ref[...]

    def rope(t):
        # half-split rotate form; q/k columns of w_qkv were permuted offline so each
        # head's layout is [even feats (D/2) | odd feats (D/2)].
        heads = []
        for hh in range(nheads):
            th = t[:, hh * head_dim:(hh + 1) * head_dim]
            t1 = th[:, :half]
            t2 = th[:, half:]
            heads.append(jnp.concatenate(
                [t1 * cos - t2 * sin, t1 * sin + t2 * cos], axis=-1))
        return jnp.concatenate(heads, axis=-1)

    qr = rope(q) * attn_mult        # fold attention_multiplier into q
    kr = rope(k)

    row = jax.lax.broadcasted_iota(jnp.int32, (seq, seq), 0)
    col = jax.lax.broadcasted_iota(jnp.int32, (seq, seq), 1)
    causal_bias = jnp.where(col <= row, 0.0, -jnp.inf).astype(jnp.float32)

    ctx_rows = []
    for b in range(nbatch):                               # small static loops, fully unrolled
        r0 = b * seq
        ctx_heads = []
        for hh in range(nheads):
            c0 = hh * head_dim
            q_bh = qr[r0:r0 + seq, c0:c0 + head_dim].astype(jnp.bfloat16)
            k_bh = kr[r0:r0 + seq, c0:c0 + head_dim].astype(jnp.bfloat16)
            v_bh = v[r0:r0 + seq, c0:c0 + head_dim].astype(jnp.bfloat16)
            s = jax.lax.dot_general(q_bh, k_bh, (((1,), (1,)), ((), ())),
                                    preferred_element_type=jnp.float32)
            s = s + causal_bias
            m = jnp.max(s, axis=-1, keepdims=True)
            p = jnp.exp(s - m)
            denom = jnp.sum(p, axis=-1, keepdims=True)
            o = jnp.dot(p.astype(jnp.bfloat16), v_bh,
                        preferred_element_type=jnp.float32)
            ctx_heads.append(o * pl.reciprocal(denom, approx=True))
        ctx_rows.append(jnp.concatenate(ctx_heads, axis=-1))   # (S, E)
    ctx = jnp.concatenate(ctx_rows, axis=0)                    # (B*S, E), heads lane-packed

    attn_out = jnp.dot(ctx.astype(jnp.bfloat16), wdense_ref[0],
                       preferred_element_type=jnp.float32)
    x = attn_out * resid_mult + x

    # ----------------------------- gated MLP sub-layer -----------------------------
    h2 = _rms(x, ffln_w_ref[0], eps)
    gu = jnp.dot(h2.astype(jnp.bfloat16), wgu_ref[0],
                 preferred_element_type=jnp.float32)           # (B*S, 2H), lane-dense 384
    hidden = wgu_ref.shape[-1] // 2
    g = gu[:, :hidden]
    u = gu[:, hidden:]
    act = (g * jax.nn.sigmoid(g) * u).astype(jnp.bfloat16)     # silu(g) * u
    ff = jnp.dot(act, w2_ref[0], preferred_element_type=jnp.float32)
    x = ff * resid_mult + x

    x_sc[...] = x                                              # carry residual to next layer

    @pl.when(li == pl.num_programs(0) - 1)
    def _():
        out_ref[...] = _rms(x, decw_ref[...], eps)             # final dec_norm, single HBM store


# ---------------------------- parameter / table preparation ------------------------
def _rope_col_perm(nheads, head_dim):
    """Per-head column permutation: interleaved (even,odd,even,odd,...) -> [evens | odds]."""
    cols = []
    for h in range(nheads):
        base = h * head_dim
        cols += [base + 2 * i for i in range(head_dim // 2)]
        cols += [base + 2 * i + 1 for i in range(head_dim // 2)]
    return np.asarray(cols, dtype=np.int32)


def prepare_kernel_params(params):
    """Stack per-layer weights, fuse gate+up, permute q/k cols for half-split RoPE, cast bf16."""
    perm = _rope_col_perm(NHEADS, HEAD_DIM)
    qkv_perm = np.concatenate([perm, EMB + perm, 2 * EMB + np.arange(EMB)])
    ln_w, ff_ln_w, w_qkv, w_dense, w_gu, w_2 = [], [], [], [], [], []
    for lp in params["layers"]:
        ln_w.append(lp["ln_w"][None])                      # (1, 1, E)
        ff_ln_w.append(lp["ff_ln_w"][None])
        w_qkv.append(lp["w_qkv"][:, qkv_perm])             # q/k columns permuted, v untouched
        w_dense.append(lp["w_dense"])
        w_gu.append(jnp.concatenate([lp["w_g"], lp["w_1"]], axis=-1))
        w_2.append(lp["w_2"])
    return dict(
        ln_w=jnp.concatenate(ln_w, axis=0),                       # (L, 1, E) f32
        ff_ln_w=jnp.concatenate(ff_ln_w, axis=0),                 # (L, 1, E) f32
        w_qkv=jnp.stack(w_qkv).astype(jnp.bfloat16),              # (L, E, 3E)
        w_dense=jnp.stack(w_dense).astype(jnp.bfloat16),          # (L, E, E)
        w_gu=jnp.stack(w_gu).astype(jnp.bfloat16),                # (L, E, 2H)
        w_2=jnp.stack(w_2).astype(jnp.bfloat16),                  # (L, H, E)
        dec_norm_w=params["dec_norm_w"],                          # (1, E) f32
    )


def _rope_tables(nbatch, seq, head_dim, theta):
    pos = jnp.tile(jnp.arange(seq, dtype=jnp.float32), nbatch)                  # rows = b*S + s
    inv_freq = 1.0 / (theta ** (jnp.arange(0, head_dim, 2, dtype=jnp.float32) / head_dim))
    ang = pos[:, None] * inv_freq[None, :]                                      # (B*S, D/2)
    return jnp.cos(ang), jnp.sin(ang)


# ----------------------------------- init + forward --------------------------------
def init_params(key):
    def nrm(k, shape, std):
        return std * jax.random.normal(k, shape, dtype=jnp.float32)

    keys = jax.random.split(key, 2 + NLAYERS)
    emb_w = nrm(keys[0], (VOCAB, EMB), EMB ** -0.5)
    # padding_idx = -1 -> row VOCAB-1 is the (zeroed) padding row in PyTorch
    emb_w = emb_w.at[VOCAB + PAD_ID].set(0.0)

    layers = []
    for li in range(NLAYERS):
        lk = jax.random.split(keys[2 + li], 8)
        layers.append(dict(
            ln_w=jnp.ones((1, EMB), jnp.float32),
            ff_ln_w=jnp.ones((1, EMB), jnp.float32),
            # fused qkv projection (unfuse_strategy != 'pre'); no bias (attn_bias=False)
            w_qkv=nrm(lk[0], (EMB, (NHEADS + 2 * KVHEADS) * HEAD_DIM), 0.02),
            w_dense=nrm(lk[1], (NHEADS * HEAD_DIM, EMB), 0.02),
            # gate + up (wg1_fused); no bias (mlp_bias=False)
            w_g=nrm(lk[2], (EMB, HIDDEN), 0.02),
            w_1=nrm(lk[3], (EMB, HIDDEN), 0.02),
            w_2=nrm(lk[4], (HIDDEN, EMB), 0.02),
        ))
    dec_norm_w = jnp.ones((1, EMB), jnp.float32)
    return dict(emb=emb_w, layers=layers, dec_norm_w=dec_norm_w)


def granite_headless_forward(params, tokens):
    """tokens: (B, S) int32 -> (B, S, E) float32 (dec_out; no KV cache)."""
    b, s = tokens.shape
    kp = prepare_kernel_params(params)     # in a real model this layout prep is done once
    cos, sin = _rope_tables(b, s, HEAD_DIM, ROPE_THETA)
    x0 = (jnp.take(params["emb"], tokens, axis=0) * EMB_MULT).reshape(b * s, EMB)

    kernel = functools.partial(
        _granite_stack_kernel,
        nheads=NHEADS, head_dim=HEAD_DIM, seq=s, nbatch=b,
        eps=NORM_EPS, attn_mult=ATTN_MULT, resid_mult=RESID_MULT)

    out = pl.pallas_call(
        kernel,
        grid=(NLAYERS,),
        out_shape=jax.ShapeDtypeStruct((b * s, EMB), jnp.float32),
        in_specs=[
            pl.BlockSpec((b * s, EMB), lambda l: (0, 0)),                 # x0 (embeddings)
            pl.BlockSpec((b * s, HEAD_DIM // 2), lambda l: (0, 0)),       # rope cos
            pl.BlockSpec((b * s, HEAD_DIM // 2), lambda l: (0, 0)),       # rope sin
            pl.BlockSpec((1, 1, EMB), lambda l: (l, 0, 0)),               # ln_w
            pl.BlockSpec((1, 1, EMB), lambda l: (l, 0, 0)),               # ff_ln_w
            pl.BlockSpec((1, EMB, 3 * EMB), lambda l: (l, 0, 0)),         # w_qkv (fused, permuted)
            pl.BlockSpec((1, EMB, EMB), lambda l: (l, 0, 0)),             # w_dense
            pl.BlockSpec((1, EMB, 2 * HIDDEN), lambda l: (l, 0, 0)),      # w_gu (fused gate+up)
            pl.BlockSpec((1, HIDDEN, EMB), lambda l: (l, 0, 0)),          # w_2
            pl.BlockSpec((1, EMB), lambda l: (0, 0)),                     # dec_norm_w
        ],
        out_specs=pl.BlockSpec((b * s, EMB), lambda l: (0, 0)),
        scratch_shapes=[pltpu.VMEM((b * s, EMB), jnp.float32)],           # residual stream carry
        compiler_params=pltpu.CompilerParams(
            dimension_semantics=("arbitrary",)),   # layers are sequential
    )(x0, cos, sin, kp["ln_w"], kp["ff_ln_w"], kp["w_qkv"], kp["w_dense"],
      kp["w_gu"], kp["w_2"], kp["dec_norm_w"])
    return out.reshape(b, s, EMB)


# ------------------------------ pure-JAX reference ---------------------------------
def apply_rope(x, positions, theta):
    """Interleaved (complex-pair) RoPE as in fms RotaryEmbedding. x: (B, S, H, D)."""
    b, s, h, d = x.shape
    inv_freq = 1.0 / (theta ** (jnp.arange(0, d, 2, dtype=jnp.float32) / d))      # (D/2,)
    ang = positions.astype(jnp.float32)[:, None] * inv_freq[None, :]              # (S, D/2)
    cos = jnp.cos(ang)[None, :, None, :]
    sin = jnp.sin(ang)[None, :, None, :]
    xp = x.reshape(b, s, h, d // 2, 2)
    xe, xo = xp[..., 0], xp[..., 1]
    out_e = xe * cos - xo * sin
    out_o = xe * sin + xo * cos
    return jnp.stack([out_e, out_o], axis=-1).reshape(b, s, h, d)


def _ref_rmsnorm(x, w, eps):
    var = jnp.mean(x * x, axis=-1, keepdims=True)
    return x * jax.lax.rsqrt(var + eps) * w[0]


def granite_headless_reference(params, tokens):
    HI = jax.lax.Precision.HIGHEST
    b, s = tokens.shape
    positions = jnp.arange(s, dtype=jnp.int32)
    x = jnp.take(params["emb"], tokens, axis=0) * EMB_MULT
    for lp in params["layers"]:
        residual = x
        h = _ref_rmsnorm(x, lp["ln_w"], NORM_EPS)
        qkv = jnp.einsum("bse,ef->bsf", h, lp["w_qkv"], precision=HI)
        q, k, v = jnp.split(
            qkv, [NHEADS * HEAD_DIM, (NHEADS + KVHEADS) * HEAD_DIM], axis=-1
        )
        q = apply_rope(q.reshape(b, s, NHEADS, HEAD_DIM), positions, ROPE_THETA)
        k = apply_rope(k.reshape(b, s, KVHEADS, HEAD_DIM), positions, ROPE_THETA)
        v = v.reshape(b, s, KVHEADS, HEAD_DIM)
        sc = jnp.einsum("bqhd,bkhd->bhqk", q, k, precision=HI) * ATTN_MULT
        mask = jnp.tril(jnp.ones((s, s), bool))
        sc = jnp.where(mask[None, None], sc, -jnp.inf)
        p = jax.nn.softmax(sc, axis=-1)
        attn = jnp.einsum("bhqk,bkhd->bqhd", p, v, precision=HI)
        attn = attn.reshape(b, s, EMB)
        attn_out = jnp.einsum("bse,ef->bsf", attn, lp["w_dense"], precision=HI)
        x = attn_out * RESID_MULT + residual

        residual = x
        h = _ref_rmsnorm(x, lp["ff_ln_w"], NORM_EPS)
        g = jnp.einsum("bse,eh->bsh", h, lp["w_g"], precision=HI)
        u = jnp.einsum("bse,eh->bsh", h, lp["w_1"], precision=HI)
        ff = jnp.einsum("bsh,he->bse", jax.nn.silu(g) * u, lp["w_2"], precision=HI)
        x = ff * RESID_MULT + residual
    return _ref_rmsnorm(x, params["dec_norm_w"], NORM_EPS)


# ------------------------------------- main -----------------------------------------
if __name__ == "__main__":
    key = jax.random.PRNGKey(0)
    pkey, tkey = jax.random.split(key)
    params = init_params(pkey)
    tokens = jax.random.randint(tkey, (B, S), 0, VOCAB, dtype=jnp.int32)

    out = granite_headless_forward(params, tokens)
    out = jax.block_until_ready(out)

    assert out.shape == (B, S, EMB), out.shape
    assert bool(jnp.all(jnp.isfinite(out)))

    ref = jax.block_until_ready(granite_headless_reference(params, tokens))
    np.testing.assert_allclose(np.asarray(out), np.asarray(ref), rtol=2e-2, atol=2e-2)

    print("KERNEL_OK")
</pallas_src>

<mosaic_0001>
module attributes {stable_mosaic.version = 11 : i64} {
  func.func @_granite_stack_kernel(%arg0: i32, %arg1: memref<16x64xf32, #tpu.memory_space<vmem>>, %arg2: memref<16x8xf32, #tpu.memory_space<vmem>>, %arg3: memref<16x8xf32, #tpu.memory_space<vmem>>, %arg4: memref<1x1x64xf32, #tpu.memory_space<vmem>>, %arg5: memref<1x1x64xf32, #tpu.memory_space<vmem>>, %arg6: memref<1x64x192xbf16, #tpu.memory_space<vmem>>, %arg7: memref<1x64x64xbf16, #tpu.memory_space<vmem>>, %arg8: memref<1x64x384xbf16, #tpu.memory_space<vmem>>, %arg9: memref<1x192x64xbf16, #tpu.memory_space<vmem>>, %arg10: memref<1x64xf32, #tpu.memory_space<vmem>>, %arg11: memref<16x64xf32, #tpu.memory_space<vmem>>, %arg12: memref<16x64xf32, #tpu.memory_space<vmem>>) attributes {dimension_semantics = [#tpu.dimension_semantics<arbitrary>], iteration_bounds = array<i64: 2>, scalar_prefetch = 0 : i64, scratch_operands = 1 : i64, tpu.core_type = #tpu.core_type<tc>, window_params = [{pipeline_mode = #tpu.pipeline_mode<synchronous>, transform_indices = @transform_0, window_bounds = array<i64: 16, 64>}, {pipeline_mode = #tpu.pipeline_mode<synchronous>, transform_indices = @transform_1, window_bounds = array<i64: 16, 8>}, {pipeline_mode = #tpu.pipeline_mode<synchronous>, transform_indices = @transform_2, window_bounds = array<i64: 16, 8>}, {transform_indices = @transform_3, window_bounds = array<i64: 1, 1, 64>}, {transform_indices = @transform_4, window_bounds = array<i64: 1, 1, 64>}, {transform_indices = @transform_5, window_bounds = array<i64: 1, 64, 192>}, {transform_indices = @transform_6, window_bounds = array<i64: 1, 64, 64>}, {transform_indices = @transform_7, window_bounds = array<i64: 1, 64, 384>}, {transform_indices = @transform_8, window_bounds = array<i64: 1, 192, 64>}, {pipeline_mode = #tpu.pipeline_mode<synchronous>, transform_indices = @transform_9, window_bounds = array<i64: 1, 64>}, {pipeline_mode = #tpu.pipeline_mode<synchronous>, transform_indices = @transform_10, window_bounds = array<i64: 16, 64>}]} {
    %c0_i32 = arith.constant 0 : i32
    %0 = arith.cmpi eq, %arg0, %c0_i32 : i32
    %1 = arith.extui %0 : i1 to i32
    %c0_i32_0 = arith.constant 0 : i32
    %2 = arith.cmpi ne, %1, %c0_i32_0 : i32
    scf.if %2 {
      %c0_74 = arith.constant 0 : index
      %c0_75 = arith.constant 0 : index
      %325 = vector.load %arg1[%c0_74, %c0_75] : memref<16x64xf32, #tpu.memory_space<vmem>>, vector<16x64xf32>
      %c0_76 = arith.constant 0 : index
      %c0_77 = arith.constant 0 : index
      %326 = vector.load %arg12[%c0_76, %c0_77] : memref<16x64xf32, #tpu.memory_space<vmem>>, vector<16x64xf32>
      tpu.vector_store %arg12[%c0_76, %c0_77], %325 {strides = array<i32>} : memref<16x64xf32, #tpu.memory_space<vmem>>, vector<16x64xf32>,
    } else {
    }
    %c0 = arith.constant 0 : index
    %c0_1 = arith.constant 0 : index
    %3 = vector.load %arg12[%c0, %c0_1] : memref<16x64xf32, #tpu.memory_space<vmem>>, vector<16x64xf32>
    %c0_2 = arith.constant 0 : index
    %c0_3 = arith.constant 0 : index
    %c0_4 = arith.constant 0 : index
    %4 = vector.load %arg4[%c0_2, %c0_3, %c0_4] : memref<1x1x64xf32, #tpu.memory_space<vmem>>, vector<1x1x64xf32>
    %5 = vector.shape_cast %4 : vector<1x1x64xf32> to vector<1x64xf32>
    %6 = arith.mulf %3, %3 : vector<16x64xf32>
    %cst = arith.constant dense<0.000000e+00> : vector<16xf32>
    %7 = vector.multi_reduction <add>, %6, %cst [1] : vector<16x64xf32> to vector<16xf32>
    %8 = vector.shape_cast %7 : vector<16xf32> to vector<16x1xf32>
    %cst_5 = arith.constant 6.400000e+01 : f32
    %9 = vector.broadcast %cst_5 : f32 to vector<16x1xf32>
    %10 = arith.divf %8, %9 : vector<16x1xf32>
    %cst_6 = arith.constant 9.99999974E-6 : f32
    %11 = vector.broadcast %cst_6 : f32 to vector<16x1xf32>
    %12 = arith.addf %10, %11 : vector<16x1xf32>
    %13 = math.rsqrt %12 : vector<16x1xf32>
    %14 = vector.broadcast %13 : vector<16x1xf32> to vector<16x64xf32>
    %15 = arith.mulf %3, %14 : vector<16x64xf32>
    %16 = vector.broadcast %5 : vector<1x64xf32> to vector<16x64xf32>
    %17 = arith.mulf %15, %16 : vector<16x64xf32>
    %18 = arith.truncf %17 : vector<16x64xf32> to vector<16x64xbf16>
    %c0_7 = arith.constant 0 : index
    %c0_8 = arith.constant 0 : index
    %c0_9 = arith.constant 0 : index
    %19 = vector.load %arg6[%c0_7, %c0_8, %c0_9] : memref<1x64x192xbf16, #tpu.memory_space<vmem>>, vector<1x64x192xbf16>
    %20 = vector.shape_cast %19 : vector<1x64x192xbf16> to vector<64x192xbf16>
    %cst_10 = arith.constant dense<0.000000e+00> : vector<16x192xf32>
    %21 = tpu.matmul %18, %20, %cst_10 {dimension_numbers = #tpu.dot_dimension_numbers<[1], [0], [0], [1], [0, 0, 1, 1], [], []>} : vector<16x64xbf16>, vector<64x192xbf16>, vector<16x192xf32> -> vector<16x192xf32>
    %22 = vector.extract_strided_slice %21 {offsets = [0, 0], sizes = [16, 64], strides = [1, 1]} : vector<16x192xf32> to vector<16x64xf32>
    %23 = vector.extract_strided_slice %21 {offsets = [0, 64], sizes = [16, 64], strides = [1, 1]} : vector<16x192xf32> to vector<16x64xf32>
    %24 = vector.extract_strided_slice %21 {offsets = [0, 128], sizes = [16, 64], strides = [1, 1]} : vector<16x192xf32> to vector<16x64xf32>
    %c0_11 = arith.constant 0 : index
    %c0_12 = arith.constant 0 : index
    %25 = vector.load %arg2[%c0_11, %c0_12] : memref<16x8xf32, #tpu.memory_space<vmem>>, vector<16x8xf32>
    %c0_13 = arith.constant 0 : index
    %c0_14 = arith.constant 0 : index
    %26 = vector.load %arg3[%c0_13, %c0_14] : memref<16x8xf32, #tpu.memory_space<vmem>>, vector<16x8xf32>
    %27 = vector.extract_strided_slice %22 {offsets = [0, 0], sizes = [16, 16], strides = [1, 1]} : vector<16x64xf32> to vector<16x16xf32>
    %28 = vector.extract_strided_slice %27 {offsets = [0, 0], sizes = [16, 8], strides = [1, 1]} : vector<16x16xf32> to vector<16x8xf32>
    %29 = vector.extract_strided_slice %27 {offsets = [0, 8], sizes = [16, 8], strides = [1, 1]} : vector<16x16xf32> to vector<16x8xf32>
    %30 = arith.mulf %28, %25 : vector<16x8xf32>
    %31 = arith.mulf %29, %26 : vector<16x8xf32>
    %32 = arith.subf %30, %31 : vector<16x8xf32>
    %33 = arith.mulf %28, %26 : vector<16x8xf32>
    %34 = arith.mulf %29, %25 : vector<16x8xf32>
    %35 = arith.addf %33, %34 : vector<16x8xf32>
    %36 = tpu.concatenate %32, %35 in 1 : vector<16x8xf32>, vector<16x8xf32> -> vector<16x16xf32>
    %37 = vector.extract_strided_slice %22 {offsets = [0, 16], sizes = [16, 16], strides = [1, 1]} : vector<16x64xf32> to vector<16x16xf32>
    %38 = vector.extract_strided_slice %37 {offsets = [0, 0], sizes = [16, 8], strides = [1, 1]} : vector<16x16xf32> to vector<16x8xf32>
    %39 = vector.extract_strided_slice %37 {offsets = [0, 8], sizes = [16, 8], strides = [1, 1]} : vector<16x16xf32> to vector<16x8xf32>
    %40 = arith.mulf %38, %25 : vector<16x8xf32>
    %41 = arith.mulf %39, %26 : vector<16x8xf32>
    %42 = arith.subf %40, %41 : vector<16x8xf32>
    %43 = arith.mulf %38, %26 : vector<16x8xf32>
    %44 = arith.mulf %39, %25 : vector<16x8xf32>
    %45 = arith.addf %43, %44 : vector<16x8xf32>
    %46 = tpu.concatenate %42, %45 in 1 : vector<16x8xf32>, vector<16x8xf32> -> vector<16x16xf32>
    %47 = vector.extract_strided_slice %22 {offsets = [0, 32], sizes = [16, 16], strides = [1, 1]} : vector<16x64xf32> to vector<16x16xf32>
    %48 = vector.extract_strided_slice %47 {offsets = [0, 0], sizes = [16, 8], strides = [1, 1]} : vector<16x16xf32> to vector<16x8xf32>
    %49 = vector.extract_strided_slice %47 {offsets = [0, 8], sizes = [16, 8], strides = [1, 1]} : vector<16x16xf32> to vector<16x8xf32>
    %50 = arith.mulf %48, %25 : vector<16x8xf32>
    %51 = arith.mulf %49, %26 : vector<16x8xf32>
    %52 = arith.subf %50, %51 : vector<16x8xf32>
    %53 = arith.mulf %48, %26 : vector<16x8xf32>
    %54 = arith.mulf %49, %25 : vector<16x8xf32>
    %55 = arith.addf %53, %54 : vector<16x8xf32>
    %56 = tpu.concatenate %52, %55 in 1 : vector<16x8xf32>, vector<16x8xf32> -> vector<16x16xf32>
    %57 = vector.extract_strided_slice %22 {offsets = [0, 48], sizes = [16, 16], strides = [1, 1]} : vector<16x64xf32> to vector<16x16xf32>
    %58 = vector.extract_strided_slice %57 {offsets = [0, 0], sizes = [16, 8], strides = [1, 1]} : vector<16x16xf32> to vector<16x8xf32>
    %59 = vector.extract_strided_slice %57 {offsets = [0, 8], sizes = [16, 8], strides = [1, 1]} : vector<16x16xf32> to vector<16x8xf32>
    %60 = arith.mulf %58, %25 : vector<16x8xf32>
    %61 = arith.mulf %59, %26 : vector<16x8xf32>
    %62 = arith.subf %60, %61 : vector<16x8xf32>
    %63 = arith.mulf %58, %26 : vector<16x8xf32>
    %64 = arith.mulf %59, %25 : vector<16x8xf32>
    %65 = arith.addf %63, %64 : vector<16x8xf32>
    %66 = tpu.concatenate %62, %65 in 1 : vector<16x8xf32>, vector<16x8xf32> -> vector<16x16xf32>
    %67 = tpu.concatenate %36, %46, %56, %66 in 1 : vector<16x16xf32>, vector<16x16xf32>, vector<16x16xf32>, vector<16x16xf32> -> vector<16x64xf32>
    %cst_15 = arith.constant 2.500000e-01 : f32
    %68 = vector.broadcast %cst_15 : f32 to vector<16x64xf32>
    %69 = arith.mulf %67, %68 : vector<16x64xf32>
    %70 = vector.extract_strided_slice %23 {offsets = [0, 0], sizes = [16, 16], strides = [1, 1]} : vector<16x64xf32> to vector<16x16xf32>
    %71 = vector.extract_strided_slice %70 {offsets = [0, 0], sizes = [16, 8], strides = [1, 1]} : vector<16x16xf32> to vector<16x8xf32>
    %72 = vector.extract_strided_slice %70 {offsets = [0, 8], sizes = [16, 8], strides = [1, 1]} : vector<16x16xf32> to vector<16x8xf32>
    %73 = arith.mulf %71, %25 : vector<16x8xf32>
    %74 = arith.mulf %72, %26 : vector<16x8xf32>
    %75 = arith.subf %73, %74 : vector<16x8xf32>
    %76 = arith.mulf %71, %26 : vector<16x8xf32>
    %77 = arith.mulf %72, %25 : vector<16x8xf32>
    %78 = arith.addf %76, %77 : vector<16x8xf32>
    %79 = tpu.concatenate %75, %78 in 1 : vector<16x8xf32>, vector<16x8xf32> -> vector<16x16xf32>
    %80 = vector.extract_strided_slice %23 {offsets = [0, 16], sizes = [16, 16], strides = [1, 1]} : vector<16x64xf32> to vector<16x16xf32>
    %81 = vector.extract_strided_slice %80 {offsets = [0, 0], sizes = [16, 8], strides = [1, 1]} : vector<16x16xf32> to vector<16x8xf32>
    %82 = vector.extract_strided_slice %80 {offsets = [0, 8], sizes = [16, 8], strides = [1, 1]} : vector<16x16xf32> to vector<16x8xf32>
    %83 = arith.mulf %81, %25 : vector<16x8xf32>
    %84 = arith.mulf %82, %26 : vector<16x8xf32>
    %85 = arith.subf %83, %84 : vector<16x8xf32>
    %86 = arith.mulf %81, %26 : vector<16x8xf32>
    %87 = arith.mulf %82, %25 : vector<16x8xf32>
    %88 = arith.addf %86, %87 : vector<16x8xf32>
    %89 = tpu.concatenate %85, %88 in 1 : vector<16x8xf32>, vector<16x8xf32> -> vector<16x16xf32>
    %90 = vector.extract_strided_slice %23 {offsets = [0, 32], sizes = [16, 16], strides = [1, 1]} : vector<16x64xf32> to vector<16x16xf32>
    %91 = vector.extract_strided_slice %90 {offsets = [0, 0], sizes = [16, 8], strides = [1, 1]} : vector<16x16xf32> to vector<16x8xf32>
    %92 = vector.extract_strided_slice %90 {offsets = [0, 8], sizes = [16, 8], strides = [1, 1]} : vector<16x16xf32> to vector<16x8xf32>
    %93 = arith.mulf %91, %25 : vector<16x8xf32>
    %94 = arith.mulf %92, %26 : vector<16x8xf32>
    %95 = arith.subf %93, %94 : vector<16x8xf32>
    %96 = arith.mulf %91, %26 : vector<16x8xf32>
    %97 = arith.mulf %92, %25 : vector<16x8xf32>
    %98 = arith.addf %96, %97 : vector<16x8xf32>
    %99 = tpu.concatenate %95, %98 in 1 : vector<16x8xf32>, vector<16x8xf32> -> vector<16x16xf32>
    %100 = vector.extract_strided_slice %23 {offsets = [0, 48], sizes = [16, 16], strides = [1, 1]} : vector<16x64xf32> to vector<16x16xf32>
    %101 = vector.extract_strided_slice %100 {offsets = [0, 0], sizes = [16, 8], strides = [1, 1]} : vector<16x16xf32> to vector<16x8xf32>
    %102 = vector.extract_strided_slice %100 {offsets = [0, 8], sizes = [16, 8], strides = [1, 1]} : vector<16x16xf32> to vector<16x8xf32>
    %103 = arith.mulf %101, %25 : vector<16x8xf32>
    %104 = arith.mulf %102, %26 : vector<16x8xf32>
    %105 = arith.subf %103, %104 : vector<16x8xf32>
    %106 = arith.mulf %101, %26 : vector<16x8xf32>
    %107 = arith.mulf %102, %25 : vector<16x8xf32>
    %108 = arith.addf %106, %107 : vector<16x8xf32>
    %109 = tpu.concatenate %105, %108 in 1 : vector<16x8xf32>, vector<16x8xf32> -> vector<16x16xf32>
    %110 = tpu.concatenate %79, %89, %99, %109 in 1 : vector<16x16xf32>, vector<16x16xf32>, vector<16x16xf32>, vector<16x16xf32> -> vector<16x64xf32>
    %111 = tpu.iota {dimensions = array<i32: 0>} : vector<8x8xi32>
    %112 = tpu.iota {dimensions = array<i32: 1>} : vector<8x8xi32>
    %113 = arith.cmpi sle, %112, %111 : vector<8x8xi32>
    %cst_16 = arith.constant 0.000000e+00 : f32
    %cst_17 = arith.constant 0xFF800000 : f32
    %114 = vector.broadcast %cst_16 : f32 to vector<8x8xf32>
    %115 = vector.broadcast %cst_17 : f32 to vector<8x8xf32>
    %116 = arith.select %113, %114, %115 : vector<8x8xi1>, vector<8x8xf32>
    %117 = vector.extract_strided_slice %69 {offsets = [0, 0], sizes = [8, 16], strides = [1, 1]} : vector<16x64xf32> to vector<8x16xf32>
    %118 = arith.truncf %117 : vector<8x16xf32> to vector<8x16xbf16>
    %119 = vector.extract_strided_slice %110 {offsets = [0, 0], sizes = [8, 16], strides = [1, 1]} : vector<16x64xf32> to vector<8x16xf32>
    %120 = arith.truncf %119 : vector<8x16xf32> to vector<8x16xbf16>
    %121 = vector.extract_strided_slice %24 {offsets = [0, 0], sizes = [8, 16], strides = [1, 1]} : vector<16x64xf32> to vector<8x16xf32>
    %122 = arith.truncf %121 : vector<8x16xf32> to vector<8x16xbf16>
    %cst_18 = arith.constant dense<0.000000e+00> : vector<8x8xf32>
    %123 = tpu.matmul %118, %120, %cst_18 {dimension_numbers = #tpu.dot_dimension_numbers<[1], [1], [0], [0], [0, 0, 1, 0], [], []>} : vector<8x16xbf16>, vector<8x16xbf16>, vector<8x8xf32> -> vector<8x8xf32>
    %124 = arith.addf %123, %116 : vector<8x8xf32>
    %cst_19 = arith.constant dense<0xFF800000> : vector<8xf32>
    %125 = vector.multi_reduction <maximumf>, %124, %cst_19 [1] : vector<8x8xf32> to vector<8xf32>
    %126 = vector.shape_cast %125 : vector<8xf32> to vector<8x1xf32>
    %127 = vector.broadcast %126 : vector<8x1xf32> to vector<8x8xf32>
    %128 = arith.subf %124, %127 : vector<8x8xf32>
    %129 = math.exp %128 : vector<8x8xf32>
    %cst_20 = arith.constant dense<0.000000e+00> : vector<8xf32>
    %130 = vector.multi_reduction <add>, %129, %cst_20 [1] : vector<8x8xf32> to vector<8xf32>
    %131 = vector.shape_cast %130 : vector<8xf32> to vector<8x1xf32>
    %132 = arith.truncf %129 : vector<8x8xf32> to vector<8x8xbf16>
    %cst_21 = arith.constant dense<0.000000e+00> : vector<8x16xf32>
    %133 = tpu.matmul %132, %122, %cst_21 {dimension_numbers = #tpu.dot_dimension_numbers<[1], [0], [0], [1], [0, 0, 1, 1], [], []>} : vector<8x8xbf16>, vector<8x16xbf16>, vector<8x16xf32> -> vector<8x16xf32>
    %134 = tpu.reciprocal %131 {approx = true} : vector<8x1xf32> -> vector<8x1xf32>
    %135 = vector.broadcast %134 : vector<8x1xf32> to vector<8x16xf32>
    %136 = arith.mulf %133, %135 : vector<8x16xf32>
    %137 = vector.extract_strided_slice %69 {offsets = [0, 16], sizes = [8, 16], strides = [1, 1]} : vector<16x64xf32> to vector<8x16xf32>
    %138 = arith.truncf %137 : vector<8x16xf32> to vector<8x16xbf16>
    %139 = vector.extract_strided_slice %110 {offsets = [0, 16], sizes = [8, 16], strides = [1, 1]} : vector<16x64xf32> to vector<8x16xf32>
    %140 = arith.truncf %139 : vector<8x16xf32> to vector<8x16xbf16>
    %141 = vector.extract_strided_slice %24 {offsets = [0, 16], sizes = [8, 16], strides = [1, 1]} : vector<16x64xf32> to vector<8x16xf32>
    %142 = arith.truncf %141 : vector<8x16xf32> to vector<8x16xbf16>
    %cst_22 = arith.constant dense<0.000000e+00> : vector<8x8xf32>
    %143 = tpu.matmul %138, %140, %cst_22 {dimension_numbers = #tpu.dot_dimension_numbers<[1], [1], [0], [0], [0, 0, 1, 0], [], []>} : vector<8x16xbf16>, vector<8x16xbf16>, vector<8x8xf32> -> vector<8x8xf32>
    %144 = arith.addf %143, %116 : vector<8x8xf32>
    %cst_23 = arith.constant dense<0xFF800000> : vector<8xf32>
    %145 = vector.multi_reduction <maximumf>, %144, %cst_23 [1] : vector<8x8xf32> to vector<8xf32>
    %146 = vector.shape_cast %145 : vector<8xf32> to vector<8x1xf32>
    %147 = vector.broadcast %146 : vector<8x1xf32> to vector<8x8xf32>
    %148 = arith.subf %144, %147 : vector<8x8xf32>
    %149 = math.exp %148 : vector<8x8xf32>
    %cst_24 = arith.constant dense<0.000000e+00> : vector<8xf32>
    %150 = vector.multi_reduction <add>, %149, %cst_24 [1] : vector<8x8xf32> to vector<8xf32>
    %151 = vector.shape_cast %150 : vector<8xf32> to vector<8x1xf32>
    %152 = arith.truncf %149 : vector<8x8xf32> to vector<8x8xbf16>
    %cst_25 = arith.constant dense<0.000000e+00> : vector<8x16xf32>
    %153 = tpu.matmul %152, %142, %cst_25 {dimension_numbers = #tpu.dot_dimension_numbers<[1], [0], [0], [1], [0, 0, 1, 1], [], []>} : vector<8x8xbf16>, vector<8x16xbf16>, vector<8x16xf32> -> vector<8x16xf32>
    %154 = tpu.reciprocal %151 {approx = true} : vector<8x1xf32> -> vector<8x1xf32>
    %155 = vector.broadcast %154 : vector<8x1xf32> to vector<8x16xf32>
    %156 = arith.mulf %153, %155 : vector<8x16xf32>
    %157 = vector.extract_strided_slice %69 {offsets = [0, 32], sizes = [8, 16], strides = [1, 1]} : vector<16x64xf32> to vector<8x16xf32>
    %158 = arith.truncf %157 : vector<8x16xf32> to vector<8x16xbf16>
    %159 = vector.extract_strided_slice %110 {offsets = [0, 32], sizes = [8, 16], strides = [1, 1]} : vector<16x64xf32> to vector<8x16xf32>
    %160 = arith.truncf %159 : vector<8x16xf32> to vector<8x16xbf16>
    %161 = vector.extract_strided_slice %24 {offsets = [0, 32], sizes = [8, 16], strides = [1, 1]} : vector<16x64xf32> to vector<8x16xf32>
    %162 = arith.truncf %161 : vector<8x16xf32> to vector<8x16xbf16>
    %cst_26 = arith.constant dense<0.000000e+00> : vector<8x8xf32>
    %163 = tpu.matmul %158, %160, %cst_26 {dimension_numbers = #tpu.dot_dimension_numbers<[1], [1], [0], [0], [0, 0, 1, 0], [], []>} : vector<8x16xbf16>, vector<8x16xbf16>, vector<8x8xf32> -> vector<8x8xf32>
    %164 = arith.addf %163, %116 : vector<8x8xf32>
    %cst_27 = arith.constant dense<0xFF800000> : vector<8xf32>
    %165 = vector.multi_reduction <maximumf>, %164, %cst_27 [1] : vector<8x8xf32> to vector<8xf32>
    %166 = vector.shape_cast %165 : vector<8xf32> to vector<8x1xf32>
    %167 = vector.broadcast %166 : vector<8x1xf32> to vector<8x8xf32>
    %168 = arith.subf %164, %167 : vector<8x8xf32>
    %169 = math.exp %168 : vector<8x8xf32>
    %cst_28 = arith.constant dense<0.000000e+00> : vector<8xf32>
    %170 = vector.multi_reduction <add>, %169, %cst_28 [1] : vector<8x8xf32> to vector<8xf32>
    %171 = vector.shape_cast %170 : vector<8xf32> to vector<8x1xf32>
    %172 = arith.truncf %169 : vector<8x8xf32> to vector<8x8xbf16>
    %cst_29 = arith.constant dense<0.000000e+00> : vector<8x16xf32>
    %173 = tpu.matmul %172, %162, %cst_29 {dimension_numbers = #tpu.dot_dimension_numbers<[1], [0], [0], [1], [0, 0, 1, 1], [], []>} : vector<8x8xbf16>, vector<8x16xbf16>, vector<8x16xf32> -> vector<8x16xf32>
    %174 = tpu.reciprocal %171 {approx = true} : vector<8x1xf32> -> vector<8x1xf32>
    %175 = vector.broadcast %174 : vector<8x1xf32> to vector<8x16xf32>
    %176 = arith.mulf %173, %175 : vector<8x16xf32>
    %177 = vector.extract_strided_slice %69 {offsets = [0, 48], sizes = [8, 16], strides = [1, 1]} : vector<16x64xf32> to vector<8x16xf32>
    %178 = arith.truncf %177 : vector<8x16xf32> to vector<8x16xbf16>
    %179 = vector.extract_strided_slice %110 {offsets = [0, 48], sizes = [8, 16], strides = [1, 1]} : vector<16x64xf32> to vector<8x16xf32>
    %180 = arith.truncf %179 : vector<8x16xf32> to vector<8x16xbf16>
    %181 = vector.extract_strided_slice %24 {offsets = [0, 48], sizes = [8, 16], strides = [1, 1]} : vector<16x64xf32> to vector<8x16xf32>
    %182 = arith.truncf %181 : vector<8x16xf32> to vector<8x16xbf16>
    %cst_30 = arith.constant dense<0.000000e+00> : vector<8x8xf32>
    %183 = tpu.matmul %178, %180, %cst_30 {dimension_numbers = #tpu.dot_dimension_numbers<[1], [1], [0], [0], [0, 0, 1, 0], [], []>} : vector<8x16xbf16>, vector<8x16xbf16>, vector<8x8xf32> -> vector<8x8xf32>
    %184 = arith.addf %183, %116 : vector<8x8xf32>
    %cst_31 = arith.constant dense<0xFF800000> : vector<8xf32>
    %185 = vector.multi_reduction <maximumf>, %184, %cst_31 [1] : vector<8x8xf32> to vector<8xf32>
    %186 = vector.shape_cast %185 : vector<8xf32> to vector<8x1xf32>
    %187 = vector.broadcast %186 : vector<8x1xf32> to vector<8x8xf32>
    %188 = arith.subf %184, %187 : vector<8x8xf32>
    %189 = math.exp %188 : vector<8x8xf32>
    %cst_32 = arith.constant dense<0.000000e+00> : vector<8xf32>
    %190 = vector.multi_reduction <add>, %189, %cst_32 [1] : vector<8x8xf32> to vector<8xf32>
    %191 = vector.shape_cast %190 : vector<8xf32> to vector<8x1xf32>
    %192 = arith.truncf %189 : vector<8x8xf32> to vector<8x8xbf16>
    %cst_33 = arith.constant dense<0.000000e+00> : vector<8x16xf32>
    %193 = tpu.matmul %192, %182, %cst_33 {dimension_numbers = #tpu.dot_dimension_numbers<[1], [0], [0], [1], [0, 0, 1, 1], [], []>} : vector<8x8xbf16>, vector<8x16xbf16>, vector<8x16xf32> -> vector<8x16xf32>
    %194 = tpu.reciprocal %191 {approx = true} : vector<8x1xf32> -> vector<8x1xf32>
    %195 = vector.broadcast %194 : vector<8x1xf32> to vector<8x16xf32>
    %196 = arith.mulf %193, %195 : vector<8x16xf32>
    %197 = tpu.concatenate %136, %156, %176, %196 in 1 : vector<8x16xf32>, vector<8x16xf32>, vector<8x16xf32>, vector<8x16xf32> -> vector<8x64xf32>
    %198 = vector.extract_strided_slice %69 {offsets = [8, 0], sizes = [8, 16], strides = [1, 1]} : vector<16x64xf32> to vector<8x16xf32>
    %199 = arith.truncf %198 : vector<8x16xf32> to vector<8x16xbf16>
    %200 = vector.extract_strided_slice %110 {offsets = [8, 0], sizes = [8, 16], strides = [1, 1]} : vector<16x64xf32> to vector<8x16xf32>
    %201 = arith.truncf %200 : vector<8x16xf32> to vector<8x16xbf16>
    %202 = vector.extract_strided_slice %24 {offsets = [8, 0], sizes = [8, 16], strides = [1, 1]} : vector<16x64xf32> to vector<8x16xf32>
    %203 = arith.truncf %202 : vector<8x16xf32> to vector<8x16xbf16>
    %cst_34 = arith.constant dense<0.000000e+00> : vector<8x8xf32>
    %204 = tpu.matmul %199, %201, %cst_34 {dimension_numbers = #tpu.dot_dimension_numbers<[1], [1], [0], [0], [0, 0, 1, 0], [], []>} : vector<8x16xbf16>, vector<8x16xbf16>, vector<8x8xf32> -> vector<8x8xf32>
    %205 = arith.addf %204, %116 : vector<8x8xf32>
    %cst_35 = arith.constant dense<0xFF800000> : vector<8xf32>
    %206 = vector.multi_reduction <maximumf>, %205, %cst_35 [1] : vector<8x8xf32> to vector<8xf32>
    %207 = vector.shape_cast %206 : vector<8xf32> to vector<8x1xf32>
    %208 = vector.broadcast %207 : vector<8x1xf32> to vector<8x8xf32>
    %209 = arith.subf %205, %208 : vector<8x8xf32>
    %210 = math.exp %209 : vector<8x8xf32>
    %cst_36 = arith.constant dense<0.000000e+00> : vector<8xf32>
    %211 = vector.multi_reduction <add>, %210, %cst_36 [1] : vector<8x8xf32> to vector<8xf32>
    %212 = vector.shape_cast %211 : vector<8xf32> to vector<8x1xf32>
    %213 = arith.truncf %210 : vector<8x8xf32> to vector<8x8xbf16>
    %cst_37 = arith.constant dense<0.000000e+00> : vector<8x16xf32>
    %214 = tpu.matmul %213, %203, %cst_37 {dimension_numbers = #tpu.dot_dimension_numbers<[1], [0], [0], [1], [0, 0, 1, 1], [], []>} : vector<8x8xbf16>, vector<8x16xbf16>, vector<8x16xf32> -> vector<8x16xf32>
    %215 = tpu.reciprocal %212 {approx = true} : vector<8x1xf32> -> vector<8x1xf32>
    %216 = vector.broadcast %215 : vector<8x1xf32> to vector<8x16xf32>
    %217 = arith.mulf %214, %216 : vector<8x16xf32>
    %218 = vector.extract_strided_slice %69 {offsets = [8, 16], sizes = [8, 16], strides = [1, 1]} : vector<16x64xf32> to vector<8x16xf32>
    %219 = arith.truncf %218 : vector<8x16xf32> to vector<8x16xbf16>
    %220 = vector.extract_strided_slice %110 {offsets = [8, 16], sizes = [8, 16], strides = [1, 1]} : vector<16x64xf32> to vector<8x16xf32>
    %221 = arith.truncf %220 : vector<8x16xf32> to vector<8x16xbf16>
    %222 = vector.extract_strided_slice %24 {offsets = [8, 16], sizes = [8, 16], strides = [1, 1]} : vector<16x64xf32> to vector<8x16xf32>
    %223 = arith.truncf %222 : vector<8x16xf32> to vector<8x16xbf16>
    %cst_38 = arith.constant dense<0.000000e+00> : vector<8x8xf32>
    %224 = tpu.matmul %219, %221, %cst_38 {dimension_numbers = #tpu.dot_dimension_numbers<[1], [1], [0], [0], [0, 0, 1, 0], [], []>} : vector<8x16xbf16>, vector<8x16xbf16>, vector<8x8xf32> -> vector<8x8xf32>
    %225 = arith.addf %224, %116 : vector<8x8xf32>
    %cst_39 = arith.constant dense<0xFF800000> : vector<8xf32>
    %226 = vector.multi_reduction <maximumf>, %225, %cst_39 [1] : vector<8x8xf32> to vector<8xf32>
    %227 = vector.shape_cast %226 : vector<8xf32> to vector<8x1xf32>
    %228 = vector.broadcast %227 : vector<8x1xf32> to vector<8x8xf32>
    %229 = arith.subf %225, %228 : vector<8x8xf32>
    %230 = math.exp %229 : vector<8x8xf32>
    %cst_40 = arith.constant dense<0.000000e+00> : vector<8xf32>
    %231 = vector.multi_reduction <add>, %230, %cst_40 [1] : vector<8x8xf32> to vector<8xf32>
    %232 = vector.shape_cast %231 : vector<8xf32> to vector<8x1xf32>
    %233 = arith.truncf %230 : vector<8x8xf32> to vector<8x8xbf16>
    %cst_41 = arith.constant dense<0.000000e+00> : vector<8x16xf32>
    %234 = tpu.matmul %233, %223, %cst_41 {dimension_numbers = #tpu.dot_dimension_numbers<[1], [0], [0], [1], [0, 0, 1, 1], [], []>} : vector<8x8xbf16>, vector<8x16xbf16>, vector<8x16xf32> -> vector<8x16xf32>
    %235 = tpu.reciprocal %232 {approx = true} : vector<8x1xf32> -> vector<8x1xf32>
    %236 = vector.broadcast %235 : vector<8x1xf32> to vector<8x16xf32>
    %237 = arith.mulf %234, %236 : vector<8x16xf32>
    %238 = vector.extract_strided_slice %69 {offsets = [8, 32], sizes = [8, 16], strides = [1, 1]} : vector<16x64xf32> to vector<8x16xf32>
    %239 = arith.truncf %238 : vector<8x16xf32> to vector<8x16xbf16>
    %240 = vector.extract_strided_slice %110 {offsets = [8, 32], sizes = [8, 16], strides = [1, 1]} : vector<16x64xf32> to vector<8x16xf32>
    %241 = arith.truncf %240 : vector<8x16xf32> to vector<8x16xbf16>
    %242 = vector.extract_strided_slice %24 {offsets = [8, 32], sizes = [8, 16], strides = [1, 1]} : vector<16x64xf32> to vector<8x16xf32>
    %243 = arith.truncf %242 : vector<8x16xf32> to vector<8x16xbf16>
    %cst_42 = arith.constant dense<0.000000e+00> : vector<8x8xf32>
    %244 = tpu.matmul %239, %241, %cst_42 {dimension_numbers = #tpu.dot_dimension_numbers<[1], [1], [0], [0], [0, 0, 1, 0], [], []>} : vector<8x16xbf16>, vector<8x16xbf16>, vector<8x8xf32> -> vector<8x8xf32>
    %245 = arith.addf %244, %116 : vector<8x8xf32>
    %cst_43 = arith.constant dense<0xFF800000> : vector<8xf32>
    %246 = vector.multi_reduction <maximumf>, %245, %cst_43 [1] : vector<8x8xf32> to vector<8xf32>
    %247 = vector.shape_cast %246 : vector<8xf32> to vector<8x1xf32>
    %248 = vector.broadcast %247 : vector<8x1xf32> to vector<8x8xf32>
    %249 = arith.subf %245, %248 : vector<8x8xf32>
    %250 = math.exp %249 : vector<8x8xf32>
    %cst_44 = arith.constant dense<0.000000e+00> : vector<8xf32>
    %251 = vector.multi_reduction <add>, %250, %cst_44 [1] : vector<8x8xf32> to vector<8xf32>
    %252 = vector.shape_cast %251 : vector<8xf32> to vector<8x1xf32>
    %253 = arith.truncf %250 : vector<8x8xf32> to vector<8x8xbf16>
    %cst_45 = arith.constant dense<0.000000e+00> : vector<8x16xf32>
    %254 = tpu.matmul %253, %243, %cst_45 {dimension_numbers = #tpu.dot_dimension_numbers<[1], [0], [0], [1], [0, 0, 1, 1], [], []>} : vector<8x8xbf16>, vector<8x16xbf16>, vector<8x16xf32> -> vector<8x16xf32>
    %255 = tpu.reciprocal %252 {approx = true} : vector<8x1xf32> -> vector<8x1xf32>
    %256 = vector.broadcast %255 : vector<8x1xf32> to vector<8x16xf32>
    %257 = arith.mulf %254, %256 : vector<8x16xf32>
    %258 = vector.extract_strided_slice %69 {offsets = [8, 48], sizes = [8, 16], strides = [1, 1]} : vector<16x64xf32> to vector<8x16xf32>
    %259 = arith.truncf %258 : vector<8x16xf32> to vector<8x16xbf16>
    %260 = vector.extract_strided_slice %110 {offsets = [8, 48], sizes = [8, 16], strides = [1, 1]} : vector<16x64xf32> to vector<8x16xf32>
    %261 = arith.truncf %260 : vector<8x16xf32> to vector<8x16xbf16>
    %262 = vector.extract_strided_slice %24 {offsets = [8, 48], sizes = [8, 16], strides = [1, 1]} : vector<16x64xf32> to vector<8x16xf32>
    %263 = arith.truncf %262 : vector<8x16xf32> to vector<8x16xbf16>
    %cst_46 = arith.constant dense<0.000000e+00> : vector<8x8xf32>
    %264 = tpu.matmul %259, %261, %cst_46 {dimension_numbers = #tpu.dot_dimension_numbers<[1], [1], [0], [0], [0, 0, 1, 0], [], []>} : vector<8x16xbf16>, vector<8x16xbf16>, vector<8x8xf32> -> vector<8x8xf32>
    %265 = arith.addf %264, %116 : vector<8x8xf32>
    %cst_47 = arith.constant dense<0xFF800000> : vector<8xf32>
    %266 = vector.multi_reduction <maximumf>, %265, %cst_47 [1] : vector<8x8xf32> to vector<8xf32>
    %267 = vector.shape_cast %266 : vector<8xf32> to vector<8x1xf32>
    %268 = vector.broadcast %267 : vector<8x1xf32> to vector<8x8xf32>
    %269 = arith.subf %265, %268 : vector<8x8xf32>
    %270 = math.exp %269 : vector<8x8xf32>
    %cst_48 = arith.constant dense<0.000000e+00> : vector<8xf32>
    %271 = vector.multi_reduction <add>, %270, %cst_48 [1] : vector<8x8xf32> to vector<8xf32>
    %272 = vector.shape_cast %271 : vector<8xf32> to vector<8x1xf32>
    %273 = arith.truncf %270 : vector<8x8xf32> to vector<8x8xbf16>
    %cst_49 = arith.constant dense<0.000000e+00> : vector<8x16xf32>
    %274 = tpu.matmul %273, %263, %cst_49 {dimension_numbers = #tpu.dot_dimension_numbers<[1], [0], [0], [1], [0, 0, 1, 1], [], []>} : vector<8x8xbf16>, vector<8x16xbf16>, vector<8x16xf32> -> vector<8x16xf32>
    %275 = tpu.reciprocal %272 {approx = true} : vector<8x1xf32> -> vector<8x1xf32>
    %276 = vector.broadcast %275 : vector<8x1xf32> to vector<8x16xf32>
    %277 = arith.mulf %274, %276 : vector<8x16xf32>
    %278 = tpu.concatenate %217, %237, %257, %277 in 1 : vector<8x16xf32>, vector<8x16xf32>, vector<8x16xf32>, vector<8x16xf32> -> vector<8x64xf32>
    %279 = tpu.concatenate %197, %278 in 0 : vector<8x64xf32>, vector<8x64xf32> -> vector<16x64xf32>
    %280 = arith.truncf %279 : vector<16x64xf32> to vector<16x64xbf16>
    %c0_50 = arith.constant 0 : index
    %c0_51 = arith.constant 0 : index
    %c0_52 = arith.constant 0 : index
    %281 = vector.load %arg7[%c0_50, %c0_51, %c0_52] : memref<1x64x64xbf16, #tpu.memory_space<vmem>>, vector<1x64x64xbf16>
    %282 = vector.shape_cast %281 : vector<1x64x64xbf16> to vector<64x64xbf16>
    %cst_53 = arith.constant dense<0.000000e+00> : vector<16x64xf32>
    %283 = tpu.matmul %280, %282, %cst_53 {dimension_numbers = #tpu.dot_dimension_numbers<[1], [0], [0], [1], [0, 0, 1, 1], [], []>} : vector<16x64xbf16>, vector<64x64xbf16>, vector<16x64xf32> -> vector<16x64xf32>
    %cst_54 = arith.constant 5.000000e-01 : f32
    %284 = vector.broadcast %cst_54 : f32 to vector<16x64xf32>
    %285 = arith.mulf %283, %284 : vector<16x64xf32>
    %286 = arith.addf %285, %3 : vector<16x64xf32>
    %c0_55 = arith.constant 0 : index
    %c0_56 = arith.constant 0 : index
    %c0_57 = arith.constant 0 : index
    %287 = vector.load %arg5[%c0_55, %c0_56, %c0_57] : memref<1x1x64xf32, #tpu.memory_space<vmem>>, vector<1x1x64xf32>
    %288 = vector.shape_cast %287 : vector<1x1x64xf32> to vector<1x64xf32>
    %289 = arith.mulf %286, %286 : vector<16x64xf32>
    %cst_58 = arith.constant dense<0.000000e+00> : vector<16xf32>
    %290 = vector.multi_reduction <add>, %289, %cst_58 [1] : vector<16x64xf32> to vector<16xf32>
    %291 = vector.shape_cast %290 : vector<16xf32> to vector<16x1xf32>
    %cst_59 = arith.constant 6.400000e+01 : f32
    %292 = vector.broadcast %cst_59 : f32 to vector<16x1xf32>
    %293 = arith.divf %291, %292 : vector<16x1xf32>
    %cst_60 = arith.constant 9.99999974E-6 : f32
    %294 = vector.broadcast %cst_60 : f32 to vector<16x1xf32>
    %295 = arith.addf %293, %294 : vector<16x1xf32>
    %296 = math.rsqrt %295 : vector<16x1xf32>
    %297 = vector.broadcast %296 : vector<16x1xf32> to vector<16x64xf32>
    %298 = arith.mulf %286, %297 : vector<16x64xf32>
    %299 = vector.broadcast %288 : vector<1x64xf32> to vector<16x64xf32>
    %300 = arith.mulf %298, %299 : vector<16x64xf32>
    %301 = arith.truncf %300 : vector<16x64xf32> to vector<16x64xbf16>
    %c0_61 = arith.constant 0 : index
    %c0_62 = arith.constant 0 : index
    %c0_63 = arith.constant 0 : index
    %302 = vector.load %arg8[%c0_61, %c0_62, %c0_63] : memref<1x64x384xbf16, #tpu.memory_space<vmem>>, vector<1x64x384xbf16>
    %303 = vector.shape_cast %302 : vector<1x64x384xbf16> to vector<64x384xbf16>
    %cst_64 = arith.constant dense<0.000000e+00> : vector<16x384xf32>
    %304 = tpu.matmul %301, %303, %cst_64 {dimension_numbers = #tpu.dot_dimension_numbers<[1], [0], [0], [1], [0, 0, 1, 1], [], []>} : vector<16x64xbf16>, vector<64x384xbf16>, vector<16x384xf32> -> vector<16x384xf32>
    %305 = vector.extract_strided_slice %304 {offsets = [0, 0], sizes = [16, 192], strides = [1, 1]} : vector<16x384xf32> to vector<16x192xf32>
    %306 = vector.extract_strided_slice %304 {offsets = [0, 192], sizes = [16, 192], strides = [1, 1]} : vector<16x384xf32> to vector<16x192xf32>
    %307 = arith.negf %305 : vector<16x192xf32>
    %308 = math.exp %307 : vector<16x192xf32>
    %cst_65 = arith.constant 1.000000e+00 : f32
    %309 = vector.broadcast %cst_65 : f32 to vector<16x192xf32>
    %310 = arith.addf %309, %308 : vector<16x192xf32>
    %311 = arith.divf %309, %310 : vector<16x192xf32>
    %312 = arith.mulf %305, %311 : vector<16x192xf32>
    %313 = arith.mulf %312, %306 : vector<16x192xf32>
    %314 = arith.truncf %313 : vector<16x192xf32> to vector<16x192xbf16>
    %c0_66 = arith.constant 0 : index
    %c0_67 = arith.constant 0 : index
    %c0_68 = arith.constant 0 : index
    %315 = vector.load %arg9[%c0_66, %c0_67, %c0_68] : memref<1x192x64xbf16, #tpu.memory_space<vmem>>, vector<1x192x64xbf16>
    %316 = vector.shape_cast %315 : vector<1x192x64xbf16> to vector<192x64xbf16>
    %cst_69 = arith.constant dense<0.000000e+00> : vector<16x64xf32>
    %317 = tpu.matmul %314, %316, %cst_69 {dimension_numbers = #tpu.dot_dimension_numbers<[1], [0], [0], [1], [0, 0, 1, 1], [], []>} : vector<16x192xbf16>, vector<192x64xbf16>, vector<16x64xf32> -> vector<16x64xf32>
    %cst_70 = arith.constant 5.000000e-01 : f32
    %318 = vector.broadcast %cst_70 : f32 to vector<16x64xf32>
    %319 = arith.mulf %317, %318 : vector<16x64xf32>
    %320 = arith.addf %319, %286 : vector<16x64xf32>
    %c0_71 = arith.constant 0 : index
    %c0_72 = arith.constant 0 : index
    %321 = vector.load %arg12[%c0_71, %c0_72] : memref<16x64xf32, #tpu.memory_space<vmem>>, vector<16x64xf32>
    tpu.vector_store %arg12[%c0_71, %c0_72], %320 {strides = array<i32>} : memref<16x64xf32, #tpu.memory_space<vmem>>, vector<16x64xf32>,
    %c1_i32 = arith.constant 1 : i32
    %322 = arith.cmpi eq, %arg0, %c1_i32 : i32
    %323 = arith.extui %322 : i1 to i32
    %c0_i32_73 = arith.constant 0 : i32
    %324 = arith.cmpi ne, %323, %c0_i32_73 : i32
    scf.if %324 {
      %c0_74 = arith.constant 0 : index
      %c0_75 = arith.constant 0 : index
      %325 = vector.load %arg10[%c0_74, %c0_75] : memref<1x64xf32, #tpu.memory_space<vmem>>, vector<1x64xf32>
      %326 = arith.mulf %320, %320 : vector<16x64xf32>
      %cst_76 = arith.constant dense<0.000000e+00> : vector<16xf32>
      %327 = vector.multi_reduction <add>, %326, %cst_76 [1] : vector<16x64xf32> to vector<16xf32>
      %328 = vector.shape_cast %327 : vector<16xf32> to vector<16x1xf32>
      %cst_77 = arith.constant 6.400000e+01 : f32
      %329 = vector.broadcast %cst_77 : f32 to vector<16x1xf32>
      %330 = arith.divf %328, %329 : vector<16x1xf32>
      %cst_78 = arith.constant 9.99999974E-6 : f32
      %331 = vector.broadcast %cst_78 : f32 to vector<16x1xf32>
      %332 = arith.addf %330, %331 : vector<16x1xf32>
      %333 = math.rsqrt %332 : vector<16x1xf32>
      %334 = vector.broadcast %333 : vector<16x1xf32> to vector<16x64xf32>
      %335 = arith.mulf %320, %334 : vector<16x64xf32>
      %336 = vector.broadcast %325 : vector<1x64xf32> to vector<16x64xf32>
      %337 = arith.mulf %335, %336 : vector<16x64xf32>
      %c0_79 = arith.constant 0 : index
      %c0_80 = arith.constant 0 : index
      %338 = vector.load %arg11[%c0_79, %c0_80] : memref<16x64xf32, #tpu.memory_space<vmem>>, vector<16x64xf32>
      tpu.vector_store %arg11[%c0_79, %c0_80], %337 {strides = array<i32>} : memref<16x64xf32, #tpu.memory_space<vmem>>, vector<16x64xf32>,
    } else {
    }
    return
  }
  func.func @transform_0(%arg0: i32) -> (i32, i32) {
    %c0_i32 = arith.constant 0 : i32
    %c0_i32_0 = arith.constant 0 : i32
    %c0_i32_1 = arith.constant 0 : i32
    return %c0_i32, %c0_i32_0 : i32, i32
  }
  func.func @transform_1(%arg0: i32) -> (i32, i32) {
    %c0_i32 = arith.constant 0 : i32
    %c0_i32_0 = arith.constant 0 : i32
    %c0_i32_1 = arith.constant 0 : i32
    return %c0_i32, %c0_i32_0 : i32, i32
  }
  func.func @transform_2(%arg0: i32) -> (i32, i32) {
    %c0_i32 = arith.constant 0 : i32
    %c0_i32_0 = arith.constant 0 : i32
    %c0_i32_1 = arith.constant 0 : i32
    return %c0_i32, %c0_i32_0 : i32, i32
  }
  func.func @transform_3(%arg0: i32) -> (i32, i32, i32) {
    %c0_i32 = arith.constant 0 : i32
    %c0_i32_0 = arith.constant 0 : i32
    %c0_i32_1 = arith.constant 0 : i32
    return %arg0, %c0_i32, %c0_i32_0 : i32, i32, i32
  }
  func.func @transform_4(%arg0: i32) -> (i32, i32, i32) {
    %c0_i32 = arith.constant 0 : i32
    %c0_i32_0 = arith.constant 0 : i32
    %c0_i32_1 = arith.constant 0 : i32
    return %arg0, %c0_i32, %c0_i32_0 : i32, i32, i32
  }
  func.func @transform_5(%arg0: i32) -> (i32, i32, i32) {
    %c0_i32 = arith.constant 0 : i32
    %c0_i32_0 = arith.constant 0 : i32
    %c0_i32_1 = arith.constant 0 : i32
    return %arg0, %c0_i32, %c0_i32_0 : i32, i32, i32
  }
  func.func @transform_6(%arg0: i32) -> (i32, i32, i32) {
    %c0_i32 = arith.constant 0 : i32
    %c0_i32_0 = arith.constant 0 : i32
    %c0_i32_1 = arith.constant 0 : i32
    return %arg0, %c0_i32, %c0_i32_0 : i32, i32, i32
  }
  func.func @transform_7(%arg0: i32) -> (i32, i32, i32) {
    %c0_i32 = arith.constant 0 : i32
    %c0_i32_0 = arith.constant 0 : i32
    %c0_i32_1 = arith.constant 0 : i32
    return %arg0, %c0_i32, %c0_i32_0 : i32, i32, i32
  }
  func.func @transform_8(%arg0: i32) -> (i32, i32, i32) {
    %c0_i32 = arith.constant 0 : i32
    %c0_i32_0 = arith.constant 0 : i32
    %c0_i32_1 = arith.constant 0 : i32
    return %arg0, %c0_i32, %c0_i32_0 : i32, i32, i32
  }
  func.func @transform_9(%arg0: i32) -> (i32, i32) {
    %c0_i32 = arith.constant 0 : i32
    %c0_i32_0 = arith.constant 0 : i32
    %c0_i32_1 = arith.constant 0 : i32
    return %c0_i32, %c0_i32_0 : i32, i32
  }
  func.func @transform_10(%arg0: i32) -> (i32, i32) {
    %c0_i32 = arith.constant 0 : i32
    %c0_i32_0 = arith.constant 0 : i32
    %c0_i32_1 = arith.constant 0 : i32
    return %c0_i32, %c0_i32_0 : i32, i32
  }
}

</mosaic_0001>

<llo_original>
// kernel: tpu_custom_call.1
$region0: #{tpu_custom_call.1}
  #allocation0 [shape = 'u32[]', space=smem, size = 0x4, offset = 0x4, fixed_abs, tag = 'smem constant byte address 0x4 - core index']
  #allocation1 [shape = 'u32[144,128]{1,0:T(1,128)}', space=vmem, size = 0x12000, scoped, tag = 'internal scratch']
  #allocation2 [shape = 'f32[16,64]{1,0:T(8,128)}', space=vmem, size = 0x2000, scoped, tag = 'scratch operand']
  %s0 = inlined_call_operand.hbm [shape: f32[16,64], index: 0, kind: input, shape index: {}]
  %s1 = inlined_call_operand.vmem [shape: f32[16,8], index: 1, kind: input, shape index: {}]
  %s2 = inlined_call_operand.vmem [shape: f32[16,8], index: 2, kind: input, shape index: {}]
  %s3 = inlined_call_operand.vmem [shape: f32[2,1,64], index: 3, kind: input, shape index: {}]
  %s4 = inlined_call_operand.vmem [shape: f32[2,1,64], index: 4, kind: input, shape index: {}]
  %s5 = inlined_call_operand.vmem [shape: bf16[2,64,192], index: 5, kind: input, shape index: {}]
  %s6 = inlined_call_operand.vmem [shape: bf16[2,64,64], index: 6, kind: input, shape index: {}]
  %s7 = inlined_call_operand.vmem [shape: bf16[2,64,384], index: 7, kind: input, shape index: {}]
  %s8 = inlined_call_operand.vmem [shape: bf16[2,192,64], index: 8, kind: input, shape index: {}]
  %s9 = inlined_call_operand.vmem [shape: f32[1,64], index: 9, kind: input, shape index: {}]
  %s10 = inlined_call_operand.hbm [shape: f32[16,64], index: 10, kind: output, shape index: {}]
  %s11 = sld [smem:[#allocation0]]
  $region85: #{tpu_custom_call.1} parent=0
    _
  %s13 = ssub.s32 1, %s11
  %s14 = scalar_select 0, %s13, %s11
  $region1: #{tpu_custom_call.1} parent=0
    #allocation3 [shape = 'u8[8192]{0}', space=vmem, size = 0x2000, scoped, tag = 'input window, operand 0, single buffered']
    #allocation4 [shape = 's32[2]{0}', space=sflag, size = 0x8, scoped, tag = 'scoped memory for tpu_custom_call.1']
    #allocation5 [shape = 's32[2]{0}', space=sflag, size = 0x8, scoped, tag = 'scoped memory for tpu_custom_call.1']
    #allocation6 [shape = 'u8[8192]{0}', space=vmem, size = 0x2000, scoped, tag = 'output window, operand 0, single buffered']
    %15 = vsyncpa [#allocation4], 0
    %16 = vsyncpa [#allocation5], 0
    loop: start=0, step=1, limit=4
    $region2: #{tpu_custom_call.1} parent=1 // loop_pre_header
      _
    $region3: #{tpu_custom_call.1} parent=1 // loop_header
      %s18 = sphi 0, %s22
      %p19 = scmp.ge.s32.totalorder %s18, 4
      %s26 = sphi 0, %s26
      %s28 = sphi 0, %s26
      %s29 = sphi 0, %s28
      %s43 = sphi 0, %s29
      %s47 = sphi 0, %s47
      %s49 = sphi 0, %s47
      %s50 = sphi 0, %s49
      %s64 = sphi 0, %s50
      %s68 = sphi 0, %s68
      %s70 = sphi 0, %s68
      %s71 = sphi 0, %s70
      %s85 = sphi 0, %s71
      %s91 = sphi 0, %s93
      %s94 = sphi 0, %s91
      %s95 = sphi 0, %s94
      %s111 = sphi 0, %s95
      %s117 = sphi 0, %s119
      %s120 = sphi 0, %s117
      %s121 = sphi 0, %s120
      %s137 = sphi 0, %s121
      %s143 = sphi 0, %s145
      %s146 = sphi 0, %s143
      %s147 = sphi 0, %s146
      %s163 = sphi 0, %s147
      %s169 = sphi 0, %s171
      %s172 = sphi 0, %s169
      %s173 = sphi 0, %s172
      %s189 = sphi 0, %s173
      %s195 = sphi 0, %s197
      %s198 = sphi 0, %s195
      %s199 = sphi 0, %s198
      %s215 = sphi 0, %s199
      %s221 = sphi 0, %s223
      %s224 = sphi 0, %s221
      %s225 = sphi 0, %s224
      %s241 = sphi 0, %s225
      %s245 = sphi 0, %s245
      %s247 = sphi 0, %s245
      %s248 = sphi 0, %s247
      %s262 = sphi 0, %s248
      %s266 = sphi 0, %s266
      %s268 = sphi 0, %s266
      %s269 = sphi 0, %s268
      %s283 = sphi 0, %s269
    $region4: #{tpu_custom_call.1} parent=1 // loop_header_branch
      %21 = sbr.rel (%p19) target = $region8
    $region5: #{tpu_custom_call.1} parent=1 // loop_body
      %s23 = ssub.s32 %s18, 1
      %s24 = ssub.s32 %s18, 2
      %s25 = sadd.s32 %s18, 1
      %s27 = sadd.s32 %s26, 1
      %p30 = scmp.eq.s32.totalorder %s18, 1
      %p31 = scmp.ne.s32.totalorder %s26, %s28
      %p32 = scmp.eq.s32.totalorder %s18, 0
      %p33 = por %p31, %p32
      %p34 = scmp.ne.s32.totalorder %s26, %s28
      %p35 = scmp.eq.s32.totalorder %s23, 1
      %p36 = por %p34, %p35
      %p37 = scmp.ne.s32.totalorder %s28, %s29
      %p38 = scmp.eq.s32.totalorder %s23, 0
      %p39 = por %p37, %p38
      %p40 = scmp.ne.s32.totalorder %s28, %s29
      %p41 = scmp.eq.s32.totalorder %s24, 1
      %p42 = por %p40, %p41
      %p44 = scmp.ne.s32.totalorder %s29, %s43
      %p45 = scmp.eq.s32.totalorder %s24, 0
      %p46 = por %p44, %p45
      %s48 = sadd.s32 %s47, 1
      %p51 = scmp.eq.s32.totalorder %s18, 1
      %p52 = scmp.ne.s32.totalorder %s47, %s49
      %p53 = scmp.eq.s32.totalorder %s18, 0
      %p54 = por %p52, %p53
      %p55 = scmp.ne.s32.totalorder %s47, %s49
      %p56 = scmp.eq.s32.totalorder %s23, 1
      %p57 = por %p55, %p56
      %p58 = scmp.ne.s32.totalorder %s49, %s50
      %p59 = scmp.eq.s32.totalorder %s23, 0
      %p60 = por %p58, %p59
      %p61 = scmp.ne.s32.totalorder %s49, %s50
      %p62 = scmp.eq.s32.totalorder %s24, 1
      %p63 = por %p61, %p62
      %p65 = scmp.ne.s32.totalorder %s50, %s64
      %p66 = scmp.eq.s32.totalorder %s24, 0
      %p67 = por %p65, %p66
      %s69 = sadd.s32 %s68, 1
      %p72 = scmp.eq.s32.totalorder %s18, 1
      %p73 = scmp.ne.s32.totalorder %s68, %s70
      %p74 = scmp.eq.s32.totalorder %s18, 0
      %p75 = por %p73, %p74
      %p76 = scmp.ne.s32.totalorder %s68, %s70
      %p77 = scmp.eq.s32.totalorder %s23, 1
      %p78 = por %p76, %p77
      %p79 = scmp.ne.s32.totalorder %s70, %s71
      %p80 = scmp.eq.s32.totalorder %s23, 0
      %p81 = por %p79, %p80
      %p82 = scmp.ne.s32.totalorder %s70, %s71
      %p83 = scmp.eq.s32.totalorder %s24, 1
      %p84 = por %p82, %p83
      %p86 = scmp.ne.s32.totalorder %s71, %s85
      %p87 = scmp.eq.s32.totalorder %s24, 0
      %p88 = por %p86, %p87
      %s89 = ssub.s32 %s18, %s25
      %p90 = scmp.eq.s32.totalorder %s89, 0
      %s92 = sadd.s32 %s91, 1
      %s93 = scalar_select %p90, %s91, %s92
      %p96 = pneg %p90
      %p97 = scmp.eq.s32.totalorder %s18, 1
      %p98 = por %p96, %p97
      %p99 = scmp.ne.s32.totalorder %s91, %s94
      %p100 = scmp.eq.s32.totalorder %s18, 0
      %p101 = por %p99, %p100
      %p102 = scmp.ne.s32.totalorder %s91, %s94
      %p103 = scmp.eq.s32.totalorder %s23, 1
      %p104 = por %p102, %p103
      %p105 = scmp.ne.s32.totalorder %s94, %s95
      %p106 = scmp.eq.s32.totalorder %s23, 0
      %p107 = por %p105, %p106
      %p108 = scmp.ne.s32.totalorder %s94, %s95
      %p109 = scmp.eq.s32.totalorder %s24, 1
      %p110 = por %p108, %p109
      %p112 = scmp.ne.s32.totalorder %s95, %s111
      %p113 = scmp.eq.s32.totalorder %s24, 0
      %p114 = por %p112, %p113
      %s115 = ssub.s32 %s18, %s25
      %p116 = scmp.eq.s32.totalorder %s115, 0
      %s118 = sadd.s32 %s117, 1
      %s119 = scalar_select %p116, %s117, %s118
      %p122 = pneg %p116
      %p123 = scmp.eq.s32.totalorder %s18, 1
      %p124 = por %p122, %p123
      %p125 = scmp.ne.s32.totalorder %s117, %s120
      %p126 = scmp.eq.s32.totalorder %s18, 0
      %p127 = por %p125, %p126
      %p128 = scmp.ne.s32.totalorder %s117, %s120
      %p129 = scmp.eq.s32.totalorder %s23, 1
      %p130 = por %p128, %p129
      %p131 = scmp.ne.s32.totalorder %s120, %s121
      %p132 = scmp.eq.s32.totalorder %s23, 0
      %p133 = por %p131, %p132
      %p134 = scmp.ne.s32.totalorder %s120, %s121
      %p135 = scmp.eq.s32.totalorder %s24, 1
      %p136 = por %p134, %p135
      %p138 = scmp.ne.s32.totalorder %s121, %s137
      %p139 = scmp.eq.s32.totalorder %s24, 0
      %p140 = por %p138, %p139
      %s141 = ssub.s32 %s18, %s25
      %p142 = scmp.eq.s32.totalorder %s141, 0
      %s144 = sadd.s32 %s143, 1
      %s145 = scalar_select %p142, %s143, %s144
      %p148 = pneg %p142
      %p149 = scmp.eq.s32.totalorder %s18, 1
      %p150 = por %p148, %p149
      %p151 = scmp.ne.s32.totalorder %s143, %s146
      %p152 = scmp.eq.s32.totalorder %s18, 0
      %p153 = por %p151, %p152
      %p154 = scmp.ne.s32.totalorder %s143, %s146
      %p155 = scmp.eq.s32.totalorder %s23, 1
      %p156 = por %p154, %p155
      %p157 = scmp.ne.s32.totalorder %s146, %s147
      %p158 = scmp.eq.s32.totalorder %s23, 0
      %p159 = por %p157, %p158
      %p160 = scmp.ne.s32.totalorder %s146, %s147
      %p161 = scmp.eq.s32.totalorder %s24, 1
      %p162 = por %p160, %p161
      %p164 = scmp.ne.s32.totalorder %s147, %s163
      %p165 = scmp.eq.s32.totalorder %s24, 0
      %p166 = por %p164, %p165
      %s167 = ssub.s32 %s18, %s25
      %p168 = scmp.eq.s32.totalorder %s167, 0
      %s170 = sadd.s32 %s169, 1
      %s171 = scalar_select %p168, %s169, %s170
      %p174 = pneg %p168
      %p175 = scmp.eq.s32.totalorder %s18, 1
      %p176 = por %p174, %p175
      %p177 = scmp.ne.s32.totalorder %s169, %s172
      %p178 = scmp.eq.s32.totalorder %s18, 0
      %p179 = por %p177, %p178
      %p180 = scmp.ne.s32.totalorder %s169, %s172
      %p181 = scmp.eq.s32.totalorder %s23, 1
      %p182 = por %p180, %p181
      %p183 = scmp.ne.s32.totalorder %s172, %s173
      %p184 = scmp.eq.s32.totalorder %s23, 0
      %p185 = por %p183, %p184
      %p186 = scmp.ne.s32.totalorder %s172, %s173
      %p187 = scmp.eq.s32.totalorder %s24, 1
      %p188 = por %p186, %p187
      %p190 = scmp.ne.s32.totalorder %s173, %s189
      %p191 = scmp.eq.s32.totalorder %s24, 0
      %p192 = por %p190, %p191
      %s193 = ssub.s32 %s18, %s25
      %p194 = scmp.eq.s32.totalorder %s193, 0
      %s196 = sadd.s32 %s195, 1
      %s197 = scalar_select %p194, %s195, %s196
      %p200 = pneg %p194
      %p201 = scmp.eq.s32.totalorder %s18, 1
      %p202 = por %p200, %p201
      %p203 = scmp.ne.s32.totalorder %s195, %s198
      %p204 = scmp.eq.s32.totalorder %s18, 0
      %p205 = por %p203, %p204
      %p206 = scmp.ne.s32.totalorder %s195, %s198
      %p207 = scmp.eq.s32.totalorder %s23, 1
      %p208 = por %p206, %p207
      %p209 = scmp.ne.s32.totalorder %s198, %s199
      %p210 = scmp.eq.s32.totalorder %s23, 0
      %p211 = por %p209, %p210
      %p212 = scmp.ne.s32.totalorder %s198, %s199
      %p213 = scmp.eq.s32.totalorder %s24, 1
      %p214 = por %p212, %p213
      %p216 = scmp.ne.s32.totalorder %s199, %s215
      %p217 = scmp.eq.s32.totalorder %s24, 0
      %p218 = por %p216, %p217
      %s219 = ssub.s32 %s18, %s25
      %p220 = scmp.eq.s32.totalorder %s219, 0
      %s222 = sadd.s32 %s221, 1
      %s223 = scalar_select %p220, %s221, %s222
      %p226 = pneg %p220
      %p227 = scmp.eq.s32.totalorder %s18, 1
      %p228 = por %p226, %p227
      %p229 = scmp.ne.s32.totalorder %s221, %s224
      %p230 = scmp.eq.s32.totalorder %s18, 0
      %p231 = por %p229, %p230
      %p232 = scmp.ne.s32.totalorder %s221, %s224
      %p233 = scmp.eq.s32.totalorder %s23, 1
      %p234 = por %p232, %p233
      %p235 = scmp.ne.s32.totalorder %s224, %s225
      %p236 = scmp.eq.s32.totalorder %s23, 0
      %p237 = por %p235, %p236
      %p238 = scmp.ne.s32.totalorder %s224, %s225
      %p239 = scmp.eq.s32.totalorder %s24, 1
      %p240 = por %p238, %p239
      %p242 = scmp.ne.s32.totalorder %s225, %s241
      %p243 = scmp.eq.s32.totalorder %s24, 0
      %p244 = por %p242, %p243
      %s246 = sadd.s32 %s245, 1
      %p249 = scmp.eq.s32.totalorder %s18, 1
      %p250 = scmp.ne.s32.totalorder %s245, %s247
      %p251 = scmp.eq.s32.totalorder %s18, 0
      %p252 = por %p250, %p251
      %p253 = scmp.ne.s32.totalorder %s245, %s247
      %p254 = scmp.eq.s32.totalorder %s23, 1
      %p255 = por %p253, %p254
      %p256 = scmp.ne.s32.totalorder %s247, %s248
      %p257 = scmp.eq.s32.totalorder %s23, 0
      %p258 = por %p256, %p257
      %p259 = scmp.ne.s32.totalorder %s247, %s248
      %p260 = scmp.eq.s32.totalorder %s24, 1
      %p261 = por %p259, %p260
      %p263 = scmp.ne.s32.totalorder %s248, %s262
      %p264 = scmp.eq.s32.totalorder %s24, 0
      %p265 = por %p263, %p264
      %s267 = sadd.s32 %s266, 1
      %p270 = scmp.eq.s32.totalorder %s18, 1
      %p271 = scmp.ne.s32.totalorder %s266, %s268
      %p272 = scmp.eq.s32.totalorder %s18, 0
      %p273 = por %p271, %p272
      %p274 = scmp.ne.s32.totalorder %s266, %s268
      %p275 = scmp.eq.s32.totalorder %s23, 1
      %p276 = por %p274, %p275
      %p277 = scmp.ne.s32.totalorder %s268, %s269
      %p278 = scmp.eq.s32.totalorder %s23, 0
      %p279 = por %p277, %p278
      %p280 = scmp.ne.s32.totalorder %s268, %s269
      %p281 = scmp.eq.s32.totalorder %s24, 1
      %p282 = por %p280, %p281
      %p284 = scmp.ne.s32.totalorder %s269, %s283
      %p285 = scmp.eq.s32.totalorder %s24, 0
      %p286 = por %p284, %p285
      %p287 = scmp.le.s32.totalorder 1, %s18
      %p288 = scmp.lt.s32.totalorder %s18, 3
      %p289 = pnand %p287, %p288
      %p290 = pneg %p289
      // Predicated region
      $region9: #{tpu_custom_call.1} parent=5 // pred_check
        _
      $region10: #{tpu_custom_call.1} parent=5 // pred_check_branch
        %292 = sbr.rel (%p289) target = $region12
      $region11: #{tpu_custom_call.1} parent=5 // pred_region
        %s293 = ssub.s32 %s18, 1
        // Predicated region
        $region13: #{tpu_custom_call.1} parent=11 // pred_check
          %p294 = pneg %p39
        $region14: #{tpu_custom_call.1} parent=11 // pred_check_branch
          %296 = sbr.rel (%p294) target = $region16
        $region15: #{tpu_custom_call.1} parent=11 // pred_region
          %s298 = ssub.s32 256, 256
          %299 = vsyncadd [#allocation4], %s298
          %s300 = sshll.u32 [#allocation3], 4
          %s301 = int_to_ptr.vmem [resolvable:$true] %s300
          %306 = dma.hbm_to_vmem [thread:$0]  %s0, 256, %s301, [#allocation4], 128, 128, 8
        $region16: #{tpu_custom_call.1} parent=11 // pred_fallthru
          _
        // Predicated region
        $region17: #{tpu_custom_call.1} parent=11 // pred_check
          %p307 = pneg %p60
        $region18: #{tpu_custom_call.1} parent=11 // pred_check_branch
          %309 = sbr.rel (%p307) target = $region20
        $region19: #{tpu_custom_call.1} parent=11 // pred_region
          _
        $region20: #{tpu_custom_call.1} parent=11 // pred_fallthru
          _
        // Predicated region
        $region21: #{tpu_custom_call.1} parent=11 // pred_check
          %p310 = pneg %p81
        $region22: #{tpu_custom_call.1} parent=11 // pred_check_branch
          %312 = sbr.rel (%p310) target = $region24
        $region23: #{tpu_custom_call.1} parent=11 // pred_region
          _
        $region24: #{tpu_custom_call.1} parent=11 // pred_fallthru
          _
        // Predicated region
        $region25: #{tpu_custom_call.1} parent=11 // pred_check
          %p313 = pneg %p258
        $region26: #{tpu_custom_call.1} parent=11 // pred_check_branch
          %315 = sbr.rel (%p313) target = $region28
        $region27: #{tpu_custom_call.1} parent=11 // pred_region
          _
        $region28: #{tpu_custom_call.1} parent=11 // pred_fallthru
          _
      $region12: #{tpu_custom_call.1} parent=5 // pred_fallthru
        _
      %p316 = scmp.lt.s32.totalorder %s18, 2
      // Predicated region
      $region29: #{tpu_custom_call.1} parent=5 // pred_check
        %p317 = pneg %p316
      $region30: #{tpu_custom_call.1} parent=5 // pred_check_branch
        %319 = sbr.rel (%p317) target = $region32
      $region31: #{tpu_custom_call.1} parent=5 // pred_region
        // Predicated region
        $region33: #{tpu_custom_call.1} parent=31 // pred_check
          %p320 = pneg %p101
        $region34: #{tpu_custom_call.1} parent=31 // pred_check_branch
          %322 = sbr.rel (%p320) target = $region36
        $region35: #{tpu_custom_call.1} parent=31 // pred_region
          %p323 = scmp.lt.s32.totalorder %s18, 1
          %s324 = scalar_select %p323, %s18, 1
          %s325 = scalar_lea.vmem %s3, %s324
        $region36: #{tpu_custom_call.1} parent=31 // pred_fallthru
          _
        // Predicated region
        $region37: #{tpu_custom_call.1} parent=31 // pred_check
          %p326 = pneg %p127
        $region38: #{tpu_custom_call.1} parent=31 // pred_check_branch
          %328 = sbr.rel (%p326) target = $region40
        $region39: #{tpu_custom_call.1} parent=31 // pred_region
          %p329 = scmp.lt.s32.totalorder %s18, 1
          %s330 = scalar_select %p329, %s18, 1
          %s331 = scalar_lea.vmem %s4, %s330
        $region40: #{tpu_custom_call.1} parent=31 // pred_fallthru
          _
        // Predicated region
        $region41: #{tpu_custom_call.1} parent=31 // pred_check
          %p332 = pneg %p153
        $region42: #{tpu_custom_call.1} parent=31 // pred_check_branch
          %334 = sbr.rel (%p332) target = $region44
        $region43: #{tpu_custom_call.1} parent=31 // pred_region
          %p335 = scmp.lt.s32.totalorder %s18, 1
          %s336 = scalar_select %p335, %s18, 1
          %s337 = smul.addr %s336, 16
          %s338 = smul.addr %s337, 4
          %s339 = scalar_lea.vmem %s5, %s338
        $region44: #{tpu_custom_call.1} parent=31 // pred_fallthru
          _
        // Predicated region
        $region45: #{tpu_custom_call.1} parent=31 // pred_check
          %p340 = pneg %p179
        $region46: #{tpu_custom_call.1} parent=31 // pred_check_branch
          %342 = sbr.rel (%p340) target = $region48
        $region47: #{tpu_custom_call.1} parent=31 // pred_region
          %p343 = scmp.lt.s32.totalorder %s18, 1
          %s344 = scalar_select %p343, %s18, 1
          %s345 = smul.addr %s344, 8
          %s346 = smul.addr %s345, 4
          %s347 = scalar_lea.vmem %s6, %s346
        $region48: #{tpu_custom_call.1} parent=31 // pred_fallthru
          _
        // Predicated region
        $region49: #{tpu_custom_call.1} parent=31 // pred_check
          %p348 = pneg %p205
        $region50: #{tpu_custom_call.1} parent=31 // pred_check_branch
          %350 = sbr.rel (%p348) target = $region52
        $region51: #{tpu_custom_call.1} parent=31 // pred_region
          %p351 = scmp.lt.s32.totalorder %s18, 1
          %s352 = scalar_select %p351, %s18, 1
          %s353 = smul.addr %s352, 24
          %s354 = smul.addr %s353, 4
          %s355 = scalar_lea.vmem %s7, %s354
        $region52: #{tpu_custom_call.1} parent=31 // pred_fallthru
          _
        // Predicated region
        $region53: #{tpu_custom_call.1} parent=31 // pred_check
          %p356 = pneg %p231
        $region54: #{tpu_custom_call.1} parent=31 // pred_check_branch
          %358 = sbr.rel (%p356) target = $region56
        $region55: #{tpu_custom_call.1} parent=31 // pred_region
          %p359 = scmp.lt.s32.totalorder %s18, 1
          %s360 = scalar_select %p359, %s18, 1
          %s361 = smul.addr %s360, 24
          %s362 = smul.addr %s361, 4
          %s363 = scalar_lea.vmem %s8, %s362
        $region56: #{tpu_custom_call.1} parent=31 // pred_fallthru
          _
      $region32: #{tpu_custom_call.1} parent=5 // pred_fallthru
        _
      %p364 = scmp.le.s32.totalorder 1, %s18
      %p365 = scmp.lt.s32.totalorder %s18, 3
      %p366 = pnand %p364, %p365
      %p367 = pneg %p366
      // Predicated region
      $region57: #{tpu_custom_call.1} parent=5 // pred_check
        _
      $region58: #{tpu_custom_call.1} parent=5 // pred_check_branch
        %369 = sbr.rel (%p366) target = $region60
      $region59: #{tpu_custom_call.1} parent=5 // pred_region
        %s370 = ssub.s32 %s18, 1
        // Predicated region
        $region61: #{tpu_custom_call.1} parent=59 // pred_check
          %p371 = pneg %p39
        $region62: #{tpu_custom_call.1} parent=59 // pred_check_branch
          %373 = sbr.rel (%p371) target = $region64
        $region63: #{tpu_custom_call.1} parent=59 // pred_region
          %374 = dma.done [#allocation4], 256
        $region64: #{tpu_custom_call.1} parent=59 // pred_fallthru
          _
        %p375 = pneg %p39
        %p376 = pneg %p36
        %p377 = pneg %p60
        %p378 = pneg %p57
        %p379 = pneg %p81
        %p380 = pneg %p78
        %p381 = scmp.lt.s32.totalorder %s23, 1
        %s382 = scalar_select %p381, %s23, 1
        %s383 = scalar_lea.vmem %s3, %s382
        %p384 = pneg %p107
        %p385 = pneg %p104
        %p386 = scmp.lt.s32.totalorder %s23, 1
        %s387 = scalar_select %p386, %s23, 1
        %s388 = scalar_lea.vmem %s4, %s387
        %p389 = pneg %p133
        %p390 = pneg %p130
        %p391 = scmp.lt.s32.totalorder %s23, 1
        %s392 = scalar_select %p391, %s23, 1
        %s393 = smul.addr %s392, 16
        %s394 = smul.addr %s393, 4
        %s395 = scalar_lea.vmem %s5, %s394
        %p396 = pneg %p159
        %p397 = pneg %p156
        %p398 = scmp.lt.s32.totalorder %s23, 1
        %s399 = scalar_select %p398, %s23, 1
        %s400 = smul.addr %s399, 8
        %s401 = smul.addr %s400, 4
        %s402 = scalar_lea.vmem %s6, %s401
        %p403 = pneg %p185
        %p404 = pneg %p182
        %p405 = scmp.lt.s32.totalorder %s23, 1
        %s406 = scalar_select %p405, %s23, 1
        %s407 = smul.addr %s406, 24
        %s408 = smul.addr %s407, 4
        %s409 = scalar_lea.vmem %s7, %s408
        %p410 = pneg %p211
        %p411 = pneg %p208
        %p412 = scmp.lt.s32.totalorder %s23, 1
        %s413 = scalar_select %p412, %s23, 1
        %s414 = smul.addr %s413, 24
        %s415 = smul.addr %s414, 4
        %s416 = scalar_lea.vmem %s8, %s415
        %p417 = pneg %p237
        %p418 = pneg %p234
        %p419 = pneg %p258
        %p420 = pneg %p255
        %p421 = pneg %p279
        %p422 = pneg %p276
        %p423 = scmp.lt.s32.totalorder %s23, 1
        %s424 = scalar_select %p423, %s23, 1
        %s425 = scalar_lea.vmem %s3, %s424
        %p426 = scmp.lt.s32.totalorder %s23, 1
        %s427 = scalar_select %p426, %s23, 1
        %s428 = scalar_lea.vmem %s4, %s427
        %p429 = scmp.lt.s32.totalorder %s23, 1
        %s430 = scalar_select %p429, %s23, 1
        %s431 = smul.addr %s430, 16
        %s432 = smul.addr %s431, 4
        %s433 = scalar_lea.vmem %s5, %s432
        %p434 = scmp.lt.s32.totalorder %s23, 1
        %s435 = scalar_select %p434, %s23, 1
        %s436 = smul.addr %s435, 8
        %s437 = smul.addr %s436, 4
        %s438 = scalar_lea.vmem %s6, %s437
        %p439 = scmp.lt.s32.totalorder %s23, 1
        %s440 = scalar_select %p439, %s23, 1
        %s441 = smul.addr %s440, 24
        %s442 = smul.addr %s441, 4
        %s443 = scalar_lea.vmem %s7, %s442
        %p444 = scmp.lt.s32.totalorder %s23, 1
        %s445 = scalar_select %p444, %s23, 1
        %s446 = smul.addr %s445, 24
        %s447 = smul.addr %s446, 4
        %s448 = scalar_lea.vmem %s8, %s447
        %p450 = scmp.eq.s32.totalorder %s23, 0
        // Predicated region
        $region65: #{tpu_custom_call.1} parent=59 // pred_check
          %p451 = pneg %p450
        $region66: #{tpu_custom_call.1} parent=59 // pred_check_branch
          %453 = sbr.rel (%p451) target = $region68
        $region67: #{tpu_custom_call.1} parent=59 // pred_region
          %v454 = vld [vmem:[#allocation3] sm:$0xff]
          %v455 = vld [vmem:[#allocation3 + $0x8] sm:$0xff]
          %vm456 = vcmask 523264
          %457 = vst.msk [vmem:[#allocation2] sm:$0xff] %vm456, %v454
          %458 = vst.msk [vmem:[#allocation2 + $0x8] sm:$0xff] %vm456, %v455
        $region68: #{tpu_custom_call.1} parent=59 // pred_fallthru
          _
        %v459 = vld [vmem:[#allocation2] sm:$0xff]
        %v460 = vld [vmem:[#allocation2 + $0x8] sm:$0xff]
        %v461 = vld [vmem:[%s425] sm:$0x1]
        %v462 = vmul.f32 %v459, %v459
        %v463 = vmul.f32 %v460, %v460
        %vm464 = vcmask 523264
        %v465 = vsel %vm464, %v462, 0.0
        %466 = vadd.xlane.f32.xlu0 %v465
        %v467 = vpop.xlane.xlu0 %466
        %v468 = vsel %vm464, %v463, 0.0
        %469 = vadd.xlane.f32.xlu0 %v468
        %v470 = vpop.xlane.xlu0 %469
        %v471 = vrcp.pop 64.0
        %v472 = vmul.f32 %v467, %v471
        %v473 = vmul.f32 %v470, %v471
        %v474 = vadd.f32 %v472, 1e-05
        %v475 = vadd.f32 %v473, 1e-05
        %v476 = vrsqrt.pop %v474
        %v477 = vrsqrt.pop %v475
        %v478 = vmul.f32 %v459, %v476
        %v479 = vmul.f32 %v460, %v477
        %v481 = vlaneseq
        %v482 = vshrl.u32 %v481, 7
        %v483 = vsub.s32 0, %v482
        %v484 = vrot.slane %v461, %v483
        %v486 = vmul.f32 %v478, %v484
        %v487 = vmul.f32 %v479, %v484
        %v488 = vpack.c.bf16 %v487, %v486
        %v489 = vld [vmem:[%s433] sm:$0xff]
        %v490 = vld [vmem:[%s433 + $0x8] sm:$0xff]
        %v491 = vld [vmem:[%s433 + $0x10] sm:$0xff]
        %v492 = vld [vmem:[%s433 + $0x18] sm:$0xff]
        %v493 = vld [vmem:[%s433 + $0x20] sm:$0xff]
        %v494 = vld [vmem:[%s433 + $0x28] sm:$0xff]
        %v495 = vld [vmem:[%s433 + $0x30] sm:$0xff]
        %v496 = vld [vmem:[%s433 + $0x38] sm:$0xff]
        %v505 = vunpack.c.l.b16 %v489
        %v506 = vunpack.c.h.b16 %v489
        %v507 = vunpack.c.l.b16 %v490
        %v508 = vunpack.c.h.b16 %v490
        %v509 = vunpack.c.l.b16 %v491
        %v510 = vunpack.c.h.b16 %v491
        %v511 = vunpack.c.l.b16 %v492
        %v512 = vunpack.c.h.b16 %v492
        %v513 = vunpack.c.l.b16 %v493
        %v514 = vunpack.c.h.b16 %v493
        %v515 = vunpack.c.l.b16 %v494
        %v516 = vunpack.c.h.b16 %v494
        %v517 = vunpack.c.l.b16 %v495
        %v518 = vunpack.c.h.b16 %v495
        %v519 = vunpack.c.l.b16 %v496
        %v520 = vunpack.c.h.b16 %v496
        %v521 = vpack.c.b16 %v507, %v505
        %v522 = vpack.c.b16 %v508, %v506
        %v523 = vpack.c.b16 %v511, %v509
        %v524 = vpack.c.b16 %v512, %v510
        %v525 = vpack.c.b16 %v515, %v513
        %v526 = vpack.c.b16 %v516, %v514
        %v527 = vpack.c.b16 %v519, %v517
        %v528 = vpack.c.b16 %v520, %v518
        %v538 = vsel %vm464, %v488, 0
        %540 = vmatprep.subr.bf16.mxu0 %v522
        %541 = vmatpush1.bf16.msra.mxu0 %v521
        %542 = vmatprep.subr.bf16.mxu0 %v524
        %543 = vmatpush1.bf16.msra.mxu0 %v523
        %544 = vmatprep.subr.bf16.mxu0 %v526
        %545 = vmatpush1.bf16.msra.mxu0 %v525
        %546 = vmatprep.subr.bf16.mxu0 %v528
        %547 = vmatpush1.bf16.msra.mxu0 %v527
        %548 = vmatprep.subr.bf16.mxu0 0
        %549 = vmatpush1.bf16.msra.mxu0 0
        %550 = vmatprep.subr.bf16.mxu0 0
        %551 = vmatpush1.bf16.msra.mxu0 0
        %552 = vmatprep.subr.bf16.mxu0 0
        %553 = vmatpush1.bf16.msra.mxu0 0
        %554 = vmatprep.subr.bf16.mxu0 0
        %555 = vmatpush1.bf16.msra.mxu0 0
        %556 = vmatprep.subr.bf16.mxu0 0
        %557 = vmatpush1.bf16.msra.mxu0 0
        %558 = vmatprep.subr.bf16.mxu0 0
        %559 = vmatpush1.bf16.msra.mxu0 0
        %560 = vmatprep.subr.bf16.mxu0 0
        %561 = vmatpush1.bf16.msra.mxu0 0
        %562 = vmatprep.subr.bf16.mxu0 0
        %563 = vmatpush1.bf16.msra.mxu0 0
        %564 = vmatprep.subr.bf16.mxu0 0
        %565 = vmatpush1.bf16.msra.mxu0 0
        %566 = vmatprep.subr.bf16.mxu0 0
        %567 = vmatpush1.bf16.msra.mxu0 0
        %568 = vmatprep.subr.bf16.mxu0 0
        %569 = vmatpush1.bf16.msra.mxu0 0
        %570 = vmatprep.subr.bf16.mxu0 0
        %571 = vmatpush1.bf16.msra.mxu0 0
        %572 = vmatprep.mubr.bf16.mxu0 0
        %573 = vmatmul.mubr.bf16.gmra.mrb[0].mxu0 %v538
        %v574 = vpop.f32.mrb[0].mxu0
        %v575 = vadd.f32 0.0, %v574
        %v576 = vpop.f32.mrb[0].mxu0
        %v577 = vadd.f32 0.0, %v576
        %v578 = vpop.f32.mrb[0].mxu0
        %v579 = vadd.f32 0.0, %v578
        %v580 = vpop.f32.mrb[0].mxu0
        %v581 = vadd.f32 0.0, %v580
        %582 = vdwg.mxu0
        %v583 = vld [vmem:[%s1] sm:$0xff]
        %v584 = vld [vmem:[%s1 + $0x8] sm:$0xff]
        %v585 = vld [vmem:[%s2] sm:$0xff]
        %v586 = vld [vmem:[%s2 + $0x8] sm:$0xff]
        %v587 = vmul.f32 %v575, %v583
        %v588 = vmul.f32 %v579, %v584
        %591 = vrot.lane.b32.xlu0 %v585, 8
        %v592 = vpop.permute.xlu0 %591
        %593 = vrot.lane.b32.xlu0 %v586, 8
        %v594 = vpop.permute.xlu0 %593
        %v597 = vmul.f32 %v575, %v592
        %v598 = vmul.f32 %v579, %v594
        %601 = vrot.lane.b32.xlu0 %v597, 120
        %v602 = vpop.permute.xlu0 %601
        %603 = vrot.lane.b32.xlu0 %v598, 120
        %v604 = vpop.permute.xlu0 %603
        %v607 = vsub.f32 %v587, %v602
        %v608 = vsub.f32 %v588, %v604
        %v609 = vmul.f32 %v575, %v585
        %v610 = vmul.f32 %v579, %v586
        %613 = vrot.lane.b32.xlu0 %v583, 8
        %v614 = vpop.permute.xlu0 %613
        %615 = vrot.lane.b32.xlu0 %v584, 8
        %v616 = vpop.permute.xlu0 %615
        %v619 = vmul.f32 %v575, %v614
        %v620 = vmul.f32 %v579, %v616
        %623 = vrot.lane.b32.xlu0 %v619, 120
        %v624 = vpop.permute.xlu0 %623
        %625 = vrot.lane.b32.xlu0 %v620, 120
        %v626 = vpop.permute.xlu0 %625
        %v629 = vadd.f32 %v609, %v624
        %v630 = vadd.f32 %v610, %v626
        %633 = vrot.lane.b32.xlu0 %v629, 8
        %v634 = vpop.permute.xlu0 %633
        %635 = vrot.lane.b32.xlu0 %v630, 8
        %v636 = vpop.permute.xlu0 %635
        %vm639 = vcmask 64512
        %v640 = vsel %vm639, %v607, %v634
        %v641 = vsel %vm639, %v608, %v636
        %642 = vrot.lane.b32.xlu0 %v583, 16
        %v643 = vpop.permute.xlu0 %642
        %644 = vrot.lane.b32.xlu0 %v584, 16
        %v645 = vpop.permute.xlu0 %644
        %v648 = vmul.f32 %v575, %v643
        %v649 = vmul.f32 %v579, %v645
        %650 = vrot.lane.b32.xlu0 %v585, 24
        %v651 = vpop.permute.xlu0 %650
        %652 = vrot.lane.b32.xlu0 %v586, 24
        %v653 = vpop.permute.xlu0 %652
        %v656 = vmul.f32 %v575, %v651
        %v657 = vmul.f32 %v579, %v653
        %660 = vrot.lane.b32.xlu0 %v656, 120
        %v661 = vpop.permute.xlu0 %660
        %662 = vrot.lane.b32.xlu0 %v657, 120
        %v663 = vpop.permute.xlu0 %662
        %v666 = vsub.f32 %v648, %v661
        %v667 = vsub.f32 %v649, %v663
        %668 = vrot.lane.b32.xlu0 %v585, 16
        %v669 = vpop.permute.xlu0 %668
        %670 = vrot.lane.b32.xlu0 %v586, 16
        %v671 = vpop.permute.xlu0 %670
        %v674 = vmul.f32 %v575, %v669
        %v675 = vmul.f32 %v579, %v671
        %676 = vrot.lane.b32.xlu0 %v583, 24
        %v677 = vpop.permute.xlu0 %676
        %678 = vrot.lane.b32.xlu0 %v584, 24
        %v679 = vpop.permute.xlu0 %678
        %v682 = vmul.f32 %v575, %v677
        %v683 = vmul.f32 %v579, %v679
        %686 = vrot.lane.b32.xlu0 %v682, 120
        %v687 = vpop.permute.xlu0 %686
        %688 = vrot.lane.b32.xlu0 %v683, 120
        %v689 = vpop.permute.xlu0 %688
        %v692 = vadd.f32 %v674, %v687
        %v693 = vadd.f32 %v675, %v689
        %696 = vrot.lane.b32.xlu0 %v666, 112
        %v697 = vpop.permute.xlu0 %696
        %698 = vrot.lane.b32.xlu0 %v667, 112
        %v699 = vpop.permute.xlu0 %698
        %704 = vrot.lane.b32.xlu0 %v692, 120
        %v705 = vpop.permute.xlu0 %704
        %706 = vrot.lane.b32.xlu0 %v693, 120
        %v707 = vpop.permute.xlu0 %706
        %v710 = vsel %vm639, %v697, %v705
        %v711 = vsel %vm639, %v699, %v707
        %712 = vrot.lane.b32.xlu0 %v583, 32
        %v713 = vpop.permute.xlu0 %712
        %714 = vrot.lane.b32.xlu0 %v584, 32
        %v715 = vpop.permute.xlu0 %714
        %v718 = vmul.f32 %v575, %v713
        %v719 = vmul.f32 %v579, %v715
        %720 = vrot.lane.b32.xlu0 %v585, 40
        %v721 = vpop.permute.xlu0 %720
        %722 = vrot.lane.b32.xlu0 %v586, 40
        %v723 = vpop.permute.xlu0 %722
        %v726 = vmul.f32 %v575, %v721
        %v727 = vmul.f32 %v579, %v723
        %730 = vrot.lane.b32.xlu0 %v726, 120
        %v731 = vpop.permute.xlu0 %730
        %732 = vrot.lane.b32.xlu0 %v727, 120
        %v733 = vpop.permute.xlu0 %732
        %v736 = vsub.f32 %v718, %v731
        %v737 = vsub.f32 %v719, %v733
        %738 = vrot.lane.b32.xlu0 %v585, 32
        %v739 = vpop.permute.xlu0 %738
        %740 = vrot.lane.b32.xlu0 %v586, 32
        %v741 = vpop.permute.xlu0 %740
        %v744 = vmul.f32 %v575, %v739
        %v745 = vmul.f32 %v579, %v741
        %746 = vrot.lane.b32.xlu0 %v583, 40
        %v747 = vpop.permute.xlu0 %746
        %748 = vrot.lane.b32.xlu0 %v584, 40
        %v749 = vpop.permute.xlu0 %748
        %v752 = vmul.f32 %v575, %v747
        %v753 = vmul.f32 %v579, %v749
        %756 = vrot.lane.b32.xlu0 %v752, 120
        %v757 = vpop.permute.xlu0 %756
        %758 = vrot.lane.b32.xlu0 %v753, 120
        %v759 = vpop.permute.xlu0 %758
        %v762 = vadd.f32 %v744, %v757
        %v763 = vadd.f32 %v745, %v759
        %766 = vrot.lane.b32.xlu0 %v736, 96
        %v767 = vpop.permute.xlu0 %766
        %768 = vrot.lane.b32.xlu0 %v737, 96
        %v769 = vpop.permute.xlu0 %768
        %774 = vrot.lane.b32.xlu0 %v762, 104
        %v775 = vpop.permute.xlu0 %774
        %776 = vrot.lane.b32.xlu0 %v763, 104
        %v777 = vpop.permute.xlu0 %776
        %v780 = vsel %vm639, %v767, %v775
        %v781 = vsel %vm639, %v769, %v777
        %782 = vrot.lane.b32.xlu0 %v583, 48
        %v783 = vpop.permute.xlu0 %782
        %784 = vrot.lane.b32.xlu0 %v584, 48
        %v785 = vpop.permute.xlu0 %784
        %v788 = vmul.f32 %v575, %v783
        %v789 = vmul.f32 %v579, %v785
        %790 = vrot.lane.b32.xlu0 %v585, 56
        %v791 = vpop.permute.xlu0 %790
        %792 = vrot.lane.b32.xlu0 %v586, 56
        %v793 = vpop.permute.xlu0 %792
        %v796 = vmul.f32 %v575, %v791
        %v797 = vmul.f32 %v579, %v793
        %800 = vrot.lane.b32.xlu0 %v796, 120
        %v801 = vpop.permute.xlu0 %800
        %802 = vrot.lane.b32.xlu0 %v797, 120
        %v803 = vpop.permute.xlu0 %802
        %v806 = vsub.f32 %v788, %v801
        %v807 = vsub.f32 %v789, %v803
        %808 = vrot.lane.b32.xlu0 %v585, 48
        %v809 = vpop.permute.xlu0 %808
        %810 = vrot.lane.b32.xlu0 %v586, 48
        %v811 = vpop.permute.xlu0 %810
        %v814 = vmul.f32 %v575, %v809
        %v815 = vmul.f32 %v579, %v811
        %816 = vrot.lane.b32.xlu0 %v583, 56
        %v817 = vpop.permute.xlu0 %816
        %818 = vrot.lane.b32.xlu0 %v584, 56
        %v819 = vpop.permute.xlu0 %818
        %v822 = vmul.f32 %v575, %v817
        %v823 = vmul.f32 %v579, %v819
        %826 = vrot.lane.b32.xlu0 %v822, 120
        %v827 = vpop.permute.xlu0 %826
        %828 = vrot.lane.b32.xlu0 %v823, 120
        %v829 = vpop.permute.xlu0 %828
        %v832 = vadd.f32 %v814, %v827
        %v833 = vadd.f32 %v815, %v829
        %836 = vrot.lane.b32.xlu0 %v806, 80
        %v837 = vpop.permute.xlu0 %836
        %838 = vrot.lane.b32.xlu0 %v807, 80
        %v839 = vpop.permute.xlu0 %838
        %844 = vrot.lane.b32.xlu0 %v832, 88
        %v845 = vpop.permute.xlu0 %844
        %846 = vrot.lane.b32.xlu0 %v833, 88
        %v847 = vpop.permute.xlu0 %846
        %v850 = vsel %vm639, %v837, %v845
        %v851 = vsel %vm639, %v839, %v847
        %854 = vrot.lane.b32.xlu0 %v710, 16
        %v855 = vpop.permute.xlu0 %854
        %856 = vrot.lane.b32.xlu0 %v711, 16
        %v857 = vpop.permute.xlu0 %856
        %862 = vrot.lane.b32.xlu0 %v780, 32
        %v863 = vpop.permute.xlu0 %862
        %864 = vrot.lane.b32.xlu0 %v781, 32
        %v865 = vpop.permute.xlu0 %864
        %870 = vrot.lane.b32.xlu0 %v850, 48
        %v871 = vpop.permute.xlu0 %870
        %872 = vrot.lane.b32.xlu0 %v851, 48
        %v873 = vpop.permute.xlu0 %872
        %vm876 = vcmask 130048
        %v877 = vsel %vm876, %v640, %v855
        %v878 = vsel %vm876, %v641, %v857
        %vm879 = vcmask 261120
        %v880 = vsel %vm879, %v877, %v863
        %v881 = vsel %vm879, %v878, %v865
        %vm882 = vcmask 392192
        %v883 = vsel %vm882, %v880, %v871
        %v884 = vsel %vm882, %v881, %v873
        %v885 = vmul.f32 %v883, 0.25
        %v886 = vmul.f32 %v884, 0.25
        %887 = vrot.lane.b32.xlu0 %v583, 64
        %v888 = vpop.permute.xlu0 %887
        %889 = vrot.lane.b32.xlu0 %v584, 64
        %v890 = vpop.permute.xlu0 %889
        %v893 = vmul.f32 %v575, %v888
        %v894 = vmul.f32 %v579, %v890
        %895 = vrot.lane.b32.xlu0 %v585, 72
        %v896 = vpop.permute.xlu0 %895
        %897 = vrot.lane.b32.xlu0 %v586, 72
        %v898 = vpop.permute.xlu0 %897
        %v901 = vmul.f32 %v575, %v896
        %v902 = vmul.f32 %v579, %v898
        %905 = vrot.lane.b32.xlu0 %v901, 120
        %v906 = vpop.permute.xlu0 %905
        %907 = vrot.lane.b32.xlu0 %v902, 120
        %v908 = vpop.permute.xlu0 %907
        %v911 = vsub.f32 %v893, %v906
        %v912 = vsub.f32 %v894, %v908
        %913 = vrot.lane.b32.xlu0 %v585, 64
        %v914 = vpop.permute.xlu0 %913
        %915 = vrot.lane.b32.xlu0 %v586, 64
        %v916 = vpop.permute.xlu0 %915
        %v919 = vmul.f32 %v575, %v914
        %v920 = vmul.f32 %v579, %v916
        %921 = vrot.lane.b32.xlu0 %v583, 72
        %v922 = vpop.permute.xlu0 %921
        %923 = vrot.lane.b32.xlu0 %v584, 72
        %v924 = vpop.permute.xlu0 %923
        %v927 = vmul.f32 %v575, %v922
        %v928 = vmul.f32 %v579, %v924
        %931 = vrot.lane.b32.xlu0 %v927, 120
        %v932 = vpop.permute.xlu0 %931
        %933 = vrot.lane.b32.xlu0 %v928, 120
        %v934 = vpop.permute.xlu0 %933
        %v937 = vadd.f32 %v919, %v932
        %v938 = vadd.f32 %v920, %v934
        %941 = vrot.lane.b32.xlu0 %v911, 64
        %v942 = vpop.permute.xlu0 %941
        %943 = vrot.lane.b32.xlu0 %v912, 64
        %v944 = vpop.permute.xlu0 %943
        %949 = vrot.lane.b32.xlu0 %v937, 72
        %v950 = vpop.permute.xlu0 %949
        %951 = vrot.lane.b32.xlu0 %v938, 72
        %v952 = vpop.permute.xlu0 %951
        %v955 = vsel %vm639, %v942, %v950
        %v956 = vsel %vm639, %v944, %v952
        %957 = vrot.lane.b32.xlu0 %v583, 80
        %v958 = vpop.permute.xlu0 %957
        %959 = vrot.lane.b32.xlu0 %v584, 80
        %v960 = vpop.permute.xlu0 %959
        %v963 = vmul.f32 %v575, %v958
        %v964 = vmul.f32 %v579, %v960
        %965 = vrot.lane.b32.xlu0 %v585, 88
        %v966 = vpop.permute.xlu0 %965
        %967 = vrot.lane.b32.xlu0 %v586, 88
        %v968 = vpop.permute.xlu0 %967
        %v971 = vmul.f32 %v575, %v966
        %v972 = vmul.f32 %v579, %v968
        %975 = vrot.lane.b32.xlu0 %v971, 120
        %v976 = vpop.permute.xlu0 %975
        %977 = vrot.lane.b32.xlu0 %v972, 120
        %v978 = vpop.permute.xlu0 %977
        %v981 = vsub.f32 %v963, %v976
        %v982 = vsub.f32 %v964, %v978
        %983 = vrot.lane.b32.xlu0 %v585, 80
        %v984 = vpop.permute.xlu0 %983
        %985 = vrot.lane.b32.xlu0 %v586, 80
        %v986 = vpop.permute.xlu0 %985
        %v989 = vmul.f32 %v575, %v984
        %v990 = vmul.f32 %v579, %v986
        %991 = vrot.lane.b32.xlu0 %v583, 88
        %v992 = vpop.permute.xlu0 %991
        %993 = vrot.lane.b32.xlu0 %v584, 88
        %v994 = vpop.permute.xlu0 %993
        %v997 = vmul.f32 %v575, %v992
        %v998 = vmul.f32 %v579, %v994
        %1001 = vrot.lane.b32.xlu0 %v997, 120
        %v1002 = vpop.permute.xlu0 %1001
        %1003 = vrot.lane.b32.xlu0 %v998, 120
        %v1004 = vpop.permute.xlu0 %1003
        %v1007 = vadd.f32 %v989, %v1002
        %v1008 = vadd.f32 %v990, %v1004
        %1011 = vrot.lane.b32.xlu0 %v981, 48
        %v1012 = vpop.permute.xlu0 %1011
        %1013 = vrot.lane.b32.xlu0 %v982, 48
        %v1014 = vpop.permute.xlu0 %1013
        %1019 = vrot.lane.b32.xlu0 %v1007, 56
        %v1020 = vpop.permute.xlu0 %1019
        %1021 = vrot.lane.b32.xlu0 %v1008, 56
        %v1022 = vpop.permute.xlu0 %1021
        %v1025 = vsel %vm639, %v1012, %v1020
        %v1026 = vsel %vm639, %v1014, %v1022
        %1027 = vrot.lane.b32.xlu0 %v583, 96
        %v1028 = vpop.permute.xlu0 %1027
        %1029 = vrot.lane.b32.xlu0 %v584, 96
        %v1030 = vpop.permute.xlu0 %1029
        %v1033 = vmul.f32 %v575, %v1028
        %v1034 = vmul.f32 %v579, %v1030
        %1035 = vrot.lane.b32.xlu0 %v585, 104
        %v1036 = vpop.permute.xlu0 %1035
        %1037 = vrot.lane.b32.xlu0 %v586, 104
        %v1038 = vpop.permute.xlu0 %1037
        %v1041 = vmul.f32 %v575, %v1036
        %v1042 = vmul.f32 %v579, %v1038
        %1045 = vrot.lane.b32.xlu0 %v1041, 120
        %v1046 = vpop.permute.xlu0 %1045
        %1047 = vrot.lane.b32.xlu0 %v1042, 120
        %v1048 = vpop.permute.xlu0 %1047
        %v1051 = vsub.f32 %v1033, %v1046
        %v1052 = vsub.f32 %v1034, %v1048
        %1053 = vrot.lane.b32.xlu0 %v585, 96
        %v1054 = vpop.permute.xlu0 %1053
        %1055 = vrot.lane.b32.xlu0 %v586, 96
        %v1056 = vpop.permute.xlu0 %1055
        %v1059 = vmul.f32 %v575, %v1054
        %v1060 = vmul.f32 %v579, %v1056
        %1061 = vrot.lane.b32.xlu0 %v583, 104
        %v1062 = vpop.permute.xlu0 %1061
        %1063 = vrot.lane.b32.xlu0 %v584, 104
        %v1064 = vpop.permute.xlu0 %1063
        %v1067 = vmul.f32 %v575, %v1062
        %v1068 = vmul.f32 %v579, %v1064
        %1071 = vrot.lane.b32.xlu0 %v1067, 120
        %v1072 = vpop.permute.xlu0 %1071
        %1073 = vrot.lane.b32.xlu0 %v1068, 120
        %v1074 = vpop.permute.xlu0 %1073
        %v1077 = vadd.f32 %v1059, %v1072
        %v1078 = vadd.f32 %v1060, %v1074
        %1081 = vrot.lane.b32.xlu0 %v1051, 32
        %v1082 = vpop.permute.xlu0 %1081
        %1083 = vrot.lane.b32.xlu0 %v1052, 32
        %v1084 = vpop.permute.xlu0 %1083
        %1089 = vrot.lane.b32.xlu0 %v1077, 40
        %v1090 = vpop.permute.xlu0 %1089
        %1091 = vrot.lane.b32.xlu0 %v1078, 40
        %v1092 = vpop.permute.xlu0 %1091
        %v1095 = vsel %vm639, %v1082, %v1090
        %v1096 = vsel %vm639, %v1084, %v1092
        %1097 = vrot.lane.b32.xlu0 %v583, 112
        %v1098 = vpop.permute.xlu0 %1097
        %1099 = vrot.lane.b32.xlu0 %v584, 112
        %v1100 = vpop.permute.xlu0 %1099
        %v1103 = vmul.f32 %v575, %v1098
        %v1104 = vmul.f32 %v579, %v1100
        %1105 = vrot.lane.b32.xlu0 %v585, 120
        %v1106 = vpop.permute.xlu0 %1105
        %1107 = vrot.lane.b32.xlu0 %v586, 120
        %v1108 = vpop.permute.xlu0 %1107
        %v1111 = vmul.f32 %v575, %v1106
        %v1112 = vmul.f32 %v579, %v1108
        %1115 = vrot.lane.b32.xlu0 %v1111, 120
        %v1116 = vpop.permute.xlu0 %1115
        %1117 = vrot.lane.b32.xlu0 %v1112, 120
        %v1118 = vpop.permute.xlu0 %1117
        %v1121 = vsub.f32 %v1103, %v1116
        %v1122 = vsub.f32 %v1104, %v1118
        %1123 = vrot.lane.b32.xlu0 %v585, 112
        %v1124 = vpop.permute.xlu0 %1123
        %1125 = vrot.lane.b32.xlu0 %v586, 112
        %v1126 = vpop.permute.xlu0 %1125
        %v1129 = vmul.f32 %v575, %v1124
        %v1130 = vmul.f32 %v579, %v1126
        %1131 = vrot.lane.b32.xlu0 %v583, 120
        %v1132 = vpop.permute.xlu0 %1131
        %1133 = vrot.lane.b32.xlu0 %v584, 120
        %v1134 = vpop.permute.xlu0 %1133
        %v1137 = vmul.f32 %v575, %v1132
        %v1138 = vmul.f32 %v579, %v1134
        %1141 = vrot.lane.b32.xlu0 %v1137, 120
        %v1142 = vpop.permute.xlu0 %1141
        %1143 = vrot.lane.b32.xlu0 %v1138, 120
        %v1144 = vpop.permute.xlu0 %1143
        %v1147 = vadd.f32 %v1129, %v1142
        %v1148 = vadd.f32 %v1130, %v1144
        %1151 = vrot.lane.b32.xlu0 %v1121, 16
        %v1152 = vpop.permute.xlu0 %1151
        %1153 = vrot.lane.b32.xlu0 %v1122, 16
        %v1154 = vpop.permute.xlu0 %1153
        %1159 = vrot.lane.b32.xlu0 %v1147, 24
        %v1160 = vpop.permute.xlu0 %1159
        %1161 = vrot.lane.b32.xlu0 %v1148, 24
        %v1162 = vpop.permute.xlu0 %1161
        %v1165 = vsel %vm639, %v1152, %v1160
        %v1166 = vsel %vm639, %v1154, %v1162
        %1169 = vrot.lane.b32.xlu0 %v1025, 16
        %v1170 = vpop.permute.xlu0 %1169
        %1171 = vrot.lane.b32.xlu0 %v1026, 16
        %v1172 = vpop.permute.xlu0 %1171
        %1177 = vrot.lane.b32.xlu0 %v1095, 32
        %v1178 = vpop.permute.xlu0 %1177
        %1179 = vrot.lane.b32.xlu0 %v1096, 32
        %v1180 = vpop.permute.xlu0 %1179
        %1185 = vrot.lane.b32.xlu0 %v1165, 48
        %v1186 = vpop.permute.xlu0 %1185
        %1187 = vrot.lane.b32.xlu0 %v1166, 48
        %v1188 = vpop.permute.xlu0 %1187
        %v1191 = vsel %vm876, %v955, %v1170
        %v1192 = vsel %vm876, %v956, %v1172
        %v1193 = vsel %vm879, %v1191, %v1178
        %v1194 = vsel %vm879, %v1192, %v1180
        %v1195 = vsel %vm882, %v1193, %v1186
        %v1196 = vsel %vm882, %v1194, %v1188
        %v1197 = vlaneseq
        %v1198 = vshrl.u32 %v1197, 7
        %v1199 = vlaneseq
        %v1200 = vand.u32 %v1199, 127
        %vm1201 = vcmp.le.s32.totalorder %v1200, %v1198
        %v1202 = vsel %vm1201, 0.0, -inf
        %v1203 = vpack.c.bf16 %v885, %v885
        %v1204 = vpack.c.bf16 %v1195, %v1195
        %v1205 = vpack.c.bf16 %v577, %v577
        %v1207 = vsel %vm876, %v1203, 0
        %v1210 = vsel %vm876, %v1204, 0
        %1212 = vmatprep.subr.bf16.mxu0 0
        %1213 = vmatpush1.bf16.xpose.msra.mxu0 %v1210
        %1214 = vmatprep.subr.bf16.mxu0 0
        %1215 = vmatpush1.bf16.xpose.msra.mxu0 0
        %1216 = vmatprep.subr.bf16.mxu0 0
        %1217 = vmatpush1.bf16.xpose.msra.mxu0 0
        %1218 = vmatprep.subr.bf16.mxu0 0
        %1219 = vmatpush1.bf16.xpose.msra.mxu0 0
        %1220 = vmatprep.subr.bf16.mxu0 0
        %1221 = vmatpush1.bf16.xpose.msra.mxu0 0
        %1222 = vmatprep.subr.bf16.mxu0 0
        %1223 = vmatpush1.bf16.xpose.msra.mxu0 0
        %1224 = vmatprep.subr.bf16.mxu0 0
        %1225 = vmatpush1.bf16.xpose.msra.mxu0 0
        %1226 = vmatprep.subr.bf16.mxu0 0
        %1227 = vmatpush1.bf16.xpose.msra.mxu0 0
        %1228 = vmatprep.subr.bf16.mxu0 0
        %1229 = vmatpush1.bf16.xpose.msra.mxu0 0
        %1230 = vmatprep.subr.bf16.mxu0 0
        %1231 = vmatpush1.bf16.xpose.msra.mxu0 0
        %1232 = vmatprep.subr.bf16.mxu0 0
        %1233 = vmatpush1.bf16.xpose.msra.mxu0 0
        %1234 = vmatprep.subr.bf16.mxu0 0
        %1235 = vmatpush1.bf16.xpose.msra.mxu0 0
        %1236 = vmatprep.subr.bf16.mxu0 0
        %1237 = vmatpush1.bf16.xpose.msra.mxu0 0
        %1238 = vmatprep.subr.bf16.mxu0 0
        %1239 = vmatpush1.bf16.xpose.msra.mxu0 0
        %1240 = vmatprep.subr.bf16.mxu0 0
        %1241 = vmatpush1.bf16.xpose.msra.mxu0 0
        %1242 = vmatprep.subr.bf16.mxu0 0
        %1243 = vmatpush1.bf16.xpose.msra.mxu0 0
        %1244 = vmatprep.mubr.bf16.mxu0 0
        %1245 = vmatmul.mubr.bf16.gmra.mrb[0].mxu0 %v1207
        %v1246 = vpop.f32.mrb[0].mxu0
        %v1247 = vadd.f32 %v1202, %v1246
        %v1248 = vpop.f32.mrb[0].mxu0
        %v1249 = vpop.f32.mrb[0].mxu0
        %v1250 = vpop.f32.mrb[0].mxu0
        %1251 = vdwg.mxu0
        %v1252 = vsel %vm639, %v1247, -inf
        %1253 = vmax.xlane.f32.xlu0 %v1252
        %v1254 = vpop.xlane.xlu0 %1253
        %v1255 = vsub.f32 %v1247, %v1254
        %v1256 = vmul.f32 %v1255, 1.442695
        %v1257 = vpow.pop %v1256
        %v1258 = vsel %vm639, %v1257, 0.0
        %1259 = vadd.xlane.f32.xlu0 %v1258
        %v1260 = vpop.xlane.xlu0 %1259
        %v1261 = vpack.c.bf16 %v1257, %v1257
        %v1263 = vsel %vm639, %v1261, 0
        %vm1265 = vcmask 1043456
        %v1267 = vsel %vm1265, %v1205, 0
        %1269 = vmatprep.subr.bf16.mxu0 0
        %1270 = vmatpush1.bf16.msra.mxu0 %v1267
        %1271 = vmatprep.subr.bf16.mxu0 0
        %1272 = vmatpush1.bf16.msra.mxu0 0
        %1273 = vmatprep.subr.bf16.mxu0 0
        %1274 = vmatpush1.bf16.msra.mxu0 0
        %1275 = vmatprep.subr.bf16.mxu0 0
        %1276 = vmatpush1.bf16.msra.mxu0 0
        %1277 = vmatprep.subr.bf16.mxu0 0
        %1278 = vmatpush1.bf16.msra.mxu0 0
        %1279 = vmatprep.subr.bf16.mxu0 0
        %1280 = vmatpush1.bf16.msra.mxu0 0
        %1281 = vmatprep.subr.bf16.mxu0 0
        %1282 = vmatpush1.bf16.msra.mxu0 0
        %1283 = vmatprep.subr.bf16.mxu0 0
        %1284 = vmatpush1.bf16.msra.mxu0 0
        %1285 = vmatprep.subr.bf16.mxu0 0
        %1286 = vmatpush1.bf16.msra.mxu0 0
        %1287 = vmatprep.subr.bf16.mxu0 0
        %1288 = vmatpush1.bf16.msra.mxu0 0
        %1289 = vmatprep.subr.bf16.mxu0 0
        %1290 = vmatpush1.bf16.msra.mxu0 0
        %1291 = vmatprep.subr.bf16.mxu0 0
        %1292 = vmatpush1.bf16.msra.mxu0 0
        %1293 = vmatprep.subr.bf16.mxu0 0
        %1294 = vmatpush1.bf16.msra.mxu0 0
        %1295 = vmatprep.subr.bf16.mxu0 0
        %1296 = vmatpush1.bf16.msra.mxu0 0
        %1297 = vmatprep.subr.bf16.mxu0 0
        %1298 = vmatpush1.bf16.msra.mxu0 0
        %1299 = vmatprep.subr.bf16.mxu0 0
        %1300 = vmatpush1.bf16.msra.mxu0 0
        %1301 = vmatprep.mubr.bf16.mxu0 0
        %1302 = vmatmul.mubr.bf16.gmra.mrb[0].mxu0 %v1263
        %v1303 = vpop.f32.mrb[0].mxu0
        %v1304 = vadd.f32 0.0, %v1303
        %v1305 = vpop.f32.mrb[0].mxu0
        %v1306 = vpop.f32.mrb[0].mxu0
        %v1307 = vpop.f32.mrb[0].mxu0
        %1308 = vdwg.mxu0
        %v1309 = vrcp.pop %v1260
        %v1310 = vmul.f32 %v1304, %v1309
        %1312 = vrot.lane.b32.xlu0 %v1203, 112
        %v1313 = vpop.permute.xlu0 %1312
        %1315 = vrot.lane.b32.xlu0 %v1204, 112
        %v1316 = vpop.permute.xlu0 %1315
        %v1318 = vsel %vm876, %v1313, 0
        %v1321 = vsel %vm876, %v1316, 0
        %1323 = vmatprep.subr.bf16.mxu0 0
        %1324 = vmatpush1.bf16.xpose.msra.mxu0 %v1321
        %1325 = vmatprep.subr.bf16.mxu0 0
        %1326 = vmatpush1.bf16.xpose.msra.mxu0 0
        %1327 = vmatprep.subr.bf16.mxu0 0
        %1328 = vmatpush1.bf16.xpose.msra.mxu0 0
        %1329 = vmatprep.subr.bf16.mxu0 0
        %1330 = vmatpush1.bf16.xpose.msra.mxu0 0
        %1331 = vmatprep.subr.bf16.mxu0 0
        %1332 = vmatpush1.bf16.xpose.msra.mxu0 0
        %1333 = vmatprep.subr.bf16.mxu0 0
        %1334 = vmatpush1.bf16.xpose.msra.mxu0 0
        %1335 = vmatprep.subr.bf16.mxu0 0
        %1336 = vmatpush1.bf16.xpose.msra.mxu0 0
        %1337 = vmatprep.subr.bf16.mxu0 0
        %1338 = vmatpush1.bf16.xpose.msra.mxu0 0
        %1339 = vmatprep.subr.bf16.mxu0 0
        %1340 = vmatpush1.bf16.xpose.msra.mxu0 0
        %1341 = vmatprep.subr.bf16.mxu0 0
        %1342 = vmatpush1.bf16.xpose.msra.mxu0 0
        %1343 = vmatprep.subr.bf16.mxu0 0
        %1344 = vmatpush1.bf16.xpose.msra.mxu0 0
        %1345 = vmatprep.subr.bf16.mxu0 0
        %1346 = vmatpush1.bf16.xpose.msra.mxu0 0
        %1347 = vmatprep.subr.bf16.mxu0 0
        %1348 = vmatpush1.bf16.xpose.msra.mxu0 0
        %1349 = vmatprep.subr.bf16.mxu0 0
        %1350 = vmatpush1.bf16.xpose.msra.mxu0 0
        %1351 = vmatprep.subr.bf16.mxu0 0
        %1352 = vmatpush1.bf16.xpose.msra.mxu0 0
        %1353 = vmatprep.subr.bf16.mxu0 0
        %1354 = vmatpush1.bf16.xpose.msra.mxu0 0
        %1355 = vmatprep.mubr.bf16.mxu0 0
        %1356 = vmatmul.mubr.bf16.gmra.mrb[0].mxu0 %v1318
        %v1357 = vpop.f32.mrb[0].mxu0
        %v1358 = vadd.f32 %v1202, %v1357
        %v1359 = vpop.f32.mrb[0].mxu0
        %v1360 = vpop.f32.mrb[0].mxu0
        %v1361 = vpop.f32.mrb[0].mxu0
        %1362 = vdwg.mxu0
        %v1363 = vsel %vm639, %v1358, -inf
        %1364 = vmax.xlane.f32.xlu0 %v1363
        %v1365 = vpop.xlane.xlu0 %1364
        %v1366 = vsub.f32 %v1358, %v1365
        %v1367 = vmul.f32 %v1366, 1.442695
        %v1368 = vpow.pop %v1367
        %v1369 = vsel %vm639, %v1368, 0.0
        %1370 = vadd.xlane.f32.xlu0 %v1369
        %v1371 = vpop.xlane.xlu0 %1370
        %v1372 = vpack.c.bf16 %v1368, %v1368
        %1374 = vrot.lane.b32.xlu0 %v1205, 112
        %v1375 = vpop.permute.xlu0 %1374
        %v1377 = vsel %vm639, %v1372, 0
        %v1380 = vsel %vm1265, %v1375, 0
        %1382 = vmatprep.subr.bf16.mxu0 0
        %1383 = vmatpush1.bf16.msra.mxu0 %v1380
        %1384 = vmatprep.subr.bf16.mxu0 0
        %1385 = vmatpush1.bf16.msra.mxu0 0
        %1386 = vmatprep.subr.bf16.mxu0 0
        %1387 = vmatpush1.bf16.msra.mxu0 0
        %1388 = vmatprep.subr.bf16.mxu0 0
        %1389 = vmatpush1.bf16.msra.mxu0 0
        %1390 = vmatprep.subr.bf16.mxu0 0
        %1391 = vmatpush1.bf16.msra.mxu0 0
        %1392 = vmatprep.subr.bf16.mxu0 0
        %1393 = vmatpush1.bf16.msra.mxu0 0
        %1394 = vmatprep.subr.bf16.mxu0 0
        %1395 = vmatpush1.bf16.msra.mxu0 0
        %1396 = vmatprep.subr.bf16.mxu0 0
        %1397 = vmatpush1.bf16.msra.mxu0 0
        %1398 = vmatprep.subr.bf16.mxu0 0
        %1399 = vmatpush1.bf16.msra.mxu0 0
        %1400 = vmatprep.subr.bf16.mxu0 0
        %1401 = vmatpush1.bf16.msra.mxu0 0
        %1402 = vmatprep.subr.bf16.mxu0 0
        %1403 = vmatpush1.bf16.msra.mxu0 0
        %1404 = vmatprep.subr.bf16.mxu0 0
        %1405 = vmatpush1.bf16.msra.mxu0 0
        %1406 = vmatprep.subr.bf16.mxu0 0
        %1407 = vmatpush1.bf16.msra.mxu0 0
        %1408 = vmatprep.subr.bf16.mxu0 0
        %1409 = vmatpush1.bf16.msra.mxu0 0
        %1410 = vmatprep.subr.bf16.mxu0 0
        %1411 = vmatpush1.bf16.msra.mxu0 0
        %1412 = vmatprep.subr.bf16.mxu0 0
        %1413 = vmatpush1.bf16.msra.mxu0 0
        %1414 = vmatprep.mubr.bf16.mxu0 0
        %1415 = vmatmul.mubr.bf16.gmra.mrb[0].mxu0 %v1377
        %v1416 = vpop.f32.mrb[0].mxu0
        %v1417 = vadd.f32 0.0, %v1416
        %v1418 = vpop.f32.mrb[0].mxu0
        %v1419 = vpop.f32.mrb[0].mxu0
        %v1420 = vpop.f32.mrb[0].mxu0
        %1421 = vdwg.mxu0
        %v1422 = vrcp.pop %v1371
        %v1423 = vmul.f32 %v1417, %v1422
        %1424 = vrot.lane.b32.xlu0 %v1203, 96
        %v1425 = vpop.permute.xlu0 %1424
        %1426 = vrot.lane.b32.xlu0 %v1204, 96
        %v1427 = vpop.permute.xlu0 %1426
        %v1429 = vsel %vm876, %v1425, 0
        %v1432 = vsel %vm876, %v1427, 0
        %1434 = vmatprep.subr.bf16.mxu0 0
        %1435 = vmatpush1.bf16.xpose.msra.mxu0 %v1432
        %1436 = vmatprep.subr.bf16.mxu0 0
        %1437 = vmatpush1.bf16.xpose.msra.mxu0 0
        %1438 = vmatprep.subr.bf16.mxu0 0
        %1439 = vmatpush1.bf16.xpose.msra.mxu0 0
        %1440 = vmatprep.subr.bf16.mxu0 0
        %1441 = vmatpush1.bf16.xpose.msra.mxu0 0
        %1442 = vmatprep.subr.bf16.mxu0 0
        %1443 = vmatpush1.bf16.xpose.msra.mxu0 0
        %1444 = vmatprep.subr.bf16.mxu0 0
        %1445 = vmatpush1.bf16.xpose.msra.mxu0 0
        %1446 = vmatprep.subr.bf16.mxu0 0
        %1447 = vmatpush1.bf16.xpose.msra.mxu0 0
        %1448 = vmatprep.subr.bf16.mxu0 0
        %1449 = vmatpush1.bf16.xpose.msra.mxu0 0
        %1450 = vmatprep.subr.bf16.mxu0 0
        %1451 = vmatpush1.bf16.xpose.msra.mxu0 0
        %1452 = vmatprep.subr.bf16.mxu0 0
        %1453 = vmatpush1.bf16.xpose.msra.mxu0 0
        %1454 = vmatprep.subr.bf16.mxu0 0
        %1455 = vmatpush1.bf16.xpose.msra.mxu0 0
        %1456 = vmatprep.subr.bf16.mxu0 0
        %1457 = vmatpush1.bf16.xpose.msra.mxu0 0
        %1458 = vmatprep.subr.bf16.mxu0 0
        %1459 = vmatpush1.bf16.xpose.msra.mxu0 0
        %1460 = vmatprep.subr.bf16.mxu0 0
        %1461 = vmatpush1.bf16.xpose.msra.mxu0 0
        %1462 = vmatprep.subr.bf16.mxu0 0
        %1463 = vmatpush1.bf16.xpose.msra.mxu0 0
        %1464 = vmatprep.subr.bf16.mxu0 0
        %1465 = vmatpush1.bf16.xpose.msra.mxu0 0
        %1466 = vmatprep.mubr.bf16.mxu0 0
        %1467 = vmatmul.mubr.bf16.gmra.mrb[0].mxu0 %v1429
        %v1468 = vpop.f32.mrb[0].mxu0
        %v1469 = vadd.f32 %v1202, %v1468
        %v1470 = vpop.f32.mrb[0].mxu0
        %v1471 = vpop.f32.mrb[0].mxu0
        %v1472 = vpop.f32.mrb[0].mxu0
        %1473 = vdwg.mxu0
        %v1474 = vsel %vm639, %v1469, -inf
        %1475 = vmax.xlane.f32.xlu0 %v1474
        %v1476 = vpop.xlane.xlu0 %1475
        %v1477 = vsub.f32 %v1469, %v1476
        %v1478 = vmul.f32 %v1477, 1.442695
        %v1479 = vpow.pop %v1478
        %v1480 = vsel %vm639, %v1479, 0.0
        %1481 = vadd.xlane.f32.xlu0 %v1480
        %v1482 = vpop.xlane.xlu0 %1481
        %v1483 = vpack.c.bf16 %v1479, %v1479
        %1484 = vrot.lane.b32.xlu0 %v1205, 96
        %v1485 = vpop.permute.xlu0 %1484
        %v1487 = vsel %vm639, %v1483, 0
        %v1490 = vsel %vm1265, %v1485, 0
        %1492 = vmatprep.subr.bf16.mxu0 0
        %1493 = vmatpush1.bf16.msra.mxu0 %v1490
        %1494 = vmatprep.subr.bf16.mxu0 0
        %1495 = vmatpush1.bf16.msra.mxu0 0
        %1496 = vmatprep.subr.bf16.mxu0 0
        %1497 = vmatpush1.bf16.msra.mxu0 0
        %1498 = vmatprep.subr.bf16.mxu0 0
        %1499 = vmatpush1.bf16.msra.mxu0 0
        %1500 = vmatprep.subr.bf16.mxu0 0
        %1501 = vmatpush1.bf16.msra.mxu0 0
        %1502 = vmatprep.subr.bf16.mxu0 0
        %1503 = vmatpush1.bf16.msra.mxu0 0
        %1504 = vmatprep.subr.bf16.mxu0 0
        %1505 = vmatpush1.bf16.msra.mxu0 0
        %1506 = vmatprep.subr.bf16.mxu0 0
        %1507 = vmatpush1.bf16.msra.mxu0 0
        %1508 = vmatprep.subr.bf16.mxu0 0
        %1509 = vmatpush1.bf16.msra.mxu0 0
        %1510 = vmatprep.subr.bf16.mxu0 0
        %1511 = vmatpush1.bf16.msra.mxu0 0
        %1512 = vmatprep.subr.bf16.mxu0 0
        %1513 = vmatpush1.bf16.msra.mxu0 0
        %1514 = vmatprep.subr.bf16.mxu0 0
        %1515 = vmatpush1.bf16.msra.mxu0 0
        %1516 = vmatprep.subr.bf16.mxu0 0
        %1517 = vmatpush1.bf16.msra.mxu0 0
        %1518 = vmatprep.subr.bf16.mxu0 0
        %1519 = vmatpush1.bf16.msra.mxu0 0
        %1520 = vmatprep.subr.bf16.mxu0 0
        %1521 = vmatpush1.bf16.msra.mxu0 0
        %1522 = vmatprep.subr.bf16.mxu0 0
        %1523 = vmatpush1.bf16.msra.mxu0 0
        %1524 = vmatprep.mubr.bf16.mxu0 0
        %1525 = vmatmul.mubr.bf16.gmra.mrb[0].mxu0 %v1487
        %v1526 = vpop.f32.mrb[0].mxu0
        %v1527 = vadd.f32 0.0, %v1526
        %v1528 = vpop.f32.mrb[0].mxu0
        %v1529 = vpop.f32.mrb[0].mxu0
        %v1530 = vpop.f32.mrb[0].mxu0
        %1531 = vdwg.mxu0
        %v1532 = vrcp.pop %v1482
        %v1533 = vmul.f32 %v1527, %v1532
        %1534 = vrot.lane.b32.xlu0 %v1203, 80
        %v1535 = vpop.permute.xlu0 %1534
        %1536 = vrot.lane.b32.xlu0 %v1204, 80
        %v1537 = vpop.permute.xlu0 %1536
        %v1539 = vsel %vm876, %v1535, 0
        %v1542 = vsel %vm876, %v1537, 0
        %1544 = vmatprep.subr.bf16.mxu0 0
        %1545 = vmatpush1.bf16.xpose.msra.mxu0 %v1542
        %1546 = vmatprep.subr.bf16.mxu0 0
        %1547 = vmatpush1.bf16.xpose.msra.mxu0 0
        %1548 = vmatprep.subr.bf16.mxu0 0
        %1549 = vmatpush1.bf16.xpose.msra.mxu0 0
        %1550 = vmatprep.subr.bf16.mxu0 0
        %1551 = vmatpush1.bf16.xpose.msra.mxu0 0
        %1552 = vmatprep.subr.bf16.mxu0 0
        %1553 = vmatpush1.bf16.xpose.msra.mxu0 0
        %1554 = vmatprep.subr.bf16.mxu0 0
        %1555 = vmatpush1.bf16.xpose.msra.mxu0 0
        %1556 = vmatprep.subr.bf16.mxu0 0
        %1557 = vmatpush1.bf16.xpose.msra.mxu0 0
        %1558 = vmatprep.subr.bf16.mxu0 0
        %1559 = vmatpush1.bf16.xpose.msra.mxu0 0
        %1560 = vmatprep.subr.bf16.mxu0 0
        %1561 = vmatpush1.bf16.xpose.msra.mxu0 0
        %1562 = vmatprep.subr.bf16.mxu0 0
        %1563 = vmatpush1.bf16.xpose.msra.mxu0 0
        %1564 = vmatprep.subr.bf16.mxu0 0
        %1565 = vmatpush1.bf16.xpose.msra.mxu0 0
        %1566 = vmatprep.subr.bf16.mxu0 0
        %1567 = vmatpush1.bf16.xpose.msra.mxu0 0
        %1568 = vmatprep.subr.bf16.mxu0 0
        %1569 = vmatpush1.bf16.xpose.msra.mxu0 0
        %1570 = vmatprep.subr.bf16.mxu0 0
        %1571 = vmatpush1.bf16.xpose.msra.mxu0 0
        %1572 = vmatprep.subr.bf16.mxu0 0
        %1573 = vmatpush1.bf16.xpose.msra.mxu0 0
        %1574 = vmatprep.subr.bf16.mxu0 0
        %1575 = vmatpush1.bf16.xpose.msra.mxu0 0
        %1576 = vmatprep.mubr.bf16.mxu0 0
        %1577 = vmatmul.mubr.bf16.gmra.mrb[0].mxu0 %v1539
        %v1578 = vpop.f32.mrb[0].mxu0
        %v1579 = vadd.f32 %v1202, %v1578
        %v1580 = vpop.f32.mrb[0].mxu0
        %v1581 = vpop.f32.mrb[0].mxu0
        %v1582 = vpop.f32.mrb[0].mxu0
        %1583 = vdwg.mxu0
        %v1584 = vsel %vm639, %v1579, -inf
        %1585 = vmax.xlane.f32.xlu0 %v1584
        %v1586 = vpop.xlane.xlu0 %1585
        %v1587 = vsub.f32 %v1579, %v1586
        %v1588 = vmul.f32 %v1587, 1.442695
        %v1589 = vpow.pop %v1588
        %v1590 = vsel %vm639, %v1589, 0.0
        %1591 = vadd.xlane.f32.xlu0 %v1590
        %v1592 = vpop.xlane.xlu0 %1591
        %v1593 = vpack.c.bf16 %v1589, %v1589
        %1594 = vrot.lane.b32.xlu0 %v1205, 80
        %v1595 = vpop.permute.xlu0 %1594
        %v1597 = vsel %vm639, %v1593, 0
        %v1600 = vsel %vm1265, %v1595, 0
        %1602 = vmatprep.subr.bf16.mxu0 0
        %1603 = vmatpush1.bf16.msra.mxu0 %v1600
        %1604 = vmatprep.subr.bf16.mxu0 0
        %1605 = vmatpush1.bf16.msra.mxu0 0
        %1606 = vmatprep.subr.bf16.mxu0 0
        %1607 = vmatpush1.bf16.msra.mxu0 0
        %1608 = vmatprep.subr.bf16.mxu0 0
        %1609 = vmatpush1.bf16.msra.mxu0 0
        %1610 = vmatprep.subr.bf16.mxu0 0
        %1611 = vmatpush1.bf16.msra.mxu0 0
        %1612 = vmatprep.subr.bf16.mxu0 0
        %1613 = vmatpush1.bf16.msra.mxu0 0
        %1614 = vmatprep.subr.bf16.mxu0 0
        %1615 = vmatpush1.bf16.msra.mxu0 0
        %1616 = vmatprep.subr.bf16.mxu0 0
        %1617 = vmatpush1.bf16.msra.mxu0 0
        %1618 = vmatprep.subr.bf16.mxu0 0
        %1619 = vmatpush1.bf16.msra.mxu0 0
        %1620 = vmatprep.subr.bf16.mxu0 0
        %1621 = vmatpush1.bf16.msra.mxu0 0
        %1622 = vmatprep.subr.bf16.mxu0 0
        %1623 = vmatpush1.bf16.msra.mxu0 0
        %1624 = vmatprep.subr.bf16.mxu0 0
        %1625 = vmatpush1.bf16.msra.mxu0 0
        %1626 = vmatprep.subr.bf16.mxu0 0
        %1627 = vmatpush1.bf16.msra.mxu0 0
        %1628 = vmatprep.subr.bf16.mxu0 0
        %1629 = vmatpush1.bf16.msra.mxu0 0
        %1630 = vmatprep.subr.bf16.mxu0 0
        %1631 = vmatpush1.bf16.msra.mxu0 0
        %1632 = vmatprep.subr.bf16.mxu0 0
        %1633 = vmatpush1.bf16.msra.mxu0 0
        %1634 = vmatprep.mubr.bf16.mxu0 0
        %1635 = vmatmul.mubr.bf16.gmra.mrb[0].mxu0 %v1597
        %v1636 = vpop.f32.mrb[0].mxu0
        %v1637 = vadd.f32 0.0, %v1636
        %v1638 = vpop.f32.mrb[0].mxu0
        %v1639 = vpop.f32.mrb[0].mxu0
        %v1640 = vpop.f32.mrb[0].mxu0
        %1641 = vdwg.mxu0
        %v1642 = vrcp.pop %v1592
        %v1643 = vmul.f32 %v1637, %v1642
        %1645 = vrot.lane.b32.xlu0 %v1423, 16
        %v1646 = vpop.permute.xlu0 %1645
        %1649 = vrot.lane.b32.xlu0 %v1533, 32
        %v1650 = vpop.permute.xlu0 %1649
        %1653 = vrot.lane.b32.xlu0 %v1643, 48
        %v1654 = vpop.permute.xlu0 %1653
        %v1656 = vsel %vm876, %v1310, %v1646
        %v1657 = vsel %vm879, %v1656, %v1650
        %v1658 = vsel %vm882, %v1657, %v1654
        %v1659 = vpack.c.bf16 %v886, %v886
        %v1660 = vpack.c.bf16 %v1196, %v1196
        %v1661 = vpack.c.bf16 %v581, %v581
        %v1663 = vsel %vm876, %v1659, 0
        %v1666 = vsel %vm876, %v1660, 0
        %1668 = vmatprep.subr.bf16.mxu0 0
        %1669 = vmatpush1.bf16.xpose.msra.mxu0 %v1666
        %1670 = vmatprep.subr.bf16.mxu0 0
        %1671 = vmatpush1.bf16.xpose.msra.mxu0 0
        %1672 = vmatprep.subr.bf16.mxu0 0
        %1673 = vmatpush1.bf16.xpose.msra.mxu0 0
        %1674 = vmatprep.subr.bf16.mxu0 0
        %1675 = vmatpush1.bf16.xpose.msra.mxu0 0
        %1676 = vmatprep.subr.bf16.mxu0 0
        %1677 = vmatpush1.bf16.xpose.msra.mxu0 0
        %1678 = vmatprep.subr.bf16.mxu0 0
        %1679 = vmatpush1.bf16.xpose.msra.mxu0 0
        %1680 = vmatprep.subr.bf16.mxu0 0
        %1681 = vmatpush1.bf16.xpose.msra.mxu0 0
        %1682 = vmatprep.subr.bf16.mxu0 0
        %1683 = vmatpush1.bf16.xpose.msra.mxu0 0
        %1684 = vmatprep.subr.bf16.mxu0 0
        %1685 = vmatpush1.bf16.xpose.msra.mxu0 0
        %1686 = vmatprep.subr.bf16.mxu0 0
        %1687 = vmatpush1.bf16.xpose.msra.mxu0 0
        %1688 = vmatprep.subr.bf16.mxu0 0
        %1689 = vmatpush1.bf16.xpose.msra.mxu0 0
        %1690 = vmatprep.subr.bf16.mxu0 0
        %1691 = vmatpush1.bf16.xpose.msra.mxu0 0
        %1692 = vmatprep.subr.bf16.mxu0 0
        %1693 = vmatpush1.bf16.xpose.msra.mxu0 0
        %1694 = vmatprep.subr.bf16.mxu0 0
        %1695 = vmatpush1.bf16.xpose.msra.mxu0 0
        %1696 = vmatprep.subr.bf16.mxu0 0
        %1697 = vmatpush1.bf16.xpose.msra.mxu0 0
        %1698 = vmatprep.subr.bf16.mxu0 0
        %1699 = vmatpush1.bf16.xpose.msra.mxu0 0
        %1700 = vmatprep.mubr.bf16.mxu0 0
        %1701 = vmatmul.mubr.bf16.gmra.mrb[0].mxu0 %v1663
        %v1702 = vpop.f32.mrb[0].mxu0
        %v1703 = vadd.f32 %v1202, %v1702
        %v1704 = vpop.f32.mrb[0].mxu0
        %v1705 = vpop.f32.mrb[0].mxu0
        %v1706 = vpop.f32.mrb[0].mxu0
        %1707 = vdwg.mxu0
        %v1708 = vsel %vm639, %v1703, -inf
        %1709 = vmax.xlane.f32.xlu0 %v1708
        %v1710 = vpop.xlane.xlu0 %1709
        %v1711 = vsub.f32 %v1703, %v1710
        %v1712 = vmul.f32 %v1711, 1.442695
        %v1713 = vpow.pop %v1712
        %v1714 = vsel %vm639, %v1713, 0.0
        %1715 = vadd.xlane.f32.xlu0 %v1714
        %v1716 = vpop.xlane.xlu0 %1715
        %v1717 = vpack.c.bf16 %v1713, %v1713
        %v1719 = vsel %vm639, %v1717, 0
        %v1722 = vsel %vm1265, %v1661, 0
        %1724 = vmatprep.subr.bf16.mxu0 0
        %1725 = vmatpush1.bf16.msra.mxu0 %v1722
        %1726 = vmatprep.subr.bf16.mxu0 0
        %1727 = vmatpush1.bf16.msra.mxu0 0
        %1728 = vmatprep.subr.bf16.mxu0 0
        %1729 = vmatpush1.bf16.msra.mxu0 0
        %1730 = vmatprep.subr.bf16.mxu0 0
        %1731 = vmatpush1.bf16.msra.mxu0 0
        %1732 = vmatprep.subr.bf16.mxu0 0
        %1733 = vmatpush1.bf16.msra.mxu0 0
        %1734 = vmatprep.subr.bf16.mxu0 0
        %1735 = vmatpush1.bf16.msra.mxu0 0
        %1736 = vmatprep.subr.bf16.mxu0 0
        %1737 = vmatpush1.bf16.msra.mxu0 0
        %1738 = vmatprep.subr.bf16.mxu0 0
        %1739 = vmatpush1.bf16.msra.mxu0 0
        %1740 = vmatprep.subr.bf16.mxu0 0
        %1741 = vmatpush1.bf16.msra.mxu0 0
        %1742 = vmatprep.subr.bf16.mxu0 0
        %1743 = vmatpush1.bf16.msra.mxu0 0
        %1744 = vmatprep.subr.bf16.mxu0 0
        %1745 = vmatpush1.bf16.msra.mxu0 0
        %1746 = vmatprep.subr.bf16.mxu0 0
        %1747 = vmatpush1.bf16.msra.mxu0 0
        %1748 = vmatprep.subr.bf16.mxu0 0
        %1749 = vmatpush1.bf16.msra.mxu0 0
        %1750 = vmatprep.subr.bf16.mxu0 0
        %1751 = vmatpush1.bf16.msra.mxu0 0
        %1752 = vmatprep.subr.bf16.mxu0 0
        %1753 = vmatpush1.bf16.msra.mxu0 0
        %1754 = vmatprep.subr.bf16.mxu0 0
        %1755 = vmatpush1.bf16.msra.mxu0 0
        %1756 = vmatprep.mubr.bf16.mxu0 0
        %1757 = vmatmul.mubr.bf16.gmra.mrb[0].mxu0 %v1719
        %v1758 = vpop.f32.mrb[0].mxu0
        %v1759 = vadd.f32 0.0, %v1758
        %v1760 = vpop.f32.mrb[0].mxu0
        %v1761 = vpop.f32.mrb[0].mxu0
        %v1762 = vpop.f32.mrb[0].mxu0
        %1763 = vdwg.mxu0
        %v1764 = vrcp.pop %v1716
        %v1765 = vmul.f32 %v1759, %v1764
        %1767 = vrot.lane.b32.xlu0 %v1659, 112
        %v1768 = vpop.permute.xlu0 %1767
        %1770 = vrot.lane.b32.xlu0 %v1660, 112
        %v1771 = vpop.permute.xlu0 %1770
        %v1773 = vsel %vm876, %v1768, 0
        %v1776 = vsel %vm876, %v1771, 0
        %1778 = vmatprep.subr.bf16.mxu0 0
        %1779 = vmatpush1.bf16.xpose.msra.mxu0 %v1776
        %1780 = vmatprep.subr.bf16.mxu0 0
        %1781 = vmatpush1.bf16.xpose.msra.mxu0 0
        %1782 = vmatprep.subr.bf16.mxu0 0
        %1783 = vmatpush1.bf16.xpose.msra.mxu0 0
        %1784 = vmatprep.subr.bf16.mxu0 0
        %1785 = vmatpush1.bf16.xpose.msra.mxu0 0
        %1786 = vmatprep.subr.bf16.mxu0 0
        %1787 = vmatpush1.bf16.xpose.msra.mxu0 0
        %1788 = vmatprep.subr.bf16.mxu0 0
        %1789 = vmatpush1.bf16.xpose.msra.mxu0 0
        %1790 = vmatprep.subr.bf16.mxu0 0
        %1791 = vmatpush1.bf16.xpose.msra.mxu0 0
        %1792 = vmatprep.subr.bf16.mxu0 0
        %1793 = vmatpush1.bf16.xpose.msra.mxu0 0
        %1794 = vmatprep.subr.bf16.mxu0 0
        %1795 = vmatpush1.bf16.xpose.msra.mxu0 0
        %1796 = vmatprep.subr.bf16.mxu0 0
        %1797 = vmatpush1.bf16.xpose.msra.mxu0 0
        %1798 = vmatprep.subr.bf16.mxu0 0
        %1799 = vmatpush1.bf16.xpose.msra.mxu0 0
        %1800 = vmatprep.subr.bf16.mxu0 0
        %1801 = vmatpush1.bf16.xpose.msra.mxu0 0
        %1802 = vmatprep.subr.bf16.mxu0 0
        %1803 = vmatpush1.bf16.xpose.msra.mxu0 0
        %1804 = vmatprep.subr.bf16.mxu0 0
        %1805 = vmatpush1.bf16.xpose.msra.mxu0 0
        %1806 = vmatprep.subr.bf16.mxu0 0
        %1807 = vmatpush1.bf16.xpose.msra.mxu0 0
        %1808 = vmatprep.subr.bf16.mxu0 0
        %1809 = vmatpush1.bf16.xpose.msra.mxu0 0
        %1810 = vmatprep.mubr.bf16.mxu0 0
        %1811 = vmatmul.mubr.bf16.gmra.mrb[0].mxu0 %v1773
        %v1812 = vpop.f32.mrb[0].mxu0
        %v1813 = vadd.f32 %v1202, %v1812
        %v1814 = vpop.f32.mrb[0].mxu0
        %v1815 = vpop.f32.mrb[0].mxu0
        %v1816 = vpop.f32.mrb[0].mxu0
        %1817 = vdwg.mxu0
        %v1818 = vsel %vm639, %v1813, -inf
        %1819 = vmax.xlane.f32.xlu0 %v1818
        %v1820 = vpop.xlane.xlu0 %1819
        %v1821 = vsub.f32 %v1813, %v1820
        %v1822 = vmul.f32 %v1821, 1.442695
        %v1823 = vpow.pop %v1822
        %v1824 = vsel %vm639, %v1823, 0.0
        %1825 = vadd.xlane.f32.xlu0 %v1824
        %v1826 = vpop.xlane.xlu0 %1825
        %v1827 = vpack.c.bf16 %v1823, %v1823
        %1829 = vrot.lane.b32.xlu0 %v1661, 112
        %v1830 = vpop.permute.xlu0 %1829
        %v1832 = vsel %vm639, %v1827, 0
        %v1835 = vsel %vm1265, %v1830, 0
        %1837 = vmatprep.subr.bf16.mxu0 0
        %1838 = vmatpush1.bf16.msra.mxu0 %v1835
        %1839 = vmatprep.subr.bf16.mxu0 0
        %1840 = vmatpush1.bf16.msra.mxu0 0
        %1841 = vmatprep.subr.bf16.mxu0 0
        %1842 = vmatpush1.bf16.msra.mxu0 0
        %1843 = vmatprep.subr.bf16.mxu0 0
        %1844 = vmatpush1.bf16.msra.mxu0 0
        %1845 = vmatprep.subr.bf16.mxu0 0
        %1846 = vmatpush1.bf16.msra.mxu0 0
        %1847 = vmatprep.subr.bf16.mxu0 0
        %1848 = vmatpush1.bf16.msra.mxu0 0
        %1849 = vmatprep.subr.bf16.mxu0 0
        %1850 = vmatpush1.bf16.msra.mxu0 0
        %1851 = vmatprep.subr.bf16.mxu0 0
        %1852 = vmatpush1.bf16.msra.mxu0 0
        %1853 = vmatprep.subr.bf16.mxu0 0
        %1854 = vmatpush1.bf16.msra.mxu0 0
        %1855 = vmatprep.subr.bf16.mxu0 0
        %1856 = vmatpush1.bf16.msra.mxu0 0
        %1857 = vmatprep.subr.bf16.mxu0 0
        %1858 = vmatpush1.bf16.msra.mxu0 0
        %1859 = vmatprep.subr.bf16.mxu0 0
        %1860 = vmatpush1.bf16.msra.mxu0 0
        %1861 = vmatprep.subr.bf16.mxu0 0
        %1862 = vmatpush1.bf16.msra.mxu0 0
        %1863 = vmatprep.subr.bf16.mxu0 0
        %1864 = vmatpush1.bf16.msra.mxu0 0
        %1865 = vmatprep.subr.bf16.mxu0 0
        %1866 = vmatpush1.bf16.msra.mxu0 0
        %1867 = vmatprep.subr.bf16.mxu0 0
        %1868 = vmatpush1.bf16.msra.mxu0 0
        %1869 = vmatprep.mubr.bf16.mxu0 0
        %1870 = vmatmul.mubr.bf16.gmra.mrb[0].mxu0 %v1832
        %v1871 = vpop.f32.mrb[0].mxu0
        %v1872 = vadd.f32 0.0, %v1871
        %v1873 = vpop.f32.mrb[0].mxu0
        %v1874 = vpop.f32.mrb[0].mxu0
        %v1875 = vpop.f32.mrb[0].mxu0
        %1876 = vdwg.mxu0
        %v1877 = vrcp.pop %v1826
        %v1878 = vmul.f32 %v1872, %v1877
        %1879 = vrot.lane.b32.xlu0 %v1659, 96
        %v1880 = vpop.permute.xlu0 %1879
        %1881 = vrot.lane.b32.xlu0 %v1660, 96
        %v1882 = vpop.permute.xlu0 %1881
        %v1884 = vsel %vm876, %v1880, 0
        %v1887 = vsel %vm876, %v1882, 0
        %1889 = vmatprep.subr.bf16.mxu0 0
        %1890 = vmatpush1.bf16.xpose.msra.mxu0 %v1887
        %1891 = vmatprep.subr.bf16.mxu0 0
        %1892 = vmatpush1.bf16.xpose.msra.mxu0 0
        %1893 = vmatprep.subr.bf16.mxu0 0
        %1894 = vmatpush1.bf16.xpose.msra.mxu0 0
        %1895 = vmatprep.subr.bf16.mxu0 0
        %1896 = vmatpush1.bf16.xpose.msra.mxu0 0
        %1897 = vmatprep.subr.bf16.mxu0 0
        %1898 = vmatpush1.bf16.xpose.msra.mxu0 0
        %1899 = vmatprep.subr.bf16.mxu0 0
        %1900 = vmatpush1.bf16.xpose.msra.mxu0 0
        %1901 = vmatprep.subr.bf16.mxu0 0
        %1902 = vmatpush1.bf16.xpose.msra.mxu0 0
        %1903 = vmatprep.subr.bf16.mxu0 0
        %1904 = vmatpush1.bf16.xpose.msra.mxu0 0
        %1905 = vmatprep.subr.bf16.mxu0 0
        %1906 = vmatpush1.bf16.xpose.msra.mxu0 0
        %1907 = vmatprep.subr.bf16.mxu0 0
        %1908 = vmatpush1.bf16.xpose.msra.mxu0 0
        %1909 = vmatprep.subr.bf16.mxu0 0
        %1910 = vmatpush1.bf16.xpose.msra.mxu0 0
        %1911 = vmatprep.subr.bf16.mxu0 0
        %1912 = vmatpush1.bf16.xpose.msra.mxu0 0
        %1913 = vmatprep.subr.bf16.mxu0 0
        %1914 = vmatpush1.bf16.xpose.msra.mxu0 0
        %1915 = vmatprep.subr.bf16.mxu0 0
        %1916 = vmatpush1.bf16.xpose.msra.mxu0 0
        %1917 = vmatprep.subr.bf16.mxu0 0
        %1918 = vmatpush1.bf16.xpose.msra.mxu0 0
        %1919 = vmatprep.subr.bf16.mxu0 0
        %1920 = vmatpush1.bf16.xpose.msra.mxu0 0
        %1921 = vmatprep.mubr.bf16.mxu0 0
        %1922 = vmatmul.mubr.bf16.gmra.mrb[0].mxu0 %v1884
        %v1923 = vpop.f32.mrb[0].mxu0
        %v1924 = vadd.f32 %v1202, %v1923
        %v1925 = vpop.f32.mrb[0].mxu0
        %v1926 = vpop.f32.mrb[0].mxu0
        %v1927 = vpop.f32.mrb[0].mxu0
        %1928 = vdwg.mxu0
        %v1929 = vsel %vm639, %v1924, -inf
        %1930 = vmax.xlane.f32.xlu0 %v1929
        %v1931 = vpop.xlane.xlu0 %1930
        %v1932 = vsub.f32 %v1924, %v1931
        %v1933 = vmul.f32 %v1932, 1.442695
        %v1934 = vpow.pop %v1933
        %v1935 = vsel %vm639, %v1934, 0.0
        %1936 = vadd.xlane.f32.xlu0 %v1935
        %v1937 = vpop.xlane.xlu0 %1936
        %v1938 = vpack.c.bf16 %v1934, %v1934
        %1939 = vrot.lane.b32.xlu0 %v1661, 96
        %v1940 = vpop.permute.xlu0 %1939
        %v1942 = vsel %vm639, %v1938, 0
        %v1945 = vsel %vm1265, %v1940, 0
        %1947 = vmatprep.subr.bf16.mxu0 0
        %1948 = vmatpush1.bf16.msra.mxu0 %v1945
        %1949 = vmatprep.subr.bf16.mxu0 0
        %1950 = vmatpush1.bf16.msra.mxu0 0
        %1951 = vmatprep.subr.bf16.mxu0 0
        %1952 = vmatpush1.bf16.msra.mxu0 0
        %1953 = vmatprep.subr.bf16.mxu0 0
        %1954 = vmatpush1.bf16.msra.mxu0 0
        %1955 = vmatprep.subr.bf16.mxu0 0
        %1956 = vmatpush1.bf16.msra.mxu0 0
        %1957 = vmatprep.subr.bf16.mxu0 0
        %1958 = vmatpush1.bf16.msra.mxu0 0
        %1959 = vmatprep.subr.bf16.mxu0 0
        %1960 = vmatpush1.bf16.msra.mxu0 0
        %1961 = vmatprep.subr.bf16.mxu0 0
        %1962 = vmatpush1.bf16.msra.mxu0 0
        %1963 = vmatprep.subr.bf16.mxu0 0
        %1964 = vmatpush1.bf16.msra.mxu0 0
        %1965 = vmatprep.subr.bf16.mxu0 0
        %1966 = vmatpush1.bf16.msra.mxu0 0
        %1967 = vmatprep.subr.bf16.mxu0 0
        %1968 = vmatpush1.bf16.msra.mxu0 0
        %1969 = vmatprep.subr.bf16.mxu0 0
        %1970 = vmatpush1.bf16.msra.mxu0 0
        %1971 = vmatprep.subr.bf16.mxu0 0
        %1972 = vmatpush1.bf16.msra.mxu0 0
        %1973 = vmatprep.subr.bf16.mxu0 0
        %1974 = vmatpush1.bf16.msra.mxu0 0
        %1975 = vmatprep.subr.bf16.mxu0 0
        %1976 = vmatpush1.bf16.msra.mxu0 0
        %1977 = vmatprep.subr.bf16.mxu0 0
        %1978 = vmatpush1.bf16.msra.mxu0 0
        %1979 = vmatprep.mubr.bf16.mxu0 0
        %1980 = vmatmul.mubr.bf16.gmra.mrb[0].mxu0 %v1942
        %v1981 = vpop.f32.mrb[0].mxu0
        %v1982 = vadd.f32 0.0, %v1981
        %v1983 = vpop.f32.mrb[0].mxu0
        %v1984 = vpop.f32.mrb[0].mxu0
        %v1985 = vpop.f32.mrb[0].mxu0
        %1986 = vdwg.mxu0
        %v1987 = vrcp.pop %v1937
        %v1988 = vmul.f32 %v1982, %v1987
        %1989 = vrot.lane.b32.xlu0 %v1659, 80
        %v1990 = vpop.permute.xlu0 %1989
        %1991 = vrot.lane.b32.xlu0 %v1660, 80
        %v1992 = vpop.permute.xlu0 %1991
        %v1994 = vsel %vm876, %v1990, 0
        %v1997 = vsel %vm876, %v1992, 0
        %1999 = vmatprep.subr.bf16.mxu0 0
        %2000 = vmatpush1.bf16.xpose.msra.mxu0 %v1997
        %2001 = vmatprep.subr.bf16.mxu0 0
        %2002 = vmatpush1.bf16.xpose.msra.mxu0 0
        %2003 = vmatprep.subr.bf16.mxu0 0
        %2004 = vmatpush1.bf16.xpose.msra.mxu0 0
        %2005 = vmatprep.subr.bf16.mxu0 0
        %2006 = vmatpush1.bf16.xpose.msra.mxu0 0
        %2007 = vmatprep.subr.bf16.mxu0 0
        %2008 = vmatpush1.bf16.xpose.msra.mxu0 0
        %2009 = vmatprep.subr.bf16.mxu0 0
        %2010 = vmatpush1.bf16.xpose.msra.mxu0 0
        %2011 = vmatprep.subr.bf16.mxu0 0
        %2012 = vmatpush1.bf16.xpose.msra.mxu0 0
        %2013 = vmatprep.subr.bf16.mxu0 0
        %2014 = vmatpush1.bf16.xpose.msra.mxu0 0
        %2015 = vmatprep.subr.bf16.mxu0 0
        %2016 = vmatpush1.bf16.xpose.msra.mxu0 0
        %2017 = vmatprep.subr.bf16.mxu0 0
        %2018 = vmatpush1.bf16.xpose.msra.mxu0 0
        %2019 = vmatprep.subr.bf16.mxu0 0
        %2020 = vmatpush1.bf16.xpose.msra.mxu0 0
        %2021 = vmatprep.subr.bf16.mxu0 0
        %2022 = vmatpush1.bf16.xpose.msra.mxu0 0
        %2023 = vmatprep.subr.bf16.mxu0 0
        %2024 = vmatpush1.bf16.xpose.msra.mxu0 0
        %2025 = vmatprep.subr.bf16.mxu0 0
        %2026 = vmatpush1.bf16.xpose.msra.mxu0 0
        %2027 = vmatprep.subr.bf16.mxu0 0
        %2028 = vmatpush1.bf16.xpose.msra.mxu0 0
        %2029 = vmatprep.subr.bf16.mxu0 0
        %2030 = vmatpush1.bf16.xpose.msra.mxu0 0
        %2031 = vmatprep.mubr.bf16.mxu0 0
        %2032 = vmatmul.mubr.bf16.gmra.mrb[0].mxu0 %v1994
        %v2033 = vpop.f32.mrb[0].mxu0
        %v2034 = vadd.f32 %v1202, %v2033
        %v2035 = vpop.f32.mrb[0].mxu0
        %v2036 = vpop.f32.mrb[0].mxu0
        %v2037 = vpop.f32.mrb[0].mxu0
        %2038 = vdwg.mxu0
        %v2039 = vsel %vm639, %v2034, -inf
        %2040 = vmax.xlane.f32.xlu0 %v2039
        %v2041 = vpop.xlane.xlu0 %2040
        %v2042 = vsub.f32 %v2034, %v2041
        %v2043 = vmul.f32 %v2042, 1.442695
        %v2044 = vpow.pop %v2043
        %v2045 = vsel %vm639, %v2044, 0.0
        %2046 = vadd.xlane.f32.xlu0 %v2045
        %v2047 = vpop.xlane.xlu0 %2046
        %v2048 = vpack.c.bf16 %v2044, %v2044
        %2049 = vrot.lane.b32.xlu0 %v1661, 80
        %v2050 = vpop.permute.xlu0 %2049
        %v2052 = vsel %vm639, %v2048, 0
        %v2055 = vsel %vm1265, %v2050, 0
        %2057 = vmatprep.subr.bf16.mxu0 0
        %2058 = vmatpush1.bf16.msra.mxu0 %v2055
        %2059 = vmatprep.subr.bf16.mxu0 0
        %2060 = vmatpush1.bf16.msra.mxu0 0
        %2061 = vmatprep.subr.bf16.mxu0 0
        %2062 = vmatpush1.bf16.msra.mxu0 0
        %2063 = vmatprep.subr.bf16.mxu0 0
        %2064 = vmatpush1.bf16.msra.mxu0 0
        %2065 = vmatprep.subr.bf16.mxu0 0
        %2066 = vmatpush1.bf16.msra.mxu0 0
        %2067 = vmatprep.subr.bf16.mxu0 0
        %2068 = vmatpush1.bf16.msra.mxu0 0
        %2069 = vmatprep.subr.bf16.mxu0 0
        %2070 = vmatpush1.bf16.msra.mxu0 0
        %2071 = vmatprep.subr.bf16.mxu0 0
        %2072 = vmatpush1.bf16.msra.mxu0 0
        %2073 = vmatprep.subr.bf16.mxu0 0
        %2074 = vmatpush1.bf16.msra.mxu0 0
        %2075 = vmatprep.subr.bf16.mxu0 0
        %2076 = vmatpush1.bf16.msra.mxu0 0
        %2077 = vmatprep.subr.bf16.mxu0 0
        %2078 = vmatpush1.bf16.msra.mxu0 0
        %2079 = vmatprep.subr.bf16.mxu0 0
        %2080 = vmatpush1.bf16.msra.mxu0 0
        %2081 = vmatprep.subr.bf16.mxu0 0
        %2082 = vmatpush1.bf16.msra.mxu0 0
        %2083 = vmatprep.subr.bf16.mxu0 0
        %2084 = vmatpush1.bf16.msra.mxu0 0
        %2085 = vmatprep.subr.bf16.mxu0 0
        %2086 = vmatpush1.bf16.msra.mxu0 0
        %2087 = vmatprep.subr.bf16.mxu0 0
        %2088 = vmatpush1.bf16.msra.mxu0 0
        %2089 = vmatprep.mubr.bf16.mxu0 0
        %2090 = vmatmul.mubr.bf16.gmra.mrb[0].mxu0 %v2052
        %v2091 = vpop.f32.mrb[0].mxu0
        %v2092 = vadd.f32 0.0, %v2091
        %v2093 = vpop.f32.mrb[0].mxu0
        %v2094 = vpop.f32.mrb[0].mxu0
        %v2095 = vpop.f32.mrb[0].mxu0
        %2096 = vdwg.mxu0
        %v2097 = vrcp.pop %v2047
        %v2098 = vmul.f32 %v2092, %v2097
        %2100 = vrot.lane.b32.xlu0 %v1878, 16
        %v2101 = vpop.permute.xlu0 %2100
        %2104 = vrot.lane.b32.xlu0 %v1988, 32
        %v2105 = vpop.permute.xlu0 %2104
        %2108 = vrot.lane.b32.xlu0 %v2098, 48
        %v2109 = vpop.permute.xlu0 %2108
        %v2111 = vsel %vm876, %v1765, %v2101
        %v2112 = vsel %vm879, %v2111, %v2105
        %v2113 = vsel %vm882, %v2112, %v2109
        %v2114 = vpack.c.bf16 %v2113, %v1658
        %v2115 = vld [vmem:[%s438] sm:$0xf]
        %v2116 = vld [vmem:[%s438 + $0x4] sm:$0xf]
        %v2117 = vld [vmem:[%s438 + $0x8] sm:$0xf]
        %v2118 = vld [vmem:[%s438 + $0xc] sm:$0xf]
        %v2119 = vld [vmem:[%s438 + $0x10] sm:$0xf]
        %v2120 = vld [vmem:[%s438 + $0x14] sm:$0xf]
        %v2121 = vld [vmem:[%s438 + $0x18] sm:$0xf]
        %v2122 = vld [vmem:[%s438 + $0x1c] sm:$0xf]
        %v2131 = vunpack.c.l.b16 %v2115
        %v2132 = vunpack.c.l.b16 %v2116
        %v2133 = vunpack.c.l.b16 %v2117
        %v2134 = vunpack.c.l.b16 %v2118
        %v2135 = vunpack.c.l.b16 %v2119
        %v2136 = vunpack.c.l.b16 %v2120
        %v2137 = vunpack.c.l.b16 %v2121
        %v2138 = vunpack.c.l.b16 %v2122
        %v2139 = vpack.c.b16 %v2132, %v2131
        %v2140 = vpack.c.b16 %v2134, %v2133
        %v2141 = vpack.c.b16 %v2136, %v2135
        %v2142 = vpack.c.b16 %v2138, %v2137
        %v2148 = vsel %vm464, %v2114, 0
        %2150 = vmatprep.subr.bf16.mxu0 0
        %2151 = vmatpush1.bf16.msra.mxu0 %v2139
        %2152 = vmatprep.subr.bf16.mxu0 0
        %2153 = vmatpush1.bf16.msra.mxu0 %v2140
        %2154 = vmatprep.subr.bf16.mxu0 0
        %2155 = vmatpush1.bf16.msra.mxu0 %v2141
        %2156 = vmatprep.subr.bf16.mxu0 0
        %2157 = vmatpush1.bf16.msra.mxu0 %v2142
        %2158 = vmatprep.subr.bf16.mxu0 0
        %2159 = vmatpush1.bf16.msra.mxu0 0
        %2160 = vmatprep.subr.bf16.mxu0 0
        %2161 = vmatpush1.bf16.msra.mxu0 0
        %2162 = vmatprep.subr.bf16.mxu0 0
        %2163 = vmatpush1.bf16.msra.mxu0 0
        %2164 = vmatprep.subr.bf16.mxu0 0
        %2165 = vmatpush1.bf16.msra.mxu0 0
        %2166 = vmatprep.subr.bf16.mxu0 0
        %2167 = vmatpush1.bf16.msra.mxu0 0
        %2168 = vmatprep.subr.bf16.mxu0 0
        %2169 = vmatpush1.bf16.msra.mxu0 0
        %2170 = vmatprep.subr.bf16.mxu0 0
        %2171 = vmatpush1.bf16.msra.mxu0 0
        %2172 = vmatprep.subr.bf16.mxu0 0
        %2173 = vmatpush1.bf16.msra.mxu0 0
        %2174 = vmatprep.subr.bf16.mxu0 0
        %2175 = vmatpush1.bf16.msra.mxu0 0
        %2176 = vmatprep.subr.bf16.mxu0 0
        %2177 = vmatpush1.bf16.msra.mxu0 0
        %2178 = vmatprep.subr.bf16.mxu0 0
        %2179 = vmatpush1.bf16.msra.mxu0 0
        %2180 = vmatprep.subr.bf16.mxu0 0
        %2181 = vmatpush1.bf16.msra.mxu0 0
        %2182 = vmatprep.mubr.bf16.mxu0 0
        %2183 = vmatmul.mubr.bf16.gmra.mrb[0].mxu0 %v2148
        %v2184 = vpop.f32.mrb[0].mxu0
        %v2185 = vadd.f32 0.0, %v2184
        %v2186 = vpop.f32.mrb[0].mxu0
        %v2187 = vpop.f32.mrb[0].mxu0
        %v2188 = vadd.f32 0.0, %v2187
        %v2189 = vpop.f32.mrb[0].mxu0
        %2190 = vdwg.mxu0
        %v2191 = vmul.f32 %v2185, 0.5
        %v2192 = vmul.f32 %v2188, 0.5
        %v2193 = vadd.f32 %v2191, %v459
        %v2194 = vadd.f32 %v2192, %v460
        %v2195 = vld [vmem:[%s428] sm:$0x1]
        %v2196 = vmul.f32 %v2193, %v2193
        %v2197 = vmul.f32 %v2194, %v2194
        %v2198 = vsel %vm464, %v2196, 0.0
        %2199 = vadd.xlane.f32.xlu0 %v2198
        %v2200 = vpop.xlane.xlu0 %2199
        %v2201 = vsel %vm464, %v2197, 0.0
        %2202 = vadd.xlane.f32.xlu0 %v2201
        %v2203 = vpop.xlane.xlu0 %2202
        %v2204 = vmul.f32 %v2200, %v471
        %v2205 = vmul.f32 %v2203, %v471
        %v2206 = vadd.f32 %v2204, 1e-05
        %v2207 = vadd.f32 %v2205, 1e-05
        %v2208 = vrsqrt.pop %v2206
        %v2209 = vrsqrt.pop %v2207
        %v2210 = vmul.f32 %v2193, %v2208
        %v2211 = vmul.f32 %v2194, %v2209
        %v2213 = vlaneseq
        %v2214 = vshrl.u32 %v2213, 7
        %v2215 = vsub.s32 0, %v2214
        %v2216 = vrot.slane %v2195, %v2215
        %v2218 = vmul.f32 %v2210, %v2216
        %v2219 = vmul.f32 %v2211, %v2216
        %v2220 = vpack.c.bf16 %v2219, %v2218
        %v2221 = vld [vmem:[%s443] sm:$0xff]
        %v2222 = vld [vmem:[%s443 + $0x8] sm:$0xf]
        %v2223 = vld [vmem:[%s443 + $0xc] sm:$0xff]
        %v2224 = vld [vmem:[%s443 + $0x14] sm:$0xf]
        %v2225 = vld [vmem:[%s443 + $0x18] sm:$0xff]
        %v2226 = vld [vmem:[%s443 + $0x20] sm:$0xf]
        %v2227 = vld [vmem:[%s443 + $0x24] sm:$0xff]
        %v2228 = vld [vmem:[%s443 + $0x2c] sm:$0xf]
        %v2229 = vld [vmem:[%s443 + $0x30] sm:$0xff]
        %v2230 = vld [vmem:[%s443 + $0x38] sm:$0xf]
        %v2231 = vld [vmem:[%s443 + $0x3c] sm:$0xff]
        %v2232 = vld [vmem:[%s443 + $0x44] sm:$0xf]
        %v2233 = vld [vmem:[%s443 + $0x48] sm:$0xff]
        %v2234 = vld [vmem:[%s443 + $0x50] sm:$0xf]
        %v2235 = vld [vmem:[%s443 + $0x54] sm:$0xff]
        %v2236 = vld [vmem:[%s443 + $0x5c] sm:$0xf]
        %v2253 = vunpack.c.l.b16 %v2221
        %v2254 = vunpack.c.h.b16 %v2221
        %v2255 = vunpack.c.l.b16 %v2222
        %v2256 = vunpack.c.l.b16 %v2223
        %v2257 = vunpack.c.h.b16 %v2223
        %v2258 = vunpack.c.l.b16 %v2224
        %v2259 = vunpack.c.l.b16 %v2225
        %v2260 = vunpack.c.h.b16 %v2225
        %v2261 = vunpack.c.l.b16 %v2226
        %v2262 = vunpack.c.l.b16 %v2227
        %v2263 = vunpack.c.h.b16 %v2227
        %v2264 = vunpack.c.l.b16 %v2228
        %v2265 = vunpack.c.l.b16 %v2229
        %v2266 = vunpack.c.h.b16 %v2229
        %v2267 = vunpack.c.l.b16 %v2230
        %v2268 = vunpack.c.l.b16 %v2231
        %v2269 = vunpack.c.h.b16 %v2231
        %v2270 = vunpack.c.l.b16 %v2232
        %v2271 = vunpack.c.l.b16 %v2233
        %v2272 = vunpack.c.h.b16 %v2233
        %v2273 = vunpack.c.l.b16 %v2234
        %v2274 = vunpack.c.l.b16 %v2235
        %v2275 = vunpack.c.h.b16 %v2235
        %v2276 = vunpack.c.l.b16 %v2236
        %v2277 = vpack.c.b16 %v2256, %v2253
        %v2278 = vpack.c.b16 %v2257, %v2254
        %v2279 = vpack.c.b16 %v2258, %v2255
        %v2280 = vpack.c.b16 %v2262, %v2259
        %v2281 = vpack.c.b16 %v2263, %v2260
        %v2282 = vpack.c.b16 %v2264, %v2261
        %v2283 = vpack.c.b16 %v2268, %v2265
        %v2284 = vpack.c.b16 %v2269, %v2266
        %v2285 = vpack.c.b16 %v2270, %v2267
        %v2286 = vpack.c.b16 %v2274, %v2271
        %v2287 = vpack.c.b16 %v2275, %v2272
        %v2288 = vpack.c.b16 %v2276, %v2273
        %v2302 = vsel %vm464, %v2220, 0
        %2304 = vmatprep.subr.bf16.mxu0 %v2278
        %2305 = vmatpush1.bf16.msra.mxu0 %v2277
        %2306 = vmatprep.subr.bf16.mxu0 %v2281
        %2307 = vmatpush1.bf16.msra.mxu0 %v2280
        %2308 = vmatprep.subr.bf16.mxu0 %v2284
        %2309 = vmatpush1.bf16.msra.mxu0 %v2283
        %2310 = vmatprep.subr.bf16.mxu0 %v2287
        %2311 = vmatpush1.bf16.msra.mxu0 %v2286
        %2312 = vmatprep.subr.bf16.mxu0 0
        %2313 = vmatpush1.bf16.msra.mxu0 0
        %2314 = vmatprep.subr.bf16.mxu0 0
        %2315 = vmatpush1.bf16.msra.mxu0 0
        %2316 = vmatprep.subr.bf16.mxu0 0
        %2317 = vmatpush1.bf16.msra.mxu0 0
        %2318 = vmatprep.subr.bf16.mxu0 0
        %2319 = vmatpush1.bf16.msra.mxu0 0
        %2320 = vmatprep.subr.bf16.mxu0 0
        %2321 = vmatpush1.bf16.msra.mxu0 0
        %2322 = vmatprep.subr.bf16.mxu0 0
        %2323 = vmatpush1.bf16.msra.mxu0 0
        %2324 = vmatprep.subr.bf16.mxu0 0
        %2325 = vmatpush1.bf16.msra.mxu0 0
        %2326 = vmatprep.subr.bf16.mxu0 0
        %2327 = vmatpush1.bf16.msra.mxu0 0
        %2328 = vmatprep.subr.bf16.mxu0 0
        %2329 = vmatpush1.bf16.msra.mxu0 0
        %2330 = vmatprep.subr.bf16.mxu0 0
        %2331 = vmatpush1.bf16.msra.mxu0 0
        %2332 = vmatprep.subr.bf16.mxu0 0
        %2333 = vmatpush1.bf16.msra.mxu0 0
        %2334 = vmatprep.subr.bf16.mxu0 0
        %2335 = vmatpush1.bf16.msra.mxu0 0
        %2336 = vmatprep.mubr.bf16.mxu0 0
        %2337 = vmatmul.mubr.bf16.gmra.mrb[0].mxu0 %v2302
        %v2338 = vpop.f32.mrb[0].mxu0
        %v2339 = vadd.f32 0.0, %v2338
        %v2340 = vpop.f32.mrb[0].mxu0
        %v2341 = vadd.f32 0.0, %v2340
        %v2342 = vpop.f32.mrb[0].mxu0
        %v2343 = vadd.f32 0.0, %v2342
        %v2344 = vpop.f32.mrb[0].mxu0
        %v2345 = vadd.f32 0.0, %v2344
        %2346 = vdwg.mxu0
        %2347 = vmatprep.subr.bf16.mxu0 0
        %2348 = vmatpush1.bf16.msra.mxu0 %v2279
        %2349 = vmatprep.subr.bf16.mxu0 0
        %2350 = vmatpush1.bf16.msra.mxu0 %v2282
        %2351 = vmatprep.subr.bf16.mxu0 0
        %2352 = vmatpush1.bf16.msra.mxu0 %v2285
        %2353 = vmatprep.subr.bf16.mxu0 0
        %2354 = vmatpush1.bf16.msra.mxu0 %v2288
        %2355 = vmatprep.subr.bf16.mxu0 0
        %2356 = vmatpush1.bf16.msra.mxu0 0
        %2357 = vmatprep.subr.bf16.mxu0 0
        %2358 = vmatpush1.bf16.msra.mxu0 0
        %2359 = vmatprep.subr.bf16.mxu0 0
        %2360 = vmatpush1.bf16.msra.mxu0 0
        %2361 = vmatprep.subr.bf16.mxu0 0
        %2362 = vmatpush1.bf16.msra.mxu0 0
        %2363 = vmatprep.subr.bf16.mxu0 0
        %2364 = vmatpush1.bf16.msra.mxu0 0
        %2365 = vmatprep.subr.bf16.mxu0 0
        %2366 = vmatpush1.bf16.msra.mxu0 0
        %2367 = vmatprep.subr.bf16.mxu0 0
        %2368 = vmatpush1.bf16.msra.mxu0 0
        %2369 = vmatprep.subr.bf16.mxu0 0
        %2370 = vmatpush1.bf16.msra.mxu0 0
        %2371 = vmatprep.subr.bf16.mxu0 0
        %2372 = vmatpush1.bf16.msra.mxu0 0
        %2373 = vmatprep.subr.bf16.mxu0 0
        %2374 = vmatpush1.bf16.msra.mxu0 0
        %2375 = vmatprep.subr.bf16.mxu0 0
        %2376 = vmatpush1.bf16.msra.mxu0 0
        %2377 = vmatprep.subr.bf16.mxu0 0
        %2378 = vmatpush1.bf16.msra.mxu0 0
        %2379 = vmatprep.mubr.bf16.mxu0 0
        %2380 = vmatmul.mubr.bf16.gmra.mrb[0].mxu0 %v2302
        %v2381 = vpop.f32.mrb[0].mxu0
        %v2382 = vadd.f32 0.0, %v2381
        %v2383 = vpop.f32.mrb[0].mxu0
        %v2384 = vpop.f32.mrb[0].mxu0
        %v2385 = vadd.f32 0.0, %v2384
        %v2386 = vpop.f32.mrb[0].mxu0
        %2387 = vdwg.mxu0
        %v2388 = vxor.u32 %v2339, 2147483648
        %v2389 = vxor.u32 %v2341, 2147483648
        %v2390 = vxor.u32 %v2343, 2147483648
        %v2391 = vxor.u32 %v2345, 2147483648
        %v2392 = vmul.f32 %v2388, 1.442695
        %v2393 = vpow.pop %v2392
        %v2394 = vmul.f32 %v2389, 1.442695
        %v2395 = vpow.pop %v2394
        %v2396 = vmul.f32 %v2390, 1.442695
        %v2397 = vpow.pop %v2396
        %v2398 = vmul.f32 %v2391, 1.442695
        %v2399 = vpow.pop %v2398
        %v2400 = vadd.f32 %v2393, 1.0
        %v2401 = vadd.f32 %v2395, 1.0
        %v2402 = vadd.f32 %v2397, 1.0
        %v2403 = vadd.f32 %v2399, 1.0
        %v2404 = vrcp.pop %v2400
        %v2405 = vmul.f32 1.0, %v2404
        %v2406 = vrcp.pop %v2401
        %v2407 = vmul.f32 1.0, %v2406
        %v2408 = vrcp.pop %v2402
        %v2409 = vmul.f32 1.0, %v2408
        %v2410 = vrcp.pop %v2403
        %v2411 = vmul.f32 1.0, %v2410
        %v2412 = vmul.f32 %v2339, %v2405
        %v2413 = vmul.f32 %v2341, %v2407
        %v2414 = vmul.f32 %v2343, %v2409
        %v2415 = vmul.f32 %v2345, %v2411
        %2420 = vrot.lane.b32.xlu0 %v2341, 64
        %v2421 = vpop.permute.xlu0 %2420
        %2422 = vrot.lane.b32.xlu0 %v2382, 64
        %v2423 = vpop.permute.xlu0 %2422
        %2424 = vrot.lane.b32.xlu0 %v2345, 64
        %v2425 = vpop.permute.xlu0 %2424
        %2426 = vrot.lane.b32.xlu0 %v2385, 64
        %v2427 = vpop.permute.xlu0 %2426
        %v2428 = vsel %vm464, %v2421, %v2423
        %v2429 = vsel %vm464, %v2425, %v2427
        %v2434 = vmul.f32 %v2412, %v2428
        %v2435 = vmul.f32 %v2413, %v2423
        %v2436 = vmul.f32 %v2414, %v2429
        %v2437 = vmul.f32 %v2415, %v2427
        %v2438 = vpack.c.bf16 %v2436, %v2434
        %v2439 = vpack.c.bf16 %v2437, %v2435
        %v2440 = vld [vmem:[%s448] sm:$0xf]
        %v2441 = vld [vmem:[%s448 + $0x4] sm:$0xf]
        %v2442 = vld [vmem:[%s448 + $0x8] sm:$0xf]
        %v2443 = vld [vmem:[%s448 + $0xc] sm:$0xf]
        %v2444 = vld [vmem:[%s448 + $0x10] sm:$0xf]
        %v2445 = vld [vmem:[%s448 + $0x14] sm:$0xf]
        %v2446 = vld [vmem:[%s448 + $0x18] sm:$0xf]
        %v2447 = vld [vmem:[%s448 + $0x1c] sm:$0xf]
        %v2448 = vld [vmem:[%s448 + $0x20] sm:$0xf]
        %v2449 = vld [vmem:[%s448 + $0x24] sm:$0xf]
        %v2450 = vld [vmem:[%s448 + $0x28] sm:$0xf]
        %v2451 = vld [vmem:[%s448 + $0x2c] sm:$0xf]
        %v2452 = vld [vmem:[%s448 + $0x30] sm:$0xf]
        %v2453 = vld [vmem:[%s448 + $0x34] sm:$0xf]
        %v2454 = vld [vmem:[%s448 + $0x38] sm:$0xf]
        %v2455 = vld [vmem:[%s448 + $0x3c] sm:$0xf]
        %v2456 = vld [vmem:[%s448 + $0x40] sm:$0xf]
        %v2457 = vld [vmem:[%s448 + $0x44] sm:$0xf]
        %v2458 = vld [vmem:[%s448 + $0x48] sm:$0xf]
        %v2459 = vld [vmem:[%s448 + $0x4c] sm:$0xf]
        %v2460 = vld [vmem:[%s448 + $0x50] sm:$0xf]
        %v2461 = vld [vmem:[%s448 + $0x54] sm:$0xf]
        %v2462 = vld [vmem:[%s448 + $0x58] sm:$0xf]
        %v2463 = vld [vmem:[%s448 + $0x5c] sm:$0xf]
        %v2488 = vunpack.c.l.b16 %v2440
        %v2489 = vunpack.c.l.b16 %v2441
        %v2490 = vunpack.c.l.b16 %v2442
        %v2491 = vunpack.c.l.b16 %v2443
        %v2492 = vunpack.c.l.b16 %v2444
        %v2493 = vunpack.c.l.b16 %v2445
        %v2494 = vunpack.c.l.b16 %v2446
        %v2495 = vunpack.c.l.b16 %v2447
        %v2496 = vunpack.c.l.b16 %v2448
        %v2497 = vunpack.c.l.b16 %v2449
        %v2498 = vunpack.c.l.b16 %v2450
        %v2499 = vunpack.c.l.b16 %v2451
        %v2500 = vunpack.c.l.b16 %v2452
        %v2501 = vunpack.c.l.b16 %v2453
        %v2502 = vunpack.c.l.b16 %v2454
        %v2503 = vunpack.c.l.b16 %v2455
        %v2504 = vunpack.c.l.b16 %v2456
        %v2505 = vunpack.c.l.b16 %v2457
        %v2506 = vunpack.c.l.b16 %v2458
        %v2507 = vunpack.c.l.b16 %v2459
        %v2508 = vunpack.c.l.b16 %v2460
        %v2509 = vunpack.c.l.b16 %v2461
        %v2510 = vunpack.c.l.b16 %v2462
        %v2511 = vunpack.c.l.b16 %v2463
        %v2512 = vpack.c.b16 %v2489, %v2488
        %v2513 = vpack.c.b16 %v2491, %v2490
        %v2514 = vpack.c.b16 %v2493, %v2492
        %v2515 = vpack.c.b16 %v2495, %v2494
        %v2516 = vpack.c.b16 %v2497, %v2496
        %v2517 = vpack.c.b16 %v2499, %v2498
        %v2518 = vpack.c.b16 %v2501, %v2500
        %v2519 = vpack.c.b16 %v2503, %v2502
        %v2520 = vpack.c.b16 %v2505, %v2504
        %v2521 = vpack.c.b16 %v2507, %v2506
        %v2522 = vpack.c.b16 %v2509, %v2508
        %v2523 = vpack.c.b16 %v2511, %v2510
        %v2537 = vsel %vm464, %v2439, 0
        %2539 = vmatprep.subr.bf16.mxu0 0
        %2540 = vmatpush1.bf16.msra.mxu0 %v2512
        %2541 = vmatprep.subr.bf16.mxu0 0
        %2542 = vmatpush1.bf16.msra.mxu0 %v2513
        %2543 = vmatprep.subr.bf16.mxu0 0
        %2544 = vmatpush1.bf16.msra.mxu0 %v2514
        %2545 = vmatprep.subr.bf16.mxu0 0
        %2546 = vmatpush1.bf16.msra.mxu0 %v2515
        %2547 = vmatprep.subr.bf16.mxu0 0
        %2548 = vmatpush1.bf16.msra.mxu0 %v2516
        %2549 = vmatprep.subr.bf16.mxu0 0
        %2550 = vmatpush1.bf16.msra.mxu0 %v2517
        %2551 = vmatprep.subr.bf16.mxu0 0
        %2552 = vmatpush1.bf16.msra.mxu0 %v2518
        %2553 = vmatprep.subr.bf16.mxu0 0
        %2554 = vmatpush1.bf16.msra.mxu0 %v2519
        %2555 = vmatprep.subr.bf16.mxu0 0
        %2556 = vmatpush1.bf16.msra.mxu0 %v2520
        %2557 = vmatprep.subr.bf16.mxu0 0
        %2558 = vmatpush1.bf16.msra.mxu0 %v2521
        %2559 = vmatprep.subr.bf16.mxu0 0
        %2560 = vmatpush1.bf16.msra.mxu0 %v2522
        %2561 = vmatprep.subr.bf16.mxu0 0
        %2562 = vmatpush1.bf16.msra.mxu0 %v2523
        %2563 = vmatprep.subr.bf16.mxu0 0
        %2564 = vmatpush1.bf16.msra.mxu0 0
        %2565 = vmatprep.subr.bf16.mxu0 0
        %2566 = vmatpush1.bf16.msra.mxu0 0
        %2567 = vmatprep.subr.bf16.mxu0 0
        %2568 = vmatpush1.bf16.msra.mxu0 0
        %2569 = vmatprep.subr.bf16.mxu0 0
        %2570 = vmatpush1.bf16.msra.mxu0 0
        %2571 = vmatprep.mubr.bf16.mxu0 %v2537
        %2572 = vmatmul.mubr.bf16.gmra.mrb[0].mxu0 %v2438
        %v2573 = vpop.f32.mrb[0].mxu0
        %v2574 = vadd.f32 0.0, %v2573
        %v2575 = vpop.f32.mrb[0].mxu0
        %v2576 = vpop.f32.mrb[0].mxu0
        %v2577 = vadd.f32 0.0, %v2576
        %v2578 = vpop.f32.mrb[0].mxu0
        %2579 = vdwg.mxu0
        %v2580 = vmul.f32 %v2574, 0.5
        %v2581 = vmul.f32 %v2577, 0.5
        %v2582 = vadd.f32 %v2580, %v2193
        %v2583 = vadd.f32 %v2581, %v2194
        %2584 = vst.msk [vmem:[#allocation2] sm:$0xff] %vm464, %v2582
        %2585 = vst.msk [vmem:[#allocation2 + $0x8] sm:$0xff] %vm464, %v2583
        %p2586 = scmp.eq.s32.totalorder %s23, 1
        // Predicated region
        $region69: #{tpu_custom_call.1} parent=59 // pred_check
          %p2587 = pneg %p2586
        $region70: #{tpu_custom_call.1} parent=59 // pred_check_branch
          %2589 = sbr.rel (%p2587) target = $region72
        $region71: #{tpu_custom_call.1} parent=59 // pred_region
          %v2590 = vld [vmem:[%s9] sm:$0x1]
          %v2591 = vmul.f32 %v2582, %v2582
          %v2592 = vmul.f32 %v2583, %v2583
          %v2593 = vsel %vm464, %v2591, 0.0
          %2594 = vadd.xlane.f32.xlu0 %v2593
          %v2595 = vpop.xlane.xlu0 %2594
          %v2596 = vsel %vm464, %v2592, 0.0
          %2597 = vadd.xlane.f32.xlu0 %v2596
          %v2598 = vpop.xlane.xlu0 %2597
          %v2599 = vmul.f32 %v2595, %v471
          %v2600 = vmul.f32 %v2598, %v471
          %v2601 = vadd.f32 %v2599, 1e-05
          %v2602 = vadd.f32 %v2600, 1e-05
          %v2603 = vrsqrt.pop %v2601
          %v2604 = vrsqrt.pop %v2602
          %v2605 = vmul.f32 %v2582, %v2603
          %v2606 = vmul.f32 %v2583, %v2604
          %v2608 = vlaneseq
          %v2609 = vshrl.u32 %v2608, 7
          %v2610 = vsub.s32 0, %v2609
          %v2611 = vrot.slane %v2590, %v2610
          %v2613 = vmul.f32 %v2605, %v2611
          %v2614 = vmul.f32 %v2606, %v2611
          %2615 = vst.msk [vmem:[#allocation6] sm:$0xff] %vm464, %v2613
          %2616 = vst.msk [vmem:[#allocation6 + $0x8] sm:$0xff] %vm464, %v2614
        $region72: #{tpu_custom_call.1} parent=59 // pred_fallthru
          _
        // Predicated region
        $region73: #{tpu_custom_call.1} parent=59 // pred_check
          %p2617 = pneg %p276
        $region74: #{tpu_custom_call.1} parent=59 // pred_check_branch
          %2619 = sbr.rel (%p2617) target = $region76
        $region75: #{tpu_custom_call.1} parent=59 // pred_region
          %s2621 = ssub.s32 256, 256
          %2622 = vsyncadd [#allocation5], %s2621
          %s2623 = sshll.u32 [#allocation6], 4
          %s2624 = int_to_ptr.vmem [resolvable:$true] %s2623
          %2629 = dma.vmem_to_hbm [thread:$0]  %s2624, 256, %s10, [#allocation5], 128, 128, 8
        $region76: #{tpu_custom_call.1} parent=59 // pred_fallthru
          _
        // Predicated region
        $region77: #{tpu_custom_call.1} parent=59 // pred_check
          %p2630 = pneg %p276
        $region78: #{tpu_custom_call.1} parent=59 // pred_check_branch
          %2632 = sbr.rel (%p2630) target = $region80
        $region79: #{tpu_custom_call.1} parent=59 // pred_region
          %2633 = dma.done [#allocation5], 256
        $region80: #{tpu_custom_call.1} parent=59 // pred_fallthru
          _
      $region60: #{tpu_custom_call.1} parent=5 // pred_fallthru
        _
      %p2634 = scmp.le.s32.totalorder 2, %s18
      // Predicated region
      $region81: #{tpu_custom_call.1} parent=5 // pred_check
        %p2635 = pneg %p2634
      $region82: #{tpu_custom_call.1} parent=5 // pred_check_branch
        %2637 = sbr.rel (%p2635) target = $region84
      $region83: #{tpu_custom_call.1} parent=5 // pred_region
        %s2638 = ssub.s32 %s18, 2
      $region84: #{tpu_custom_call.1} parent=5 // pred_fallthru
        _
    $region6: #{tpu_custom_call.1} parent=1 // loop_footer
      %s22 = sadd.s32 1, %s18
    $region7: #{tpu_custom_call.1} parent=1 // loop_footer_branch
      %17 = sbr.rel target = $region3
    $region8: #{tpu_custom_call.1} parent=1 // loop_exit
      _
    %2639 = vsyncpa [#allocation4], 1
    %s2640 = scalar_lea.sflag [#allocation4], 1
    %2641 = vsyncpa %s2640, 1
    %2642 = vsyncpa [#allocation5], 1
    %s2643 = scalar_lea.sflag [#allocation5], 1
    %2644 = vsyncpa %s2643, 1

</llo_original>
